<compile_context>
chip_gen: v6e
topology: v6e:2x2x1
jax: 0.10.0
libtpu: 0.0.40
codegen_flags: <defaults>
</compile_context>

<pallas_src>
import jax
import jax.numpy as jnp
from jax import lax
from jax.experimental import pallas as pl
from jax.experimental.pallas import tpu as pltpu


def _round_up(a: int, b: int) -> int:
    return ((a + b - 1) // b) * b


def _vmem_tile_bytes(shape, dtype) -> int:
    """Upper bound on VMEM bytes for one buffer, honoring (sublane,128) tiling."""
    dt = jnp.dtype(dtype)
    sublane = {4: 8, 2: 16, 1: 32}.get(dt.itemsize, 8)
    shape = tuple(int(d) for d in shape)
    if len(shape) < 2:
        shape = (1,) * (2 - len(shape)) + shape
    lead = 1
    for d in shape[:-2]:
        lead *= d
    s2 = _round_up(shape[-2], sublane)
    s1 = _round_up(shape[-1], 128)
    return lead * s2 * s1 * dt.itemsize


def _vmem_capacity_bytes() -> int:
    """Physical per-core VMEM; conservative fallback if the query fails."""
    try:
        cap = int(pltpu.get_tpu_info().vmem_capacity_bytes)
        if cap > 0:
            return cap
    except Exception:
        pass
    return 64 << 20  # conservative: v7x per-TensorCore VMEM


def _is_v5e_like() -> bool:
    try:
        kind = jax.devices()[0].device_kind.lower()
    except Exception:
        return False
    return ("v5 lite" in kind) or ("v5e" in kind) or ("v5lite" in kind)


def _pick_tm(M: int, slab_width: int, x_dtype, tm, weights_bytes: int,
             vmem_cap: int) -> int:
    """Adaptive row tile: ~1 MiB input tile, MXU-friendly, VMEM-bounded."""
    bytes_per_row = slab_width * jnp.dtype(x_dtype).itemsize
    if tm is None:
        tm = (1 << 20) // max(bytes_per_row, 1)
        tm = int(min(max(tm, 256), 4096))
    tm = int(tm)
    # 256 matches the v6e/v7x MXU tile (also fine on v5e); 8 = sublane minimum.
    tm = _round_up(tm, 256) if tm >= 256 else _round_up(max(tm, 8), 8)
    m8 = _round_up(M, 8)
    if tm >= m8:
        # Keep at least a 2-step grid so both v7x TensorCores get work.
        tm = _round_up(pl.cdiv(m8, 2), 8) if m8 >= 16 else m8
    # Shrink if double-buffered row tiles + weights would blow the VMEM budget.
    while tm > 8:
        io = 2 * 2 * _vmem_tile_bytes((tm, slab_width), x_dtype)
        if weights_bytes + io + (8 << 20) <= vmem_cap:
            break
        tm = max(8, _round_up(tm // 2, 8))
    return tm


def _make_kernel(n_layers: int, half_pad: int, mm_dtype, act_dtype,
                 unroll_threshold: int):
    """Kernel body. Weights arrive lane-padded, pre-transposed, h-folded."""

    def layer_step(p, q, K1, K2, hK1T, hK2T, B1, B2):
        # p <- p - tanh(q @ K2 + B1) @ (h * K2.T)
        s = jnp.dot(q.astype(mm_dtype), K2, preferred_element_type=jnp.float32) + B1
        a = jnp.tanh(s.astype(act_dtype)).astype(mm_dtype)
        p = p - jnp.dot(a, hK2T, preferred_element_type=jnp.float32)
        # q <- q + tanh(p @ K1 + B2) @ (h * K1.T)   (uses the updated p)
        s = jnp.dot(p.astype(mm_dtype), K1, preferred_element_type=jnp.float32) + B2
        a = jnp.tanh(s.astype(act_dtype)).astype(mm_dtype)
        q = q + jnp.dot(a, hK1T, preferred_element_type=jnp.float32)
        return p, q

    def kernel(k1_ref, k2_ref, hk1t_ref, hk2t_ref, b1_ref, b2_ref, x_ref, o_ref):
        # Static ref-side slices; half_pad % 128 == 0 so both halves are
        # lane-aligned loads (no whole-tile load + in-register lane split).
        p = x_ref[:, :half_pad].astype(jnp.float32)
        q = x_ref[:, half_pad:].astype(jnp.float32)

        if n_layers <= unroll_threshold:
            # Static trip count -> fully unrolled (LLO scheduler visibility).
            for j in range(n_layers):
                p, q = layer_step(p, q, k1_ref[j], k2_ref[j],
                                  hk1t_ref[j], hk2t_ref[j],
                                  b1_ref[j], b2_ref[j])
        else:
            # Deep stacks: rolled loop (bounded code size / vreg live ranges)
            # with unroll=2 so adjacent layers' scalar index math, weight vlds
            # and MXU pushes can co-issue.
            def body(j, carry):
                pp, qq = carry
                return layer_step(pp, qq, k1_ref[j], k2_ref[j],
                                  hk1t_ref[j], hk2t_ref[j],
                                  b1_ref[j], b2_ref[j])
            p, q = lax.fori_loop(0, n_layers, body, (p, q), unroll=2)

        # Two direct lane-dense sub-slice stores (no concat temp, no XLU
        # relayout); both are unmasked vst since half_pad % 128 == 0.
        o_ref[:, :half_pad] = p.astype(o_ref.dtype)
        o_ref[:, half_pad:] = q.astype(o_ref.dtype)

    return kernel


def hamiltonian_sie_pallas(x, k1, k2, b1, b2, *, t_end=0.5, tm=None,
                           matmul_dtype=None, unroll_threshold=16):
    """x: (B, T, nf); k1/k2: (L, half, half); b1/b2: (L, 1, half)."""
    B, T, nf = x.shape
    if nf % 2 != 0:
        raise ValueError("nf must be even")
    half = nf // 2
    n_layers = int(k1.shape[0])
    h = t_end / n_layers
    M = B * T

    mm_dtype = jnp.dtype(matmul_dtype) if matmul_dtype is not None else jnp.dtype(jnp.float32)
    # bf16 tanh on bf16-EUP chips (v6e/v7x); keep f32 tanh on v5e (no bf16 EUP).
    act_dtype = (jnp.dtype(jnp.bfloat16)
                 if (mm_dtype == jnp.bfloat16 and not _is_v5e_like())
                 else jnp.dtype(jnp.float32))

    # Lane-align the p/q halves: pad features to a multiple of 128. Zero weight
    # rows/cols and zero bias entries keep the math exact (tanh(0)=0 and zero
    # columns contribute nothing), while every kernel slice/store becomes an
    # unmasked lane-dense op.
    hp = _round_up(half, 128)
    fpad = hp - half
    slab_w = 2 * hp

    k1p = jnp.pad(k1, ((0, 0), (0, fpad), (0, fpad))) if fpad else k1
    k2p = jnp.pad(k2, ((0, 0), (0, fpad), (0, fpad))) if fpad else k2
    b1p = jnp.pad(b1, ((0, 0), (0, 0), (0, fpad))) if fpad else b1
    b2p = jnp.pad(b2, ((0, 0), (0, 0), (0, fpad))) if fpad else b2

    # Pre-transpose the second-matmul weights and fold the step size h into
    # them (no in-kernel XLU transpose / VPU scale-by-h). NOTE: in the bf16
    # path h*K.T is rounded once to bf16 (benign at bf16 tolerances; keep
    # these two in f32 if tighter bf16-path accuracy is ever required).
    k1_c = k1p.astype(mm_dtype)
    k2_c = k2p.astype(mm_dtype)
    hk1t = (h * jnp.swapaxes(k1p, 1, 2)).astype(mm_dtype)
    hk2t = (h * jnp.swapaxes(k2p, 1, 2)).astype(mm_dtype)
    b1_c = b1p.astype(jnp.float32)
    b2_c = b2p.astype(jnp.float32)
    weight_args = (k1_c, k2_c, hk1t, hk2t, b1_c, b2_c)

    vmem_cap = _vmem_capacity_bytes()
    # Estimate assuming the default double-buffering (safe for the fallback).
    weights_bytes = sum(2 * _vmem_tile_bytes(a.shape, a.dtype) for a in weight_args)

    tm_eff = _pick_tm(M, slab_w, x.dtype, tm, weights_bytes, vmem_cap)
    M_pad = _round_up(M, tm_eff)
    grid = (M_pad // tm_eff,)

    # Fused lane-dense (M_pad, 2*hp) input slab: [p_pad | q_pad], rows padded
    # with zeros (padded rows compute garbage that is sliced away).
    xf = x.reshape(M, nf)
    if fpad == 0:
        slab = xf if M_pad == M else jnp.pad(xf, ((0, M_pad - M), (0, 0)))
    else:
        pslab = jnp.pad(xf[:, :half], ((0, M_pad - M), (0, fpad)))
        qslab = jnp.pad(xf[:, half:], ((0, M_pad - M), (0, fpad)))
        slab = jnp.concatenate([pslab, qslab], axis=-1)

    kernel = _make_kernel(n_layers, hp, mm_dtype, act_dtype, unroll_threshold)
    row_spec = pl.BlockSpec((tm_eff, slab_w), lambda i: (i, 0))

    # Tight, hardware-aware VMEM limit (never above physical capacity -> v7x
    # safe); weights + double-buffered in/out row tiles + fixed headroom.
    io_bytes = 2 * 2 * _vmem_tile_bytes((tm_eff, slab_w), x.dtype)
    vmem_limit = int(min(max(weights_bytes + io_bytes + (8 << 20), 32 << 20),
                         max(vmem_cap - (2 << 20), 16 << 20)))

    def run(single_buffer_weights: bool):
        def weight_spec(arr):
            nd = arr.ndim
            kwargs = {}
            if single_buffer_weights:
                # Grid-invariant -> one VMEM buffer is enough; halves weight
                # VMEM footprint vs the default double-buffering.
                kwargs["pipeline_mode"] = pl.Buffered(1)
            return pl.BlockSpec(arr.shape, lambda i, _nd=nd: (0,) * _nd, **kwargs)

        return pl.pallas_call(
            kernel,
            out_shape=jax.ShapeDtypeStruct((M_pad, slab_w), x.dtype),
            grid_spec=pltpu.PrefetchScalarGridSpec(
                num_scalar_prefetch=0,
                grid=grid,
                in_specs=[weight_spec(a) for a in weight_args] + [row_spec],
                out_specs=row_spec,
            ),
            compiler_params=pltpu.CompilerParams(
                dimension_semantics=("parallel",),
                vmem_limit_bytes=vmem_limit),
        )(*weight_args, slab)

    try:
        out = run(True)
    except Exception:
        # TODO(synk): this JAX/Mosaic version rejects pl.Buffered(1) single
        # buffering of grid-invariant inputs; fall back to the default
        # double-buffered BlockSpecs (costs VMEM headroom only).
        out = run(False)

    if fpad == 0:
        return out[:M].reshape(B, T, nf)
    p_out = out[:M, :half]
    q_out = out[:M, hp:hp + half]
    return jnp.concatenate([p_out, q_out], axis=-1).reshape(B, T, nf)


def hamiltonian_sie_ref(x, k1, k2, b1, b2, *, t_end=0.5):
    """Pure-JAX reference mirroring the PyTorch forward (ini=0, end=n_layers)."""
    nf = x.shape[-1]
    half = nf // 2
    n_layers = k1.shape[0]
    h = t_end / n_layers
    p = x[..., :half]
    q = x[..., half:]
    for j in range(n_layers):
        p = p - h * jnp.tanh(q @ k2[j] + b1[j]) @ k2[j].T
        q = q + h * jnp.tanh(p @ k1[j] + b2[j]) @ k1[j].T
    return jnp.concatenate([p, q], axis=-1)


def _make_params(key, n_layers, half):
    # Matches the module's __init__ (random=True): one 0.1*randn base tensor
    # repeated across layers.
    k_k1, k_k2, k_b1, k_b2 = jax.random.split(key, 4)
    k1 = jnp.tile(0.1 * jax.random.normal(k_k1, (half, half), jnp.float32),
                  (n_layers, 1, 1))
    k2 = jnp.tile(0.1 * jax.random.normal(k_k2, (half, half), jnp.float32),
                  (n_layers, 1, 1))
    b1 = jnp.tile(0.1 * jax.random.normal(k_b1, (1, half), jnp.float32),
                  (n_layers, 1, 1))
    b2 = jnp.tile(0.1 * jax.random.normal(k_b2, (1, half), jnp.float32),
                  (n_layers, 1, 1))
    return k1, k2, b1, b2


if __name__ == "__main__":
    key = jax.random.PRNGKey(0)
    kp1, kx1, kp2, kx2 = jax.random.split(key, 4)
    t_end = 0.5

    # --- case 1: module-default nf=4, n_layers=4 (static-unroll path), f32 ---
    n_layers, nf = 4, 4
    B, T = 2, 8
    k1, k2, b1, b2 = _make_params(kp1, n_layers, nf // 2)
    x0 = jax.random.normal(kx1, (B, T, nf), jnp.float32)

    out = jax.block_until_ready(
        hamiltonian_sie_pallas(x0, k1, k2, b1, b2, t_end=t_end))
    ref = hamiltonian_sie_ref(x0, k1, k2, b1, b2, t_end=t_end)
    assert out.shape == (B, T, nf)
    assert jnp.allclose(out, ref, atol=1e-4, rtol=1e-4), "case1 mismatch"

    # --- case 2: deeper stack (fori_loop, unroll=2) + ragged row count ---
    n_layers2, nf2 = 24, 8
    B2, T2 = 3, 7                      # M = 21 rows -> exercises row padding
    k1b, k2b, b1b, b2b = _make_params(kp2, n_layers2, nf2 // 2)
    x1 = jax.random.normal(kx2, (B2, T2, nf2), jnp.float32)

    out2 = jax.block_until_ready(
        hamiltonian_sie_pallas(x1, k1b, k2b, b1b, b2b, t_end=t_end))
    ref2 = hamiltonian_sie_ref(x1, k1b, k2b, b1b, b2b, t_end=t_end)
    assert out2.shape == (B2, T2, nf2)
    assert jnp.allclose(out2, ref2, atol=1e-4, rtol=1e-4), "case2 mismatch"

    # --- case 3: bf16 matmuls (bf16 tanh on v6e/v7x, f32 on v5e), loose tol ---
    out3 = jax.block_until_ready(
        hamiltonian_sie_pallas(x0, k1, k2, b1, b2, t_end=t_end,
                               matmul_dtype=jnp.bfloat16))
    assert jnp.allclose(out3, ref, atol=3e-2, rtol=3e-2), "case3 mismatch"

    print("KERNEL_OK")
</pallas_src>

<mosaic_0001>
module attributes {stable_mosaic.version = 11 : i64} {
  func.func @kernel(%arg0: i32, %arg1: memref<4x128x128xf32, #tpu.memory_space<vmem>>, %arg2: memref<4x128x128xf32, #tpu.memory_space<vmem>>, %arg3: memref<4x128x128xf32, #tpu.memory_space<vmem>>, %arg4: memref<4x128x128xf32, #tpu.memory_space<vmem>>, %arg5: memref<4x1x128xf32, #tpu.memory_space<vmem>>, %arg6: memref<4x1x128xf32, #tpu.memory_space<vmem>>, %arg7: memref<8x256xf32, #tpu.memory_space<vmem>>, %arg8: memref<8x256xf32, #tpu.memory_space<vmem>>) attributes {dimension_semantics = [#tpu.dimension_semantics<parallel>], iteration_bounds = array<i64: 2>, scalar_prefetch = 0 : i64, scratch_operands = 0 : i64, tpu.core_type = #tpu.core_type<tc>, window_params = [{pipeline_mode = #tpu.pipeline_mode<synchronous>, transform_indices = @transform_0, window_bounds = array<i64: 4, 128, 128>}, {pipeline_mode = #tpu.pipeline_mode<synchronous>, transform_indices = @transform_1, window_bounds = array<i64: 4, 128, 128>}, {pipeline_mode = #tpu.pipeline_mode<synchronous>, transform_indices = @transform_2, window_bounds = array<i64: 4, 128, 128>}, {pipeline_mode = #tpu.pipeline_mode<synchronous>, transform_indices = @transform_3, window_bounds = array<i64: 4, 128, 128>}, {pipeline_mode = #tpu.pipeline_mode<synchronous>, transform_indices = @transform_4, window_bounds = array<i64: 4, 1, 128>}, {pipeline_mode = #tpu.pipeline_mode<synchronous>, transform_indices = @transform_5, window_bounds = array<i64: 4, 1, 128>}, {transform_indices = @transform_6, window_bounds = array<i64: 8, 256>}, {transform_indices = @transform_7, window_bounds = array<i64: 8, 256>}]} {
    %c0 = arith.constant 0 : index
    %c0_0 = arith.constant 0 : index
    %0 = vector.load %arg7[%c0, %c0_0] : memref<8x256xf32, #tpu.memory_space<vmem>>, vector<8x128xf32>
    %c0_1 = arith.constant 0 : index
    %c128 = arith.constant 128 : index
    %1 = vector.load %arg7[%c0_1, %c128] : memref<8x256xf32, #tpu.memory_space<vmem>>, vector<8x128xf32>
    %c0_2 = arith.constant 0 : index
    %c0_3 = arith.constant 0 : index
    %c0_4 = arith.constant 0 : index
    %2 = vector.load %arg1[%c0_2, %c0_3, %c0_4] : memref<4x128x128xf32, #tpu.memory_space<vmem>>, vector<1x128x128xf32>
    %3 = vector.shape_cast %2 : vector<1x128x128xf32> to vector<128x128xf32>
    %c0_5 = arith.constant 0 : index
    %c0_6 = arith.constant 0 : index
    %c0_7 = arith.constant 0 : index
    %4 = vector.load %arg2[%c0_5, %c0_6, %c0_7] : memref<4x128x128xf32, #tpu.memory_space<vmem>>, vector<1x128x128xf32>
    %5 = vector.shape_cast %4 : vector<1x128x128xf32> to vector<128x128xf32>
    %c0_8 = arith.constant 0 : index
    %c0_9 = arith.constant 0 : index
    %c0_10 = arith.constant 0 : index
    %6 = vector.load %arg3[%c0_8, %c0_9, %c0_10] : memref<4x128x128xf32, #tpu.memory_space<vmem>>, vector<1x128x128xf32>
    %7 = vector.shape_cast %6 : vector<1x128x128xf32> to vector<128x128xf32>
    %c0_11 = arith.constant 0 : index
    %c0_12 = arith.constant 0 : index
    %c0_13 = arith.constant 0 : index
    %8 = vector.load %arg4[%c0_11, %c0_12, %c0_13] : memref<4x128x128xf32, #tpu.memory_space<vmem>>, vector<1x128x128xf32>
    %9 = vector.shape_cast %8 : vector<1x128x128xf32> to vector<128x128xf32>
    %c0_14 = arith.constant 0 : index
    %c0_15 = arith.constant 0 : index
    %c0_16 = arith.constant 0 : index
    %10 = vector.load %arg5[%c0_14, %c0_15, %c0_16] : memref<4x1x128xf32, #tpu.memory_space<vmem>>, vector<1x1x128xf32>
    %11 = vector.shape_cast %10 : vector<1x1x128xf32> to vector<1x128xf32>
    %c0_17 = arith.constant 0 : index
    %c0_18 = arith.constant 0 : index
    %c0_19 = arith.constant 0 : index
    %12 = vector.load %arg6[%c0_17, %c0_18, %c0_19] : memref<4x1x128xf32, #tpu.memory_space<vmem>>, vector<1x1x128xf32>
    %13 = vector.shape_cast %12 : vector<1x1x128xf32> to vector<1x128xf32>
    %cst = arith.constant dense<0.000000e+00> : vector<8x128xf32>
    %14 = tpu.matmul %1, %5, %cst {dimension_numbers = #tpu.dot_dimension_numbers<[1], [0], [0], [1], [0, 0, 1, 1], [], []>} : vector<8x128xf32>, vector<128x128xf32>, vector<8x128xf32> -> vector<8x128xf32>
    %15 = vector.broadcast %11 : vector<1x128xf32> to vector<8x128xf32>
    %16 = arith.addf %14, %15 : vector<8x128xf32>
    %17 = math.tanh %16 : vector<8x128xf32>
    %cst_20 = arith.constant dense<0.000000e+00> : vector<8x128xf32>
    %18 = tpu.matmul %17, %9, %cst_20 {dimension_numbers = #tpu.dot_dimension_numbers<[1], [0], [0], [1], [0, 0, 1, 1], [], []>} : vector<8x128xf32>, vector<128x128xf32>, vector<8x128xf32> -> vector<8x128xf32>
    %19 = arith.subf %0, %18 : vector<8x128xf32>
    %cst_21 = arith.constant dense<0.000000e+00> : vector<8x128xf32>
    %20 = tpu.matmul %19, %3, %cst_21 {dimension_numbers = #tpu.dot_dimension_numbers<[1], [0], [0], [1], [0, 0, 1, 1], [], []>} : vector<8x128xf32>, vector<128x128xf32>, vector<8x128xf32> -> vector<8x128xf32>
    %21 = vector.broadcast %13 : vector<1x128xf32> to vector<8x128xf32>
    %22 = arith.addf %20, %21 : vector<8x128xf32>
    %23 = math.tanh %22 : vector<8x128xf32>
    %cst_22 = arith.constant dense<0.000000e+00> : vector<8x128xf32>
    %24 = tpu.matmul %23, %7, %cst_22 {dimension_numbers = #tpu.dot_dimension_numbers<[1], [0], [0], [1], [0, 0, 1, 1], [], []>} : vector<8x128xf32>, vector<128x128xf32>, vector<8x128xf32> -> vector<8x128xf32>
    %25 = arith.addf %1, %24 : vector<8x128xf32>
    %c1 = arith.constant 1 : index
    %c0_23 = arith.constant 0 : index
    %c0_24 = arith.constant 0 : index
    %26 = vector.load %arg1[%c1, %c0_23, %c0_24] : memref<4x128x128xf32, #tpu.memory_space<vmem>>, vector<1x128x128xf32>
    %27 = vector.shape_cast %26 : vector<1x128x128xf32> to vector<128x128xf32>
    %c1_25 = arith.constant 1 : index
    %c0_26 = arith.constant 0 : index
    %c0_27 = arith.constant 0 : index
    %28 = vector.load %arg2[%c1_25, %c0_26, %c0_27] : memref<4x128x128xf32, #tpu.memory_space<vmem>>, vector<1x128x128xf32>
    %29 = vector.shape_cast %28 : vector<1x128x128xf32> to vector<128x128xf32>
    %c1_28 = arith.constant 1 : index
    %c0_29 = arith.constant 0 : index
    %c0_30 = arith.constant 0 : index
    %30 = vector.load %arg3[%c1_28, %c0_29, %c0_30] : memref<4x128x128xf32, #tpu.memory_space<vmem>>, vector<1x128x128xf32>
    %31 = vector.shape_cast %30 : vector<1x128x128xf32> to vector<128x128xf32>
    %c1_31 = arith.constant 1 : index
    %c0_32 = arith.constant 0 : index
    %c0_33 = arith.constant 0 : index
    %32 = vector.load %arg4[%c1_31, %c0_32, %c0_33] : memref<4x128x128xf32, #tpu.memory_space<vmem>>, vector<1x128x128xf32>
    %33 = vector.shape_cast %32 : vector<1x128x128xf32> to vector<128x128xf32>
    %c1_34 = arith.constant 1 : index
    %c0_35 = arith.constant 0 : index
    %c0_36 = arith.constant 0 : index
    %34 = vector.load %arg5[%c1_34, %c0_35, %c0_36] : memref<4x1x128xf32, #tpu.memory_space<vmem>>, vector<1x1x128xf32>
    %35 = vector.shape_cast %34 : vector<1x1x128xf32> to vector<1x128xf32>
    %c1_37 = arith.constant 1 : index
    %c0_38 = arith.constant 0 : index
    %c0_39 = arith.constant 0 : index
    %36 = vector.load %arg6[%c1_37, %c0_38, %c0_39] : memref<4x1x128xf32, #tpu.memory_space<vmem>>, vector<1x1x128xf32>
    %37 = vector.shape_cast %36 : vector<1x1x128xf32> to vector<1x128xf32>
    %cst_40 = arith.constant dense<0.000000e+00> : vector<8x128xf32>
    %38 = tpu.matmul %25, %29, %cst_40 {dimension_numbers = #tpu.dot_dimension_numbers<[1], [0], [0], [1], [0, 0, 1, 1], [], []>} : vector<8x128xf32>, vector<128x128xf32>, vector<8x128xf32> -> vector<8x128xf32>
    %39 = vector.broadcast %35 : vector<1x128xf32> to vector<8x128xf32>
    %40 = arith.addf %38, %39 : vector<8x128xf32>
    %41 = math.tanh %40 : vector<8x128xf32>
    %cst_41 = arith.constant dense<0.000000e+00> : vector<8x128xf32>
    %42 = tpu.matmul %41, %33, %cst_41 {dimension_numbers = #tpu.dot_dimension_numbers<[1], [0], [0], [1], [0, 0, 1, 1], [], []>} : vector<8x128xf32>, vector<128x128xf32>, vector<8x128xf32> -> vector<8x128xf32>
    %43 = arith.subf %19, %42 : vector<8x128xf32>
    %cst_42 = arith.constant dense<0.000000e+00> : vector<8x128xf32>
    %44 = tpu.matmul %43, %27, %cst_42 {dimension_numbers = #tpu.dot_dimension_numbers<[1], [0], [0], [1], [0, 0, 1, 1], [], []>} : vector<8x128xf32>, vector<128x128xf32>, vector<8x128xf32> -> vector<8x128xf32>
    %45 = vector.broadcast %37 : vector<1x128xf32> to vector<8x128xf32>
    %46 = arith.addf %44, %45 : vector<8x128xf32>
    %47 = math.tanh %46 : vector<8x128xf32>
    %cst_43 = arith.constant dense<0.000000e+00> : vector<8x128xf32>
    %48 = tpu.matmul %47, %31, %cst_43 {dimension_numbers = #tpu.dot_dimension_numbers<[1], [0], [0], [1], [0, 0, 1, 1], [], []>} : vector<8x128xf32>, vector<128x128xf32>, vector<8x128xf32> -> vector<8x128xf32>
    %49 = arith.addf %25, %48 : vector<8x128xf32>
    %c2 = arith.constant 2 : index
    %c0_44 = arith.constant 0 : index
    %c0_45 = arith.constant 0 : index
    %50 = vector.load %arg1[%c2, %c0_44, %c0_45] : memref<4x128x128xf32, #tpu.memory_space<vmem>>, vector<1x128x128xf32>
    %51 = vector.shape_cast %50 : vector<1x128x128xf32> to vector<128x128xf32>
    %c2_46 = arith.constant 2 : index
    %c0_47 = arith.constant 0 : index
    %c0_48 = arith.constant 0 : index
    %52 = vector.load %arg2[%c2_46, %c0_47, %c0_48] : memref<4x128x128xf32, #tpu.memory_space<vmem>>, vector<1x128x128xf32>
    %53 = vector.shape_cast %52 : vector<1x128x128xf32> to vector<128x128xf32>
    %c2_49 = arith.constant 2 : index
    %c0_50 = arith.constant 0 : index
    %c0_51 = arith.constant 0 : index
    %54 = vector.load %arg3[%c2_49, %c0_50, %c0_51] : memref<4x128x128xf32, #tpu.memory_space<vmem>>, vector<1x128x128xf32>
    %55 = vector.shape_cast %54 : vector<1x128x128xf32> to vector<128x128xf32>
    %c2_52 = arith.constant 2 : index
    %c0_53 = arith.constant 0 : index
    %c0_54 = arith.constant 0 : index
    %56 = vector.load %arg4[%c2_52, %c0_53, %c0_54] : memref<4x128x128xf32, #tpu.memory_space<vmem>>, vector<1x128x128xf32>
    %57 = vector.shape_cast %56 : vector<1x128x128xf32> to vector<128x128xf32>
    %c2_55 = arith.constant 2 : index
    %c0_56 = arith.constant 0 : index
    %c0_57 = arith.constant 0 : index
    %58 = vector.load %arg5[%c2_55, %c0_56, %c0_57] : memref<4x1x128xf32, #tpu.memory_space<vmem>>, vector<1x1x128xf32>
    %59 = vector.shape_cast %58 : vector<1x1x128xf32> to vector<1x128xf32>
    %c2_58 = arith.constant 2 : index
    %c0_59 = arith.constant 0 : index
    %c0_60 = arith.constant 0 : index
    %60 = vector.load %arg6[%c2_58, %c0_59, %c0_60] : memref<4x1x128xf32, #tpu.memory_space<vmem>>, vector<1x1x128xf32>
    %61 = vector.shape_cast %60 : vector<1x1x128xf32> to vector<1x128xf32>
    %cst_61 = arith.constant dense<0.000000e+00> : vector<8x128xf32>
    %62 = tpu.matmul %49, %53, %cst_61 {dimension_numbers = #tpu.dot_dimension_numbers<[1], [0], [0], [1], [0, 0, 1, 1], [], []>} : vector<8x128xf32>, vector<128x128xf32>, vector<8x128xf32> -> vector<8x128xf32>
    %63 = vector.broadcast %59 : vector<1x128xf32> to vector<8x128xf32>
    %64 = arith.addf %62, %63 : vector<8x128xf32>
    %65 = math.tanh %64 : vector<8x128xf32>
    %cst_62 = arith.constant dense<0.000000e+00> : vector<8x128xf32>
    %66 = tpu.matmul %65, %57, %cst_62 {dimension_numbers = #tpu.dot_dimension_numbers<[1], [0], [0], [1], [0, 0, 1, 1], [], []>} : vector<8x128xf32>, vector<128x128xf32>, vector<8x128xf32> -> vector<8x128xf32>
    %67 = arith.subf %43, %66 : vector<8x128xf32>
    %cst_63 = arith.constant dense<0.000000e+00> : vector<8x128xf32>
    %68 = tpu.matmul %67, %51, %cst_63 {dimension_numbers = #tpu.dot_dimension_numbers<[1], [0], [0], [1], [0, 0, 1, 1], [], []>} : vector<8x128xf32>, vector<128x128xf32>, vector<8x128xf32> -> vector<8x128xf32>
    %69 = vector.broadcast %61 : vector<1x128xf32> to vector<8x128xf32>
    %70 = arith.addf %68, %69 : vector<8x128xf32>
    %71 = math.tanh %70 : vector<8x128xf32>
    %cst_64 = arith.constant dense<0.000000e+00> : vector<8x128xf32>
    %72 = tpu.matmul %71, %55, %cst_64 {dimension_numbers = #tpu.dot_dimension_numbers<[1], [0], [0], [1], [0, 0, 1, 1], [], []>} : vector<8x128xf32>, vector<128x128xf32>, vector<8x128xf32> -> vector<8x128xf32>
    %73 = arith.addf %49, %72 : vector<8x128xf32>
    %c3 = arith.constant 3 : index
    %c0_65 = arith.constant 0 : index
    %c0_66 = arith.constant 0 : index
    %74 = vector.load %arg1[%c3, %c0_65, %c0_66] : memref<4x128x128xf32, #tpu.memory_space<vmem>>, vector<1x128x128xf32>
    %75 = vector.shape_cast %74 : vector<1x128x128xf32> to vector<128x128xf32>
    %c3_67 = arith.constant 3 : index
    %c0_68 = arith.constant 0 : index
    %c0_69 = arith.constant 0 : index
    %76 = vector.load %arg2[%c3_67, %c0_68, %c0_69] : memref<4x128x128xf32, #tpu.memory_space<vmem>>, vector<1x128x128xf32>
    %77 = vector.shape_cast %76 : vector<1x128x128xf32> to vector<128x128xf32>
    %c3_70 = arith.constant 3 : index
    %c0_71 = arith.constant 0 : index
    %c0_72 = arith.constant 0 : index
    %78 = vector.load %arg3[%c3_70, %c0_71, %c0_72] : memref<4x128x128xf32, #tpu.memory_space<vmem>>, vector<1x128x128xf32>
    %79 = vector.shape_cast %78 : vector<1x128x128xf32> to vector<128x128xf32>
    %c3_73 = arith.constant 3 : index
    %c0_74 = arith.constant 0 : index
    %c0_75 = arith.constant 0 : index
    %80 = vector.load %arg4[%c3_73, %c0_74, %c0_75] : memref<4x128x128xf32, #tpu.memory_space<vmem>>, vector<1x128x128xf32>
    %81 = vector.shape_cast %80 : vector<1x128x128xf32> to vector<128x128xf32>
    %c3_76 = arith.constant 3 : index
    %c0_77 = arith.constant 0 : index
    %c0_78 = arith.constant 0 : index
    %82 = vector.load %arg5[%c3_76, %c0_77, %c0_78] : memref<4x1x128xf32, #tpu.memory_space<vmem>>, vector<1x1x128xf32>
    %83 = vector.shape_cast %82 : vector<1x1x128xf32> to vector<1x128xf32>
    %c3_79 = arith.constant 3 : index
    %c0_80 = arith.constant 0 : index
    %c0_81 = arith.constant 0 : index
    %84 = vector.load %arg6[%c3_79, %c0_80, %c0_81] : memref<4x1x128xf32, #tpu.memory_space<vmem>>, vector<1x1x128xf32>
    %85 = vector.shape_cast %84 : vector<1x1x128xf32> to vector<1x128xf32>
    %cst_82 = arith.constant dense<0.000000e+00> : vector<8x128xf32>
    %86 = tpu.matmul %73, %77, %cst_82 {dimension_numbers = #tpu.dot_dimension_numbers<[1], [0], [0], [1], [0, 0, 1, 1], [], []>} : vector<8x128xf32>, vector<128x128xf32>, vector<8x128xf32> -> vector<8x128xf32>
    %87 = vector.broadcast %83 : vector<1x128xf32> to vector<8x128xf32>
    %88 = arith.addf %86, %87 : vector<8x128xf32>
    %89 = math.tanh %88 : vector<8x128xf32>
    %cst_83 = arith.constant dense<0.000000e+00> : vector<8x128xf32>
    %90 = tpu.matmul %89, %81, %cst_83 {dimension_numbers = #tpu.dot_dimension_numbers<[1], [0], [0], [1], [0, 0, 1, 1], [], []>} : vector<8x128xf32>, vector<128x128xf32>, vector<8x128xf32> -> vector<8x128xf32>
    %91 = arith.subf %67, %90 : vector<8x128xf32>
    %cst_84 = arith.constant dense<0.000000e+00> : vector<8x128xf32>
    %92 = tpu.matmul %91, %75, %cst_84 {dimension_numbers = #tpu.dot_dimension_numbers<[1], [0], [0], [1], [0, 0, 1, 1], [], []>} : vector<8x128xf32>, vector<128x128xf32>, vector<8x128xf32> -> vector<8x128xf32>
    %93 = vector.broadcast %85 : vector<1x128xf32> to vector<8x128xf32>
    %94 = arith.addf %92, %93 : vector<8x128xf32>
    %95 = math.tanh %94 : vector<8x128xf32>
    %cst_85 = arith.constant dense<0.000000e+00> : vector<8x128xf32>
    %96 = tpu.matmul %95, %79, %cst_85 {dimension_numbers = #tpu.dot_dimension_numbers<[1], [0], [0], [1], [0, 0, 1, 1], [], []>} : vector<8x128xf32>, vector<128x128xf32>, vector<8x128xf32> -> vector<8x128xf32>
    %97 = arith.addf %73, %96 : vector<8x128xf32>
    %c0_86 = arith.constant 0 : index
    %c0_87 = arith.constant 0 : index
    %98 = vector.load %arg8[%c0_86, %c0_87] : memref<8x256xf32, #tpu.memory_space<vmem>>, vector<8x128xf32>
    tpu.vector_store %arg8[%c0_86, %c0_87], %91 {strides = array<i32>} : memref<8x256xf32, #tpu.memory_space<vmem>>, vector<8x128xf32>,
    %c0_88 = arith.constant 0 : index
    %c128_89 = arith.constant 128 : index
    %99 = vector.load %arg8[%c0_88, %c128_89] : memref<8x256xf32, #tpu.memory_space<vmem>>, vector<8x128xf32>
    tpu.vector_store %arg8[%c0_88, %c128_89], %97 {strides = array<i32>} : memref<8x256xf32, #tpu.memory_space<vmem>>, vector<8x128xf32>,
    return
  }
  func.func @transform_0(%arg0: i32) -> (i32, i32, i32) {
    %c0_i32 = arith.constant 0 : i32
    %c0_i32_0 = arith.constant 0 : i32
    %c0_i32_1 = arith.constant 0 : i32
    %c0_i32_2 = arith.constant 0 : i32
    return %c0_i32, %c0_i32_0, %c0_i32_1 : i32, i32, i32
  }
  func.func @transform_1(%arg0: i32) -> (i32, i32, i32) {
    %c0_i32 = arith.constant 0 : i32
    %c0_i32_0 = arith.constant 0 : i32
    %c0_i32_1 = arith.constant 0 : i32
    %c0_i32_2 = arith.constant 0 : i32
    return %c0_i32, %c0_i32_0, %c0_i32_1 : i32, i32, i32
  }
  func.func @transform_2(%arg0: i32) -> (i32, i32, i32) {
    %c0_i32 = arith.constant 0 : i32
    %c0_i32_0 = arith.constant 0 : i32
    %c0_i32_1 = arith.constant 0 : i32
    %c0_i32_2 = arith.constant 0 : i32
    return %c0_i32, %c0_i32_0, %c0_i32_1 : i32, i32, i32
  }
  func.func @transform_3(%arg0: i32) -> (i32, i32, i32) {
    %c0_i32 = arith.constant 0 : i32
    %c0_i32_0 = arith.constant 0 : i32
    %c0_i32_1 = arith.constant 0 : i32
    %c0_i32_2 = arith.constant 0 : i32
    return %c0_i32, %c0_i32_0, %c0_i32_1 : i32, i32, i32
  }
  func.func @transform_4(%arg0: i32) -> (i32, i32, i32) {
    %c0_i32 = arith.constant 0 : i32
    %c0_i32_0 = arith.constant 0 : i32
    %c0_i32_1 = arith.constant 0 : i32
    %c0_i32_2 = arith.constant 0 : i32
    return %c0_i32, %c0_i32_0, %c0_i32_1 : i32, i32, i32
  }
  func.func @transform_5(%arg0: i32) -> (i32, i32, i32) {
    %c0_i32 = arith.constant 0 : i32
    %c0_i32_0 = arith.constant 0 : i32
    %c0_i32_1 = arith.constant 0 : i32
    %c0_i32_2 = arith.constant 0 : i32
    return %c0_i32, %c0_i32_0, %c0_i32_1 : i32, i32, i32
  }
  func.func @transform_6(%arg0: i32) -> (i32, i32) {
    %c0_i32 = arith.constant 0 : i32
    %c0_i32_0 = arith.constant 0 : i32
    return %arg0, %c0_i32 : i32, i32
  }
  func.func @transform_7(%arg0: i32) -> (i32, i32) {
    %c0_i32 = arith.constant 0 : i32
    %c0_i32_0 = arith.constant 0 : i32
    return %arg0, %c0_i32 : i32, i32
  }
}

module attributes {stable_mosaic.version = 11 : i64} {
  func.func @kernel(%arg0: i32, %arg1: memref<4x128x128xf32, #tpu.memory_space<vmem>>, %arg2: memref<4x128x128xf32, #tpu.memory_space<vmem>>, %arg3: memref<4x128x128xf32, #tpu.memory_space<vmem>>, %arg4: memref<4x128x128xf32, #tpu.memory_space<vmem>>, %arg5: memref<4x1x128xf32, #tpu.memory_space<vmem>>, %arg6: memref<4x1x128xf32, #tpu.memory_space<vmem>>, %arg7: memref<8x256xf32, #tpu.memory_space<vmem>>, %arg8: memref<8x256xf32, #tpu.memory_space<vmem>>) attributes {dimension_semantics = [#tpu.dimension_semantics<parallel>], iteration_bounds = array<i64: 2>, scalar_prefetch = 0 : i64, scratch_operands = 0 : i64, tpu.core_type = #tpu.core_type<tc>, window_params = [{pipeline_mode = #tpu.pipeline_mode<synchronous>, transform_indices = @transform_0, window_bounds = array<i64: 4, 128, 128>}, {pipeline_mode = #tpu.pipeline_mode<synchronous>, transform_indices = @transform_1, window_bounds = array<i64: 4, 128, 128>}, {pipeline_mode = #tpu.pipeline_mode<synchronous>, transform_indices = @transform_2, window_bounds = array<i64: 4, 128, 128>}, {pipeline_mode = #tpu.pipeline_mode<synchronous>, transform_indices = @transform_3, window_bounds = array<i64: 4, 128, 128>}, {pipeline_mode = #tpu.pipeline_mode<synchronous>, transform_indices = @transform_4, window_bounds = array<i64: 4, 1, 128>}, {pipeline_mode = #tpu.pipeline_mode<synchronous>, transform_indices = @transform_5, window_bounds = array<i64: 4, 1, 128>}, {transform_indices = @transform_6, window_bounds = array<i64: 8, 256>}, {transform_indices = @transform_7, window_bounds = array<i64: 8, 256>}]} {
    %c0 = arith.constant 0 : index
    %c0_0 = arith.constant 0 : index
    %0 = vector.load %arg7[%c0, %c0_0] : memref<8x256xf32, #tpu.memory_space<vmem>>, vector<8x128xf32>
    %c0_1 = arith.constant 0 : index
    %c128 = arith.constant 128 : index
    %1 = vector.load %arg7[%c0_1, %c128] : memref<8x256xf32, #tpu.memory_space<vmem>>, vector<8x128xf32>
    %c0_2 = arith.constant 0 : index
    %c0_3 = arith.constant 0 : index
    %c0_4 = arith.constant 0 : index
    %2 = vector.load %arg1[%c0_2, %c0_3, %c0_4] : memref<4x128x128xf32, #tpu.memory_space<vmem>>, vector<1x128x128xf32>
    %3 = vector.shape_cast %2 : vector<1x128x128xf32> to vector<128x128xf32>
    %c0_5 = arith.constant 0 : index
    %c0_6 = arith.constant 0 : index
    %c0_7 = arith.constant 0 : index
    %4 = vector.load %arg2[%c0_5, %c0_6, %c0_7] : memref<4x128x128xf32, #tpu.memory_space<vmem>>, vector<1x128x128xf32>
    %5 = vector.shape_cast %4 : vector<1x128x128xf32> to vector<128x128xf32>
    %c0_8 = arith.constant 0 : index
    %c0_9 = arith.constant 0 : index
    %c0_10 = arith.constant 0 : index
    %6 = vector.load %arg3[%c0_8, %c0_9, %c0_10] : memref<4x128x128xf32, #tpu.memory_space<vmem>>, vector<1x128x128xf32>
    %7 = vector.shape_cast %6 : vector<1x128x128xf32> to vector<128x128xf32>
    %c0_11 = arith.constant 0 : index
    %c0_12 = arith.constant 0 : index
    %c0_13 = arith.constant 0 : index
    %8 = vector.load %arg4[%c0_11, %c0_12, %c0_13] : memref<4x128x128xf32, #tpu.memory_space<vmem>>, vector<1x128x128xf32>
    %9 = vector.shape_cast %8 : vector<1x128x128xf32> to vector<128x128xf32>
    %c0_14 = arith.constant 0 : index
    %c0_15 = arith.constant 0 : index
    %c0_16 = arith.constant 0 : index
    %10 = vector.load %arg5[%c0_14, %c0_15, %c0_16] : memref<4x1x128xf32, #tpu.memory_space<vmem>>, vector<1x1x128xf32>
    %11 = vector.shape_cast %10 : vector<1x1x128xf32> to vector<1x128xf32>
    %c0_17 = arith.constant 0 : index
    %c0_18 = arith.constant 0 : index
    %c0_19 = arith.constant 0 : index
    %12 = vector.load %arg6[%c0_17, %c0_18, %c0_19] : memref<4x1x128xf32, #tpu.memory_space<vmem>>, vector<1x1x128xf32>
    %13 = vector.shape_cast %12 : vector<1x1x128xf32> to vector<1x128xf32>
    %cst = arith.constant dense<0.000000e+00> : vector<8x128xf32>
    %14 = tpu.matmul %1, %5, %cst {dimension_numbers = #tpu.dot_dimension_numbers<[1], [0], [0], [1], [0, 0, 1, 1], [], []>} : vector<8x128xf32>, vector<128x128xf32>, vector<8x128xf32> -> vector<8x128xf32>
    %15 = vector.broadcast %11 : vector<1x128xf32> to vector<8x128xf32>
    %16 = arith.addf %14, %15 : vector<8x128xf32>
    %17 = math.tanh %16 : vector<8x128xf32>
    %cst_20 = arith.constant dense<0.000000e+00> : vector<8x128xf32>
    %18 = tpu.matmul %17, %9, %cst_20 {dimension_numbers = #tpu.dot_dimension_numbers<[1], [0], [0], [1], [0, 0, 1, 1], [], []>} : vector<8x128xf32>, vector<128x128xf32>, vector<8x128xf32> -> vector<8x128xf32>
    %19 = arith.subf %0, %18 : vector<8x128xf32>
    %cst_21 = arith.constant dense<0.000000e+00> : vector<8x128xf32>
    %20 = tpu.matmul %19, %3, %cst_21 {dimension_numbers = #tpu.dot_dimension_numbers<[1], [0], [0], [1], [0, 0, 1, 1], [], []>} : vector<8x128xf32>, vector<128x128xf32>, vector<8x128xf32> -> vector<8x128xf32>
    %21 = vector.broadcast %13 : vector<1x128xf32> to vector<8x128xf32>
    %22 = arith.addf %20, %21 : vector<8x128xf32>
    %23 = math.tanh %22 : vector<8x128xf32>
    %cst_22 = arith.constant dense<0.000000e+00> : vector<8x128xf32>
    %24 = tpu.matmul %23, %7, %cst_22 {dimension_numbers = #tpu.dot_dimension_numbers<[1], [0], [0], [1], [0, 0, 1, 1], [], []>} : vector<8x128xf32>, vector<128x128xf32>, vector<8x128xf32> -> vector<8x128xf32>
    %25 = arith.addf %1, %24 : vector<8x128xf32>
    %c1 = arith.constant 1 : index
    %c0_23 = arith.constant 0 : index
    %c0_24 = arith.constant 0 : index
    %26 = vector.load %arg1[%c1, %c0_23, %c0_24] : memref<4x128x128xf32, #tpu.memory_space<vmem>>, vector<1x128x128xf32>
    %27 = vector.shape_cast %26 : vector<1x128x128xf32> to vector<128x128xf32>
    %c1_25 = arith.constant 1 : index
    %c0_26 = arith.constant 0 : index
    %c0_27 = arith.constant 0 : index
    %28 = vector.load %arg2[%c1_25, %c0_26, %c0_27] : memref<4x128x128xf32, #tpu.memory_space<vmem>>, vector<1x128x128xf32>
    %29 = vector.shape_cast %28 : vector<1x128x128xf32> to vector<128x128xf32>
    %c1_28 = arith.constant 1 : index
    %c0_29 = arith.constant 0 : index
    %c0_30 = arith.constant 0 : index
    %30 = vector.load %arg3[%c1_28, %c0_29, %c0_30] : memref<4x128x128xf32, #tpu.memory_space<vmem>>, vector<1x128x128xf32>
    %31 = vector.shape_cast %30 : vector<1x128x128xf32> to vector<128x128xf32>
    %c1_31 = arith.constant 1 : index
    %c0_32 = arith.constant 0 : index
    %c0_33 = arith.constant 0 : index
    %32 = vector.load %arg4[%c1_31, %c0_32, %c0_33] : memref<4x128x128xf32, #tpu.memory_space<vmem>>, vector<1x128x128xf32>
    %33 = vector.shape_cast %32 : vector<1x128x128xf32> to vector<128x128xf32>
    %c1_34 = arith.constant 1 : index
    %c0_35 = arith.constant 0 : index
    %c0_36 = arith.constant 0 : index
    %34 = vector.load %arg5[%c1_34, %c0_35, %c0_36] : memref<4x1x128xf32, #tpu.memory_space<vmem>>, vector<1x1x128xf32>
    %35 = vector.shape_cast %34 : vector<1x1x128xf32> to vector<1x128xf32>
    %c1_37 = arith.constant 1 : index
    %c0_38 = arith.constant 0 : index
    %c0_39 = arith.constant 0 : index
    %36 = vector.load %arg6[%c1_37, %c0_38, %c0_39] : memref<4x1x128xf32, #tpu.memory_space<vmem>>, vector<1x1x128xf32>
    %37 = vector.shape_cast %36 : vector<1x1x128xf32> to vector<1x128xf32>
    %cst_40 = arith.constant dense<0.000000e+00> : vector<8x128xf32>
    %38 = tpu.matmul %25, %29, %cst_40 {dimension_numbers = #tpu.dot_dimension_numbers<[1], [0], [0], [1], [0, 0, 1, 1], [], []>} : vector<8x128xf32>, vector<128x128xf32>, vector<8x128xf32> -> vector<8x128xf32>
    %39 = vector.broadcast %35 : vector<1x128xf32> to vector<8x128xf32>
    %40 = arith.addf %38, %39 : vector<8x128xf32>
    %41 = math.tanh %40 : vector<8x128xf32>
    %cst_41 = arith.constant dense<0.000000e+00> : vector<8x128xf32>
    %42 = tpu.matmul %41, %33, %cst_41 {dimension_numbers = #tpu.dot_dimension_numbers<[1], [0], [0], [1], [0, 0, 1, 1], [], []>} : vector<8x128xf32>, vector<128x128xf32>, vector<8x128xf32> -> vector<8x128xf32>
    %43 = arith.subf %19, %42 : vector<8x128xf32>
    %cst_42 = arith.constant dense<0.000000e+00> : vector<8x128xf32>
    %44 = tpu.matmul %43, %27, %cst_42 {dimension_numbers = #tpu.dot_dimension_numbers<[1], [0], [0], [1], [0, 0, 1, 1], [], []>} : vector<8x128xf32>, vector<128x128xf32>, vector<8x128xf32> -> vector<8x128xf32>
    %45 = vector.broadcast %37 : vector<1x128xf32> to vector<8x128xf32>
    %46 = arith.addf %44, %45 : vector<8x128xf32>
    %47 = math.tanh %46 : vector<8x128xf32>
    %cst_43 = arith.constant dense<0.000000e+00> : vector<8x128xf32>
    %48 = tpu.matmul %47, %31, %cst_43 {dimension_numbers = #tpu.dot_dimension_numbers<[1], [0], [0], [1], [0, 0, 1, 1], [], []>} : vector<8x128xf32>, vector<128x128xf32>, vector<8x128xf32> -> vector<8x128xf32>
    %49 = arith.addf %25, %48 : vector<8x128xf32>
    %c2 = arith.constant 2 : index
    %c0_44 = arith.constant 0 : index
    %c0_45 = arith.constant 0 : index
    %50 = vector.load %arg1[%c2, %c0_44, %c0_45] : memref<4x128x128xf32, #tpu.memory_space<vmem>>, vector<1x128x128xf32>
    %51 = vector.shape_cast %50 : vector<1x128x128xf32> to vector<128x128xf32>
    %c2_46 = arith.constant 2 : index
    %c0_47 = arith.constant 0 : index
    %c0_48 = arith.constant 0 : index
    %52 = vector.load %arg2[%c2_46, %c0_47, %c0_48] : memref<4x128x128xf32, #tpu.memory_space<vmem>>, vector<1x128x128xf32>
    %53 = vector.shape_cast %52 : vector<1x128x128xf32> to vector<128x128xf32>
    %c2_49 = arith.constant 2 : index
    %c0_50 = arith.constant 0 : index
    %c0_51 = arith.constant 0 : index
    %54 = vector.load %arg3[%c2_49, %c0_50, %c0_51] : memref<4x128x128xf32, #tpu.memory_space<vmem>>, vector<1x128x128xf32>
    %55 = vector.shape_cast %54 : vector<1x128x128xf32> to vector<128x128xf32>
    %c2_52 = arith.constant 2 : index
    %c0_53 = arith.constant 0 : index
    %c0_54 = arith.constant 0 : index
    %56 = vector.load %arg4[%c2_52, %c0_53, %c0_54] : memref<4x128x128xf32, #tpu.memory_space<vmem>>, vector<1x128x128xf32>
    %57 = vector.shape_cast %56 : vector<1x128x128xf32> to vector<128x128xf32>
    %c2_55 = arith.constant 2 : index
    %c0_56 = arith.constant 0 : index
    %c0_57 = arith.constant 0 : index
    %58 = vector.load %arg5[%c2_55, %c0_56, %c0_57] : memref<4x1x128xf32, #tpu.memory_space<vmem>>, vector<1x1x128xf32>
    %59 = vector.shape_cast %58 : vector<1x1x128xf32> to vector<1x128xf32>
    %c2_58 = arith.constant 2 : index
    %c0_59 = arith.constant 0 : index
    %c0_60 = arith.constant 0 : index
    %60 = vector.load %arg6[%c2_58, %c0_59, %c0_60] : memref<4x1x128xf32, #tpu.memory_space<vmem>>, vector<1x1x128xf32>
    %61 = vector.shape_cast %60 : vector<1x1x128xf32> to vector<1x128xf32>
    %cst_61 = arith.constant dense<0.000000e+00> : vector<8x128xf32>
    %62 = tpu.matmul %49, %53, %cst_61 {dimension_numbers = #tpu.dot_dimension_numbers<[1], [0], [0], [1], [0, 0, 1, 1], [], []>} : vector<8x128xf32>, vector<128x128xf32>, vector<8x128xf32> -> vector<8x128xf32>
    %63 = vector.broadcast %59 : vector<1x128xf32> to vector<8x128xf32>
    %64 = arith.addf %62, %63 : vector<8x128xf32>
    %65 = math.tanh %64 : vector<8x128xf32>
    %cst_62 = arith.constant dense<0.000000e+00> : vector<8x128xf32>
    %66 = tpu.matmul %65, %57, %cst_62 {dimension_numbers = #tpu.dot_dimension_numbers<[1], [0], [0], [1], [0, 0, 1, 1], [], []>} : vector<8x128xf32>, vector<128x128xf32>, vector<8x128xf32> -> vector<8x128xf32>
    %67 = arith.subf %43, %66 : vector<8x128xf32>
    %cst_63 = arith.constant dense<0.000000e+00> : vector<8x128xf32>
    %68 = tpu.matmul %67, %51, %cst_63 {dimension_numbers = #tpu.dot_dimension_numbers<[1], [0], [0], [1], [0, 0, 1, 1], [], []>} : vector<8x128xf32>, vector<128x128xf32>, vector<8x128xf32> -> vector<8x128xf32>
    %69 = vector.broadcast %61 : vector<1x128xf32> to vector<8x128xf32>
    %70 = arith.addf %68, %69 : vector<8x128xf32>
    %71 = math.tanh %70 : vector<8x128xf32>
    %cst_64 = arith.constant dense<0.000000e+00> : vector<8x128xf32>
    %72 = tpu.matmul %71, %55, %cst_64 {dimension_numbers = #tpu.dot_dimension_numbers<[1], [0], [0], [1], [0, 0, 1, 1], [], []>} : vector<8x128xf32>, vector<128x128xf32>, vector<8x128xf32> -> vector<8x128xf32>
    %73 = arith.addf %49, %72 : vector<8x128xf32>
    %c3 = arith.constant 3 : index
    %c0_65 = arith.constant 0 : index
    %c0_66 = arith.constant 0 : index
    %74 = vector.load %arg1[%c3, %c0_65, %c0_66] : memref<4x128x128xf32, #tpu.memory_space<vmem>>, vector<1x128x128xf32>
    %75 = vector.shape_cast %74 : vector<1x128x128xf32> to vector<128x128xf32>
    %c3_67 = arith.constant 3 : index
    %c0_68 = arith.constant 0 : index
    %c0_69 = arith.constant 0 : index
    %76 = vector.load %arg2[%c3_67, %c0_68, %c0_69] : memref<4x128x128xf32, #tpu.memory_space<vmem>>, vector<1x128x128xf32>
    %77 = vector.shape_cast %76 : vector<1x128x128xf32> to vector<128x128xf32>
    %c3_70 = arith.constant 3 : index
    %c0_71 = arith.constant 0 : index
    %c0_72 = arith.constant 0 : index
    %78 = vector.load %arg3[%c3_70, %c0_71, %c0_72] : memref<4x128x128xf32, #tpu.memory_space<vmem>>, vector<1x128x128xf32>
    %79 = vector.shape_cast %78 : vector<1x128x128xf32> to vector<128x128xf32>
    %c3_73 = arith.constant 3 : index
    %c0_74 = arith.constant 0 : index
    %c0_75 = arith.constant 0 : index
    %80 = vector.load %arg4[%c3_73, %c0_74, %c0_75] : memref<4x128x128xf32, #tpu.memory_space<vmem>>, vector<1x128x128xf32>
    %81 = vector.shape_cast %80 : vector<1x128x128xf32> to vector<128x128xf32>
    %c3_76 = arith.constant 3 : index
    %c0_77 = arith.constant 0 : index
    %c0_78 = arith.constant 0 : index
    %82 = vector.load %arg5[%c3_76, %c0_77, %c0_78] : memref<4x1x128xf32, #tpu.memory_space<vmem>>, vector<1x1x128xf32>
    %83 = vector.shape_cast %82 : vector<1x1x128xf32> to vector<1x128xf32>
    %c3_79 = arith.constant 3 : index
    %c0_80 = arith.constant 0 : index
    %c0_81 = arith.constant 0 : index
    %84 = vector.load %arg6[%c3_79, %c0_80, %c0_81] : memref<4x1x128xf32, #tpu.memory_space<vmem>>, vector<1x1x128xf32>
    %85 = vector.shape_cast %84 : vector<1x1x128xf32> to vector<1x128xf32>
    %cst_82 = arith.constant dense<0.000000e+00> : vector<8x128xf32>
    %86 = tpu.matmul %73, %77, %cst_82 {dimension_numbers = #tpu.dot_dimension_numbers<[1], [0], [0], [1], [0, 0, 1, 1], [], []>} : vector<8x128xf32>, vector<128x128xf32>, vector<8x128xf32> -> vector<8x128xf32>
    %87 = vector.broadcast %83 : vector<1x128xf32> to vector<8x128xf32>
    %88 = arith.addf %86, %87 : vector<8x128xf32>
    %89 = math.tanh %88 : vector<8x128xf32>
    %cst_83 = arith.constant dense<0.000000e+00> : vector<8x128xf32>
    %90 = tpu.matmul %89, %81, %cst_83 {dimension_numbers = #tpu.dot_dimension_numbers<[1], [0], [0], [1], [0, 0, 1, 1], [], []>} : vector<8x128xf32>, vector<128x128xf32>, vector<8x128xf32> -> vector<8x128xf32>
    %91 = arith.subf %67, %90 : vector<8x128xf32>
    %cst_84 = arith.constant dense<0.000000e+00> : vector<8x128xf32>
    %92 = tpu.matmul %91, %75, %cst_84 {dimension_numbers = #tpu.dot_dimension_numbers<[1], [0], [0], [1], [0, 0, 1, 1], [], []>} : vector<8x128xf32>, vector<128x128xf32>, vector<8x128xf32> -> vector<8x128xf32>
    %93 = vector.broadcast %85 : vector<1x128xf32> to vector<8x128xf32>
    %94 = arith.addf %92, %93 : vector<8x128xf32>
    %95 = math.tanh %94 : vector<8x128xf32>
    %cst_85 = arith.constant dense<0.000000e+00> : vector<8x128xf32>
    %96 = tpu.matmul %95, %79, %cst_85 {dimension_numbers = #tpu.dot_dimension_numbers<[1], [0], [0], [1], [0, 0, 1, 1], [], []>} : vector<8x128xf32>, vector<128x128xf32>, vector<8x128xf32> -> vector<8x128xf32>
    %97 = arith.addf %73, %96 : vector<8x128xf32>
    %c0_86 = arith.constant 0 : index
    %c0_87 = arith.constant 0 : index
    %98 = vector.load %arg8[%c0_86, %c0_87] : memref<8x256xf32, #tpu.memory_space<vmem>>, vector<8x128xf32>
    tpu.vector_store %arg8[%c0_86, %c0_87], %91 {strides = array<i32>} : memref<8x256xf32, #tpu.memory_space<vmem>>, vector<8x128xf32>,
    %c0_88 = arith.constant 0 : index
    %c128_89 = arith.constant 128 : index
    %99 = vector.load %arg8[%c0_88, %c128_89] : memref<8x256xf32, #tpu.memory_space<vmem>>, vector<8x128xf32>
    tpu.vector_store %arg8[%c0_88, %c128_89], %97 {strides = array<i32>} : memref<8x256xf32, #tpu.memory_space<vmem>>, vector<8x128xf32>,
    return
  }
  func.func @transform_0(%arg0: i32) -> (i32, i32, i32) {
    %c0_i32 = arith.constant 0 : i32
    %c0_i32_0 = arith.constant 0 : i32
    %c0_i32_1 = arith.constant 0 : i32
    %c0_i32_2 = arith.constant 0 : i32
    return %c0_i32, %c0_i32_0, %c0_i32_1 : i32, i32, i32
  }
  func.func @transform_1(%arg0: i32) -> (i32, i32, i32) {
    %c0_i32 = arith.constant 0 : i32
    %c0_i32_0 = arith.constant 0 : i32
    %c0_i32_1 = arith.constant 0 : i32
    %c0_i32_2 = arith.constant 0 : i32
    return %c0_i32, %c0_i32_0, %c0_i32_1 : i32, i32, i32
  }
  func.func @transform_2(%arg0: i32) -> (i32, i32, i32) {
    %c0_i32 = arith.constant 0 : i32
    %c0_i32_0 = arith.constant 0 : i32
    %c0_i32_1 = arith.constant 0 : i32
    %c0_i32_2 = arith.constant 0 : i32
    return %c0_i32, %c0_i32_0, %c0_i32_1 : i32, i32, i32
  }
  func.func @transform_3(%arg0: i32) -> (i32, i32, i32) {
    %c0_i32 = arith.constant 0 : i32
    %c0_i32_0 = arith.constant 0 : i32
    %c0_i32_1 = arith.constant 0 : i32
    %c0_i32_2 = arith.constant 0 : i32
    return %c0_i32, %c0_i32_0, %c0_i32_1 : i32, i32, i32
  }
  func.func @transform_4(%arg0: i32) -> (i32, i32, i32) {
    %c0_i32 = arith.constant 0 : i32
    %c0_i32_0 = arith.constant 0 : i32
    %c0_i32_1 = arith.constant 0 : i32
    %c0_i32_2 = arith.constant 0 : i32
    return %c0_i32, %c0_i32_0, %c0_i32_1 : i32, i32, i32
  }
  func.func @transform_5(%arg0: i32) -> (i32, i32, i32) {
    %c0_i32 = arith.constant 0 : i32
    %c0_i32_0 = arith.constant 0 : i32
    %c0_i32_1 = arith.constant 0 : i32
    %c0_i32_2 = arith.constant 0 : i32
    return %c0_i32, %c0_i32_0, %c0_i32_1 : i32, i32, i32
  }
  func.func @transform_6(%arg0: i32) -> (i32, i32) {
    %c0_i32 = arith.constant 0 : i32
    %c0_i32_0 = arith.constant 0 : i32
    return %arg0, %c0_i32 : i32, i32
  }
  func.func @transform_7(%arg0: i32) -> (i32, i32) {
    %c0_i32 = arith.constant 0 : i32
    %c0_i32_0 = arith.constant 0 : i32
    return %arg0, %c0_i32 : i32, i32
  }
}

</mosaic_0001>

<llo_original>
// kernel: tpu_custom_call.1
$region0: #{tpu_custom_call.1}
  #allocation0 [shape = 'u32[]', space=smem, size = 0x4, offset = 0x4, fixed_abs, tag = 'smem constant byte address 0x4 - core index']
  #allocation1 [shape = 'u32[144,128]{1,0:T(1,128)}', space=vmem, size = 0x12000, scoped, tag = 'internal scratch']
  %s0 = inlined_call_operand.hbm [shape: f32[4,128,128], index: 0, kind: input, shape index: {}]
  %s1 = inlined_call_operand.hbm [shape: f32[4,128,128], index: 1, kind: input, shape index: {}]
  %s2 = inlined_call_operand.hbm [shape: f32[4,128,128], index: 2, kind: input, shape index: {}]
  %s3 = inlined_call_operand.hbm [shape: f32[4,128,128], index: 3, kind: input, shape index: {}]
  %s4 = inlined_call_operand.vmem [shape: f32[4,1,128], index: 4, kind: input, shape index: {}]
  %s5 = inlined_call_operand.vmem [shape: f32[4,1,128], index: 5, kind: input, shape index: {}]
  %s6 = inlined_call_operand.hbm [shape: f32[16,256], index: 6, kind: input, shape index: {}]
  %s7 = inlined_call_operand.hbm [shape: f32[16,256], index: 7, kind: output, shape index: {}]
  %s8 = sld [smem:[#allocation0]]
  $region81: #{tpu_custom_call.1} parent=0
    _
  %s10 = ssub.s32 1, %s8
  %s11 = scalar_select 0, %s10, %s8
  $region1: #{tpu_custom_call.1} parent=0
    #allocation2 [shape = 'u8[262144]{0}', space=vmem, size = 0x40000, scoped, tag = 'input window, operand 0, single buffered']
    #allocation3 [shape = 's32[2]{0}', space=sflag, size = 0x8, scoped, tag = 'scoped memory for tpu_custom_call.1']
    #allocation4 [shape = 's32[2]{0}', space=sflag, size = 0x8, scoped, tag = 'scoped memory for tpu_custom_call.1']
    #allocation5 [shape = 'u8[262144]{0}', space=vmem, size = 0x40000, scoped, tag = 'input window, operand 1, single buffered']
    #allocation6 [shape = 's32[1]{0}', space=sflag, size = 0x4, scoped, tag = 'scoped memory for tpu_custom_call.1']
    #allocation7 [shape = 'u8[262144]{0}', space=vmem, size = 0x40000, scoped, tag = 'input window, operand 2, single buffered']
    #allocation8 [shape = 'u8[262144]{0}', space=vmem, size = 0x40000, scoped, tag = 'input window, operand 3, single buffered']
    #allocation9 [shape = 's32[1]{0}', space=sflag, size = 0x4, scoped, tag = 'scoped memory for tpu_custom_call.1']
    #allocation10 [shape = 'u8[16384]{0}', space=vmem, size = 0x4000, scoped, tag = 'input window, operand 6']
    #allocation11 [shape = 'u8[16384]{0}', space=vmem, size = 0x4000, scoped, tag = 'output window, operand 0']
    %12 = vsyncpa [#allocation3], 0
    %13 = vsyncpa [#allocation6], 0
    %14 = vsyncpa [#allocation9], 0
    %15 = vsyncpa [#allocation4], 0
    %s16 = scalar_lea.sflag [#allocation4], 1
    %17 = vsyncpa %s16, 0
    loop: start=0, step=1, limit=4
    $region2: #{tpu_custom_call.1} parent=1 // loop_pre_header
      _
    $region3: #{tpu_custom_call.1} parent=1 // loop_header
      %s19 = sphi 0, %s23
      %p20 = scmp.ge.s32.totalorder %s19, 4
      %s27 = sphi 0, %s27
      %s29 = sphi 0, %s27
      %s30 = sphi 0, %s29
      %s44 = sphi 0, %s30
      %s48 = sphi 0, %s48
      %s50 = sphi 0, %s48
      %s51 = sphi 0, %s50
      %s65 = sphi 0, %s51
      %s69 = sphi 0, %s69
      %s71 = sphi 0, %s69
      %s72 = sphi 0, %s71
      %s86 = sphi 0, %s72
      %s90 = sphi 0, %s90
      %s92 = sphi 0, %s90
      %s93 = sphi 0, %s92
      %s107 = sphi 0, %s93
      %s111 = sphi 0, %s111
      %s113 = sphi 0, %s111
      %s114 = sphi 0, %s113
      %s128 = sphi 0, %s114
      %s132 = sphi 0, %s132
      %s134 = sphi 0, %s132
      %s135 = sphi 0, %s134
      %s149 = sphi 0, %s135
      %s155 = sphi 0, %s157
      %s158 = sphi 0, %s155
      %s159 = sphi 0, %s158
      %s175 = sphi 0, %s159
      %s181 = sphi 0, %s183
      %s184 = sphi 0, %s181
      %s185 = sphi 0, %s184
      %s201 = sphi 0, %s185
    $region4: #{tpu_custom_call.1} parent=1 // loop_header_branch
      %22 = sbr.rel (%p20) target = $region8
    $region5: #{tpu_custom_call.1} parent=1 // loop_body
      %s24 = ssub.s32 %s19, 1
      %s25 = ssub.s32 %s19, 2
      %s26 = sadd.s32 %s19, 1
      %s28 = sadd.s32 %s27, 1
      %p31 = scmp.eq.s32.totalorder %s19, 1
      %p32 = scmp.ne.s32.totalorder %s27, %s29
      %p33 = scmp.eq.s32.totalorder %s19, 0
      %p34 = por %p32, %p33
      %p35 = scmp.ne.s32.totalorder %s27, %s29
      %p36 = scmp.eq.s32.totalorder %s24, 1
      %p37 = por %p35, %p36
      %p38 = scmp.ne.s32.totalorder %s29, %s30
      %p39 = scmp.eq.s32.totalorder %s24, 0
      %p40 = por %p38, %p39
      %p41 = scmp.ne.s32.totalorder %s29, %s30
      %p42 = scmp.eq.s32.totalorder %s25, 1
      %p43 = por %p41, %p42
      %p45 = scmp.ne.s32.totalorder %s30, %s44
      %p46 = scmp.eq.s32.totalorder %s25, 0
      %p47 = por %p45, %p46
      %s49 = sadd.s32 %s48, 1
      %p52 = scmp.eq.s32.totalorder %s19, 1
      %p53 = scmp.ne.s32.totalorder %s48, %s50
      %p54 = scmp.eq.s32.totalorder %s19, 0
      %p55 = por %p53, %p54
      %p56 = scmp.ne.s32.totalorder %s48, %s50
      %p57 = scmp.eq.s32.totalorder %s24, 1
      %p58 = por %p56, %p57
      %p59 = scmp.ne.s32.totalorder %s50, %s51
      %p60 = scmp.eq.s32.totalorder %s24, 0
      %p61 = por %p59, %p60
      %p62 = scmp.ne.s32.totalorder %s50, %s51
      %p63 = scmp.eq.s32.totalorder %s25, 1
      %p64 = por %p62, %p63
      %p66 = scmp.ne.s32.totalorder %s51, %s65
      %p67 = scmp.eq.s32.totalorder %s25, 0
      %p68 = por %p66, %p67
      %s70 = sadd.s32 %s69, 1
      %p73 = scmp.eq.s32.totalorder %s19, 1
      %p74 = scmp.ne.s32.totalorder %s69, %s71
      %p75 = scmp.eq.s32.totalorder %s19, 0
      %p76 = por %p74, %p75
      %p77 = scmp.ne.s32.totalorder %s69, %s71
      %p78 = scmp.eq.s32.totalorder %s24, 1
      %p79 = por %p77, %p78
      %p80 = scmp.ne.s32.totalorder %s71, %s72
      %p81 = scmp.eq.s32.totalorder %s24, 0
      %p82 = por %p80, %p81
      %p83 = scmp.ne.s32.totalorder %s71, %s72
      %p84 = scmp.eq.s32.totalorder %s25, 1
      %p85 = por %p83, %p84
      %p87 = scmp.ne.s32.totalorder %s72, %s86
      %p88 = scmp.eq.s32.totalorder %s25, 0
      %p89 = por %p87, %p88
      %s91 = sadd.s32 %s90, 1
      %p94 = scmp.eq.s32.totalorder %s19, 1
      %p95 = scmp.ne.s32.totalorder %s90, %s92
      %p96 = scmp.eq.s32.totalorder %s19, 0
      %p97 = por %p95, %p96
      %p98 = scmp.ne.s32.totalorder %s90, %s92
      %p99 = scmp.eq.s32.totalorder %s24, 1
      %p100 = por %p98, %p99
      %p101 = scmp.ne.s32.totalorder %s92, %s93
      %p102 = scmp.eq.s32.totalorder %s24, 0
      %p103 = por %p101, %p102
      %p104 = scmp.ne.s32.totalorder %s92, %s93
      %p105 = scmp.eq.s32.totalorder %s25, 1
      %p106 = por %p104, %p105
      %p108 = scmp.ne.s32.totalorder %s93, %s107
      %p109 = scmp.eq.s32.totalorder %s25, 0
      %p110 = por %p108, %p109
      %s112 = sadd.s32 %s111, 1
      %p115 = scmp.eq.s32.totalorder %s19, 1
      %p116 = scmp.ne.s32.totalorder %s111, %s113
      %p117 = scmp.eq.s32.totalorder %s19, 0
      %p118 = por %p116, %p117
      %p119 = scmp.ne.s32.totalorder %s111, %s113
      %p120 = scmp.eq.s32.totalorder %s24, 1
      %p121 = por %p119, %p120
      %p122 = scmp.ne.s32.totalorder %s113, %s114
      %p123 = scmp.eq.s32.totalorder %s24, 0
      %p124 = por %p122, %p123
      %p125 = scmp.ne.s32.totalorder %s113, %s114
      %p126 = scmp.eq.s32.totalorder %s25, 1
      %p127 = por %p125, %p126
      %p129 = scmp.ne.s32.totalorder %s114, %s128
      %p130 = scmp.eq.s32.totalorder %s25, 0
      %p131 = por %p129, %p130
      %s133 = sadd.s32 %s132, 1
      %p136 = scmp.eq.s32.totalorder %s19, 1
      %p137 = scmp.ne.s32.totalorder %s132, %s134
      %p138 = scmp.eq.s32.totalorder %s19, 0
      %p139 = por %p137, %p138
      %p140 = scmp.ne.s32.totalorder %s132, %s134
      %p141 = scmp.eq.s32.totalorder %s24, 1
      %p142 = por %p140, %p141
      %p143 = scmp.ne.s32.totalorder %s134, %s135
      %p144 = scmp.eq.s32.totalorder %s24, 0
      %p145 = por %p143, %p144
      %p146 = scmp.ne.s32.totalorder %s134, %s135
      %p147 = scmp.eq.s32.totalorder %s25, 1
      %p148 = por %p146, %p147
      %p150 = scmp.ne.s32.totalorder %s135, %s149
      %p151 = scmp.eq.s32.totalorder %s25, 0
      %p152 = por %p150, %p151
      %s153 = ssub.s32 %s19, %s26
      %p154 = scmp.eq.s32.totalorder %s153, 0
      %s156 = sadd.s32 %s155, 1
      %s157 = scalar_select %p154, %s155, %s156
      %p160 = pneg %p154
      %p161 = scmp.eq.s32.totalorder %s19, 1
      %p162 = por %p160, %p161
      %p163 = scmp.ne.s32.totalorder %s155, %s158
      %p164 = scmp.eq.s32.totalorder %s19, 0
      %p165 = por %p163, %p164
      %p166 = scmp.ne.s32.totalorder %s155, %s158
      %p167 = scmp.eq.s32.totalorder %s24, 1
      %p168 = por %p166, %p167
      %p169 = scmp.ne.s32.totalorder %s158, %s159
      %p170 = scmp.eq.s32.totalorder %s24, 0
      %p171 = por %p169, %p170
      %p172 = scmp.ne.s32.totalorder %s158, %s159
      %p173 = scmp.eq.s32.totalorder %s25, 1
      %p174 = por %p172, %p173
      %p176 = scmp.ne.s32.totalorder %s159, %s175
      %p177 = scmp.eq.s32.totalorder %s25, 0
      %p178 = por %p176, %p177
      %s179 = ssub.s32 %s19, %s26
      %p180 = scmp.eq.s32.totalorder %s179, 0
      %s182 = sadd.s32 %s181, 1
      %s183 = scalar_select %p180, %s181, %s182
      %p186 = pneg %p180
      %p187 = scmp.eq.s32.totalorder %s19, 1
      %p188 = por %p186, %p187
      %p189 = scmp.ne.s32.totalorder %s181, %s184
      %p190 = scmp.eq.s32.totalorder %s19, 0
      %p191 = por %p189, %p190
      %p192 = scmp.ne.s32.totalorder %s181, %s184
      %p193 = scmp.eq.s32.totalorder %s24, 1
      %p194 = por %p192, %p193
      %p195 = scmp.ne.s32.totalorder %s184, %s185
      %p196 = scmp.eq.s32.totalorder %s24, 0
      %p197 = por %p195, %p196
      %p198 = scmp.ne.s32.totalorder %s184, %s185
      %p199 = scmp.eq.s32.totalorder %s25, 1
      %p200 = por %p198, %p199
      %p202 = scmp.ne.s32.totalorder %s185, %s201
      %p203 = scmp.eq.s32.totalorder %s25, 0
      %p204 = por %p202, %p203
      %p205 = scmp.le.s32.totalorder 1, %s19
      %p206 = scmp.lt.s32.totalorder %s19, 3
      %p207 = pnand %p205, %p206
      %p208 = pneg %p207
      // Predicated region
      $region9: #{tpu_custom_call.1} parent=5 // pred_check
        _
      $region10: #{tpu_custom_call.1} parent=5 // pred_check_branch
        %210 = sbr.rel (%p207) target = $region12
      $region11: #{tpu_custom_call.1} parent=5 // pred_region
        %s211 = ssub.s32 %s19, 1
        // Predicated region
        $region13: #{tpu_custom_call.1} parent=11 // pred_check
          %p212 = pneg %p40
        $region14: #{tpu_custom_call.1} parent=11 // pred_check_branch
          %214 = sbr.rel (%p212) target = $region16
        $region15: #{tpu_custom_call.1} parent=11 // pred_region
          %s216 = ssub.s32 8192, 8192
          %217 = vsyncadd [#allocation3], %s216
          %s218 = sshll.u32 [#allocation2], 4
          %s219 = int_to_ptr.vmem [resolvable:$true] %s218
          %224 = dma.hbm_to_vmem [thread:$0]  %s0, 8192, %s219, [#allocation3], 128, 128, 8
        $region16: #{tpu_custom_call.1} parent=11 // pred_fallthru
          _
        // Predicated region
        $region17: #{tpu_custom_call.1} parent=11 // pred_check
          %p225 = pneg %p61
        $region18: #{tpu_custom_call.1} parent=11 // pred_check_branch
          %227 = sbr.rel (%p225) target = $region20
        $region19: #{tpu_custom_call.1} parent=11 // pred_region
          %s229 = ssub.s32 8192, 8192
          %230 = vsyncadd [#allocation6], %s229
          %s231 = sshll.u32 [#allocation5], 4
          %s232 = int_to_ptr.vmem [resolvable:$true] %s231
          %237 = dma.hbm_to_vmem [thread:$0]  %s1, 8192, %s232, [#allocation6], 128, 128, 8
        $region20: #{tpu_custom_call.1} parent=11 // pred_fallthru
          _
        // Predicated region
        $region21: #{tpu_custom_call.1} parent=11 // pred_check
          %p238 = pneg %p82
        $region22: #{tpu_custom_call.1} parent=11 // pred_check_branch
          %240 = sbr.rel (%p238) target = $region24
        $region23: #{tpu_custom_call.1} parent=11 // pred_region
          %s242 = ssub.s32 8192, 8192
          %243 = vsyncadd [#allocation6], %s242
          %s244 = sshll.u32 [#allocation7], 4
          %s245 = int_to_ptr.vmem [resolvable:$true] %s244
          %250 = dma.hbm_to_vmem [thread:$0]  %s2, 8192, %s245, [#allocation6], 128, 128, 8
        $region24: #{tpu_custom_call.1} parent=11 // pred_fallthru
          _
        // Predicated region
        $region25: #{tpu_custom_call.1} parent=11 // pred_check
          %p251 = pneg %p103
        $region26: #{tpu_custom_call.1} parent=11 // pred_check_branch
          %253 = sbr.rel (%p251) target = $region28
        $region27: #{tpu_custom_call.1} parent=11 // pred_region
          %s255 = ssub.s32 8192, 8192
          %256 = vsyncadd [#allocation9], %s255
          %s257 = sshll.u32 [#allocation8], 4
          %s258 = int_to_ptr.vmem [resolvable:$true] %s257
          %263 = dma.hbm_to_vmem [thread:$0]  %s3, 8192, %s258, [#allocation9], 128, 128, 8
        $region28: #{tpu_custom_call.1} parent=11 // pred_fallthru
          _
        // Predicated region
        $region29: #{tpu_custom_call.1} parent=11 // pred_check
          %p264 = pneg %p124
        $region30: #{tpu_custom_call.1} parent=11 // pred_check_branch
          %266 = sbr.rel (%p264) target = $region32
        $region31: #{tpu_custom_call.1} parent=11 // pred_region
          _
        $region32: #{tpu_custom_call.1} parent=11 // pred_fallthru
          _
        // Predicated region
        $region33: #{tpu_custom_call.1} parent=11 // pred_check
          %p267 = pneg %p145
        $region34: #{tpu_custom_call.1} parent=11 // pred_check_branch
          %269 = sbr.rel (%p267) target = $region36
        $region35: #{tpu_custom_call.1} parent=11 // pred_region
          _
        $region36: #{tpu_custom_call.1} parent=11 // pred_fallthru
          _
      $region12: #{tpu_custom_call.1} parent=5 // pred_fallthru
        _
      %p270 = scmp.lt.s32.totalorder %s19, 2
      // Predicated region
      $region37: #{tpu_custom_call.1} parent=5 // pred_check
        %p271 = pneg %p270
      $region38: #{tpu_custom_call.1} parent=5 // pred_check_branch
        %273 = sbr.rel (%p271) target = $region40
      $region39: #{tpu_custom_call.1} parent=5 // pred_region
        // Predicated region
        $region41: #{tpu_custom_call.1} parent=39 // pred_check
          %p274 = pneg %p165
        $region42: #{tpu_custom_call.1} parent=39 // pred_check_branch
          %276 = sbr.rel (%p274) target = $region44
        $region43: #{tpu_custom_call.1} parent=39 // pred_region
          %s277 = sand.u32 %s19, 1
          %s278 = scalar_lea.sflag [#allocation3], %s277
          %s279 = sand.u32 %s155, 1
          %s280 = smul.addr %s279, 16
          %s281 = scalar_lea.vmem [#allocation10], %s280
          %s283 = ssub.s32 256, 256
          %284 = vsyncadd %s278, %s283
          %s285 = smul.addr %s19, 2
          %s286 = smul.addr %s285, 128
          %s287 = scalar_lea.hbm %s6, %s286
          %s289 = sshll.u32 %s281, 4
          %s290 = int_to_ptr.vmem [resolvable:$true] %s289
          %292 = dma.hbm_to_vmem [thread:$0]  %s287, 256, %s290, %s278
        $region44: #{tpu_custom_call.1} parent=39 // pred_fallthru
          _
      $region40: #{tpu_custom_call.1} parent=5 // pred_fallthru
        _
      %p293 = scmp.le.s32.totalorder 1, %s19
      %p294 = scmp.lt.s32.totalorder %s19, 3
      %p295 = pnand %p293, %p294
      %p296 = pneg %p295
      // Predicated region
      $region45: #{tpu_custom_call.1} parent=5 // pred_check
        _
      $region46: #{tpu_custom_call.1} parent=5 // pred_check_branch
        %298 = sbr.rel (%p295) target = $region48
      $region47: #{tpu_custom_call.1} parent=5 // pred_region
        %s299 = ssub.s32 %s19, 1
        // Predicated region
        $region49: #{tpu_custom_call.1} parent=47 // pred_check
          %p300 = pneg %p40
        $region50: #{tpu_custom_call.1} parent=47 // pred_check_branch
          %302 = sbr.rel (%p300) target = $region52
        $region51: #{tpu_custom_call.1} parent=47 // pred_region
          %303 = dma.done [#allocation3], 8192
        $region52: #{tpu_custom_call.1} parent=47 // pred_fallthru
          _
        // Predicated region
        $region53: #{tpu_custom_call.1} parent=47 // pred_check
          %p304 = pneg %p61
        $region54: #{tpu_custom_call.1} parent=47 // pred_check_branch
          %306 = sbr.rel (%p304) target = $region56
        $region55: #{tpu_custom_call.1} parent=47 // pred_region
          %307 = dma.done [#allocation6], 8192
        $region56: #{tpu_custom_call.1} parent=47 // pred_fallthru
          _
        // Predicated region
        $region57: #{tpu_custom_call.1} parent=47 // pred_check
          %p308 = pneg %p82
        $region58: #{tpu_custom_call.1} parent=47 // pred_check_branch
          %310 = sbr.rel (%p308) target = $region60
        $region59: #{tpu_custom_call.1} parent=47 // pred_region
          %311 = dma.done [#allocation6], 8192
        $region60: #{tpu_custom_call.1} parent=47 // pred_fallthru
          _
        // Predicated region
        $region61: #{tpu_custom_call.1} parent=47 // pred_check
          %p312 = pneg %p103
        $region62: #{tpu_custom_call.1} parent=47 // pred_check_branch
          %314 = sbr.rel (%p312) target = $region64
        $region63: #{tpu_custom_call.1} parent=47 // pred_region
          %315 = dma.done [#allocation9], 8192
        $region64: #{tpu_custom_call.1} parent=47 // pred_fallthru
          _
        %s316 = sand.u32 %s24, 1
        %s317 = scalar_lea.sflag [#allocation3], %s316
        %s318 = sand.u32 %s158, 1
        %s319 = smul.addr %s318, 16
        %s320 = scalar_lea.vmem [#allocation10], %s319
        // Predicated region
        $region65: #{tpu_custom_call.1} parent=47 // pred_check
          %p321 = pneg %p171
        $region66: #{tpu_custom_call.1} parent=47 // pred_check_branch
          %323 = sbr.rel (%p321) target = $region68
        $region67: #{tpu_custom_call.1} parent=47 // pred_region
          %324 = dma.done %s317, 256
        $region68: #{tpu_custom_call.1} parent=47 // pred_fallthru
          _
        %p325 = pneg %p40
        %p326 = pneg %p37
        %p327 = pneg %p61
        %p328 = pneg %p58
        %p329 = pneg %p82
        %p330 = pneg %p79
        %p331 = pneg %p103
        %p332 = pneg %p100
        %p333 = pneg %p124
        %p334 = pneg %p121
        %p335 = pneg %p145
        %p336 = pneg %p142
        %s337 = sand.u32 %s24, 1
        %s338 = scalar_lea.sflag [#allocation3], %s337
        %s339 = sand.u32 %s158, 1
        %s340 = smul.addr %s339, 16
        %s341 = scalar_lea.vmem [#allocation10], %s340
        %p342 = pneg %p171
        %p343 = pneg %p168
        %p344 = pneg %p197
        %p345 = pneg %p194
        %s346 = sand.u32 %s184, 1
        %s347 = scalar_lea.sflag [#allocation4], %s346
        %s348 = sand.u32 %s184, 1
        %s349 = smul.addr %s348, 16
        %s350 = scalar_lea.vmem [#allocation11], %s349
        %v351 = vld [vmem:[%s320] sm:$0xff]
        %v352 = vld [vmem:[%s320 + $0x8] sm:$0xff]
        %v353 = vld [vmem:[#allocation2] sm:$0xff]
        %v354 = vld [vmem:[#allocation2 + $0x8] sm:$0xff]
        %v355 = vld [vmem:[#allocation2 + $0x10] sm:$0xff]
        %v356 = vld [vmem:[#allocation2 + $0x18] sm:$0xff]
        %v357 = vld [vmem:[#allocation2 + $0x20] sm:$0xff]
        %v358 = vld [vmem:[#allocation2 + $0x28] sm:$0xff]
        %v359 = vld [vmem:[#allocation2 + $0x30] sm:$0xff]
        %v360 = vld [vmem:[#allocation2 + $0x38] sm:$0xff]
        %v361 = vld [vmem:[#allocation2 + $0x40] sm:$0xff]
        %v362 = vld [vmem:[#allocation2 + $0x48] sm:$0xff]
        %v363 = vld [vmem:[#allocation2 + $0x50] sm:$0xff]
        %v364 = vld [vmem:[#allocation2 + $0x58] sm:$0xff]
        %v365 = vld [vmem:[#allocation2 + $0x60] sm:$0xff]
        %v366 = vld [vmem:[#allocation2 + $0x68] sm:$0xff]
        %v367 = vld [vmem:[#allocation2 + $0x70] sm:$0xff]
        %v368 = vld [vmem:[#allocation2 + $0x78] sm:$0xff]
        %v369 = vld [vmem:[#allocation5] sm:$0xff]
        %v370 = vld [vmem:[#allocation5 + $0x8] sm:$0xff]
        %v371 = vld [vmem:[#allocation5 + $0x10] sm:$0xff]
        %v372 = vld [vmem:[#allocation5 + $0x18] sm:$0xff]
        %v373 = vld [vmem:[#allocation5 + $0x20] sm:$0xff]
        %v374 = vld [vmem:[#allocation5 + $0x28] sm:$0xff]
        %v375 = vld [vmem:[#allocation5 + $0x30] sm:$0xff]
        %v376 = vld [vmem:[#allocation5 + $0x38] sm:$0xff]
        %v377 = vld [vmem:[#allocation5 + $0x40] sm:$0xff]
        %v378 = vld [vmem:[#allocation5 + $0x48] sm:$0xff]
        %v379 = vld [vmem:[#allocation5 + $0x50] sm:$0xff]
        %v380 = vld [vmem:[#allocation5 + $0x58] sm:$0xff]
        %v381 = vld [vmem:[#allocation5 + $0x60] sm:$0xff]
        %v382 = vld [vmem:[#allocation5 + $0x68] sm:$0xff]
        %v383 = vld [vmem:[#allocation5 + $0x70] sm:$0xff]
        %v384 = vld [vmem:[#allocation5 + $0x78] sm:$0xff]
        %v385 = vld [vmem:[#allocation7] sm:$0xff]
        %v386 = vld [vmem:[#allocation7 + $0x8] sm:$0xff]
        %v387 = vld [vmem:[#allocation7 + $0x10] sm:$0xff]
        %v388 = vld [vmem:[#allocation7 + $0x18] sm:$0xff]
        %v389 = vld [vmem:[#allocation7 + $0x20] sm:$0xff]
        %v390 = vld [vmem:[#allocation7 + $0x28] sm:$0xff]
        %v391 = vld [vmem:[#allocation7 + $0x30] sm:$0xff]
        %v392 = vld [vmem:[#allocation7 + $0x38] sm:$0xff]
        %v393 = vld [vmem:[#allocation7 + $0x40] sm:$0xff]
        %v394 = vld [vmem:[#allocation7 + $0x48] sm:$0xff]
        %v395 = vld [vmem:[#allocation7 + $0x50] sm:$0xff]
        %v396 = vld [vmem:[#allocation7 + $0x58] sm:$0xff]
        %v397 = vld [vmem:[#allocation7 + $0x60] sm:$0xff]
        %v398 = vld [vmem:[#allocation7 + $0x68] sm:$0xff]
        %v399 = vld [vmem:[#allocation7 + $0x70] sm:$0xff]
        %v400 = vld [vmem:[#allocation7 + $0x78] sm:$0xff]
        %v401 = vld [vmem:[#allocation8] sm:$0xff]
        %v402 = vld [vmem:[#allocation8 + $0x8] sm:$0xff]
        %v403 = vld [vmem:[#allocation8 + $0x10] sm:$0xff]
        %v404 = vld [vmem:[#allocation8 + $0x18] sm:$0xff]
        %v405 = vld [vmem:[#allocation8 + $0x20] sm:$0xff]
        %v406 = vld [vmem:[#allocation8 + $0x28] sm:$0xff]
        %v407 = vld [vmem:[#allocation8 + $0x30] sm:$0xff]
        %v408 = vld [vmem:[#allocation8 + $0x38] sm:$0xff]
        %v409 = vld [vmem:[#allocation8 + $0x40] sm:$0xff]
        %v410 = vld [vmem:[#allocation8 + $0x48] sm:$0xff]
        %v411 = vld [vmem:[#allocation8 + $0x50] sm:$0xff]
        %v412 = vld [vmem:[#allocation8 + $0x58] sm:$0xff]
        %v413 = vld [vmem:[#allocation8 + $0x60] sm:$0xff]
        %v414 = vld [vmem:[#allocation8 + $0x68] sm:$0xff]
        %v415 = vld [vmem:[#allocation8 + $0x70] sm:$0xff]
        %v416 = vld [vmem:[#allocation8 + $0x78] sm:$0xff]
        %v417 = vld [vmem:[%s4] sm:$0x1]
        %v418 = vld [vmem:[%s5] sm:$0x1]
        %v420 = vlaneseq
        %v421 = vshrl.u32 %v420, 7
        %v422 = vsub.s32 0, %v421
        %v423 = vrot.slane %v417, %v422
        %425 = vmatprep.subr.mxu0 0.0
        %426 = vmatpush1.msra.mxu0 %v384
        %427 = vmatprep.subr.mxu0 0.0
        %428 = vmatpush1.msra.mxu0 %v383
        %429 = vmatprep.subr.mxu0 0.0
        %430 = vmatpush1.msra.mxu0 %v382
        %431 = vmatprep.subr.mxu0 0.0
        %432 = vmatpush1.msra.mxu0 %v381
        %433 = vmatprep.subr.mxu0 0.0
        %434 = vmatpush1.msra.mxu0 %v380
        %435 = vmatprep.subr.mxu0 0.0
        %436 = vmatpush1.msra.mxu0 %v379
        %437 = vmatprep.subr.mxu0 0.0
        %438 = vmatpush1.msra.mxu0 %v378
        %439 = vmatprep.subr.mxu0 0.0
        %440 = vmatpush1.msra.mxu0 %v377
        %441 = vmatprep.subr.mxu0 0.0
        %442 = vmatpush1.msra.mxu0 %v376
        %443 = vmatprep.subr.mxu0 0.0
        %444 = vmatpush1.msra.mxu0 %v375
        %445 = vmatprep.subr.mxu0 0.0
        %446 = vmatpush1.msra.mxu0 %v374
        %447 = vmatprep.subr.mxu0 0.0
        %448 = vmatpush1.msra.mxu0 %v373
        %449 = vmatprep.subr.mxu0 0.0
        %450 = vmatpush1.msra.mxu0 %v372
        %451 = vmatprep.subr.mxu0 0.0
        %452 = vmatpush1.msra.mxu0 %v371
        %453 = vmatprep.subr.mxu0 0.0
        %454 = vmatpush1.msra.mxu0 %v370
        %455 = vmatprep.subr.mxu0 0.0
        %456 = vmatpush1.msra.mxu0 %v369
        %457 = vmatprep.subr.mxu0 0.0
        %458 = vmatpush2.msra.mxu0 0.0
        %459 = vmatprep.subr.mxu0 0.0
        %460 = vmatpush2.msra.mxu0 0.0
        %461 = vmatprep.subr.mxu0 0.0
        %462 = vmatpush2.msra.mxu0 0.0
        %463 = vmatprep.subr.mxu0 0.0
        %464 = vmatpush2.msra.mxu0 0.0
        %465 = vmatprep.subr.mxu0 0.0
        %466 = vmatpush2.msra.mxu0 0.0
        %467 = vmatprep.subr.mxu0 0.0
        %468 = vmatpush2.msra.mxu0 0.0
        %469 = vmatprep.subr.mxu0 0.0
        %470 = vmatpush2.msra.mxu0 0.0
        %471 = vmatprep.subr.mxu0 0.0
        %472 = vmatpush2.msra.mxu0 0.0
        %473 = vmatprep.subr.mxu0 0.0
        %474 = vmatpush2.msra.mxu0 0.0
        %475 = vmatprep.subr.mxu0 0.0
        %476 = vmatpush2.msra.mxu0 0.0
        %477 = vmatprep.subr.mxu0 0.0
        %478 = vmatpush2.msra.mxu0 0.0
        %479 = vmatprep.subr.mxu0 0.0
        %480 = vmatpush2.msra.mxu0 0.0
        %481 = vmatprep.subr.mxu0 0.0
        %482 = vmatpush2.msra.mxu0 0.0
        %483 = vmatprep.subr.mxu0 0.0
        %484 = vmatpush2.msra.mxu0 0.0
        %485 = vmatprep.subr.mxu0 0.0
        %486 = vmatpush2.msra.mxu0 0.0
        %487 = vmatprep.subr.mxu0 0.0
        %488 = vmatpush2.msra.mxu0 0.0
        %489 = vmatprep.mubr.f32.mxu0 0.0
        %490 = vmatmul.mubr.f32.gmra.mxu0 %v352
        %v491 = vpop.f32.mrf.mxu0
        %v492 = vadd.f32 %v423, %v491
        %v493 = vpop.f32.mrf.mxu0
        %494 = vdwg.mxu0
        %v495 = vtanh.pop %v492
        %496 = vmatprep.subr.mxu0 0.0
        %497 = vmatpush1.msra.mxu0 %v416
        %498 = vmatprep.subr.mxu0 0.0
        %499 = vmatpush1.msra.mxu0 %v415
        %500 = vmatprep.subr.mxu0 0.0
        %501 = vmatpush1.msra.mxu0 %v414
        %502 = vmatprep.subr.mxu0 0.0
        %503 = vmatpush1.msra.mxu0 %v413
        %504 = vmatprep.subr.mxu0 0.0
        %505 = vmatpush1.msra.mxu0 %v412
        %506 = vmatprep.subr.mxu0 0.0
        %507 = vmatpush1.msra.mxu0 %v411
        %508 = vmatprep.subr.mxu0 0.0
        %509 = vmatpush1.msra.mxu0 %v410
        %510 = vmatprep.subr.mxu0 0.0
        %511 = vmatpush1.msra.mxu0 %v409
        %512 = vmatprep.subr.mxu0 0.0
        %513 = vmatpush1.msra.mxu0 %v408
        %514 = vmatprep.subr.mxu0 0.0
        %515 = vmatpush1.msra.mxu0 %v407
        %516 = vmatprep.subr.mxu0 0.0
        %517 = vmatpush1.msra.mxu0 %v406
        %518 = vmatprep.subr.mxu0 0.0
        %519 = vmatpush1.msra.mxu0 %v405
        %520 = vmatprep.subr.mxu0 0.0
        %521 = vmatpush1.msra.mxu0 %v404
        %522 = vmatprep.subr.mxu0 0.0
        %523 = vmatpush1.msra.mxu0 %v403
        %524 = vmatprep.subr.mxu0 0.0
        %525 = vmatpush1.msra.mxu0 %v402
        %526 = vmatprep.subr.mxu0 0.0
        %527 = vmatpush1.msra.mxu0 %v401
        %528 = vmatprep.subr.mxu0 0.0
        %529 = vmatpush2.msra.mxu0 0.0
        %530 = vmatprep.subr.mxu0 0.0
        %531 = vmatpush2.msra.mxu0 0.0
        %532 = vmatprep.subr.mxu0 0.0
        %533 = vmatpush2.msra.mxu0 0.0
        %534 = vmatprep.subr.mxu0 0.0
        %535 = vmatpush2.msra.mxu0 0.0
        %536 = vmatprep.subr.mxu0 0.0
        %537 = vmatpush2.msra.mxu0 0.0
        %538 = vmatprep.subr.mxu0 0.0
        %539 = vmatpush2.msra.mxu0 0.0
        %540 = vmatprep.subr.mxu0 0.0
        %541 = vmatpush2.msra.mxu0 0.0
        %542 = vmatprep.subr.mxu0 0.0
        %543 = vmatpush2.msra.mxu0 0.0
        %544 = vmatprep.subr.mxu0 0.0
        %545 = vmatpush2.msra.mxu0 0.0
        %546 = vmatprep.subr.mxu0 0.0
        %547 = vmatpush2.msra.mxu0 0.0
        %548 = vmatprep.subr.mxu0 0.0
        %549 = vmatpush2.msra.mxu0 0.0
        %550 = vmatprep.subr.mxu0 0.0
        %551 = vmatpush2.msra.mxu0 0.0
        %552 = vmatprep.subr.mxu0 0.0
        %553 = vmatpush2.msra.mxu0 0.0
        %554 = vmatprep.subr.mxu0 0.0
        %555 = vmatpush2.msra.mxu0 0.0
        %556 = vmatprep.subr.mxu0 0.0
        %557 = vmatpush2.msra.mxu0 0.0
        %558 = vmatprep.subr.mxu0 0.0
        %559 = vmatpush2.msra.mxu0 0.0
        %560 = vmatprep.mubr.f32.mxu0 0.0
        %561 = vmatmul.mubr.f32.gmra.mxu0 %v495
        %v562 = vpop.f32.mrf.mxu0
        %v563 = vadd.f32 0.0, %v562
        %v564 = vpop.f32.mrf.mxu0
        %565 = vdwg.mxu0
        %v566 = vsub.f32 %v351, %v563
        %v568 = vlaneseq
        %v569 = vshrl.u32 %v568, 7
        %v570 = vsub.s32 0, %v569
        %v571 = vrot.slane %v418, %v570
        %573 = vmatprep.subr.mxu0 0.0
        %574 = vmatpush1.msra.mxu0 %v368
        %575 = vmatprep.subr.mxu0 0.0
        %576 = vmatpush1.msra.mxu0 %v367
        %577 = vmatprep.subr.mxu0 0.0
        %578 = vmatpush1.msra.mxu0 %v366
        %579 = vmatprep.subr.mxu0 0.0
        %580 = vmatpush1.msra.mxu0 %v365
        %581 = vmatprep.subr.mxu0 0.0
        %582 = vmatpush1.msra.mxu0 %v364
        %583 = vmatprep.subr.mxu0 0.0
        %584 = vmatpush1.msra.mxu0 %v363
        %585 = vmatprep.subr.mxu0 0.0
        %586 = vmatpush1.msra.mxu0 %v362
        %587 = vmatprep.subr.mxu0 0.0
        %588 = vmatpush1.msra.mxu0 %v361
        %589 = vmatprep.subr.mxu0 0.0
        %590 = vmatpush1.msra.mxu0 %v360
        %591 = vmatprep.subr.mxu0 0.0
        %592 = vmatpush1.msra.mxu0 %v359
        %593 = vmatprep.subr.mxu0 0.0
        %594 = vmatpush1.msra.mxu0 %v358
        %595 = vmatprep.subr.mxu0 0.0
        %596 = vmatpush1.msra.mxu0 %v357
        %597 = vmatprep.subr.mxu0 0.0
        %598 = vmatpush1.msra.mxu0 %v356
        %599 = vmatprep.subr.mxu0 0.0
        %600 = vmatpush1.msra.mxu0 %v355
        %601 = vmatprep.subr.mxu0 0.0
        %602 = vmatpush1.msra.mxu0 %v354
        %603 = vmatprep.subr.mxu0 0.0
        %604 = vmatpush1.msra.mxu0 %v353
        %605 = vmatprep.subr.mxu0 0.0
        %606 = vmatpush2.msra.mxu0 0.0
        %607 = vmatprep.subr.mxu0 0.0
        %608 = vmatpush2.msra.mxu0 0.0
        %609 = vmatprep.subr.mxu0 0.0
        %610 = vmatpush2.msra.mxu0 0.0
        %611 = vmatprep.subr.mxu0 0.0
        %612 = vmatpush2.msra.mxu0 0.0
        %613 = vmatprep.subr.mxu0 0.0
        %614 = vmatpush2.msra.mxu0 0.0
        %615 = vmatprep.subr.mxu0 0.0
        %616 = vmatpush2.msra.mxu0 0.0
        %617 = vmatprep.subr.mxu0 0.0
        %618 = vmatpush2.msra.mxu0 0.0
        %619 = vmatprep.subr.mxu0 0.0
        %620 = vmatpush2.msra.mxu0 0.0
        %621 = vmatprep.subr.mxu0 0.0
        %622 = vmatpush2.msra.mxu0 0.0
        %623 = vmatprep.subr.mxu0 0.0
        %624 = vmatpush2.msra.mxu0 0.0
        %625 = vmatprep.subr.mxu0 0.0
        %626 = vmatpush2.msra.mxu0 0.0
        %627 = vmatprep.subr.mxu0 0.0
        %628 = vmatpush2.msra.mxu0 0.0
        %629 = vmatprep.subr.mxu0 0.0
        %630 = vmatpush2.msra.mxu0 0.0
        %631 = vmatprep.subr.mxu0 0.0
        %632 = vmatpush2.msra.mxu0 0.0
        %633 = vmatprep.subr.mxu0 0.0
        %634 = vmatpush2.msra.mxu0 0.0
        %635 = vmatprep.subr.mxu0 0.0
        %636 = vmatpush2.msra.mxu0 0.0
        %637 = vmatprep.mubr.f32.mxu0 0.0
        %638 = vmatmul.mubr.f32.gmra.mxu0 %v566
        %v639 = vpop.f32.mrf.mxu0
        %v640 = vadd.f32 %v571, %v639
        %v641 = vpop.f32.mrf.mxu0
        %642 = vdwg.mxu0
        %v643 = vtanh.pop %v640
        %644 = vmatprep.subr.mxu0 0.0
        %645 = vmatpush1.msra.mxu0 %v400
        %646 = vmatprep.subr.mxu0 0.0
        %647 = vmatpush1.msra.mxu0 %v399
        %648 = vmatprep.subr.mxu0 0.0
        %649 = vmatpush1.msra.mxu0 %v398
        %650 = vmatprep.subr.mxu0 0.0
        %651 = vmatpush1.msra.mxu0 %v397
        %652 = vmatprep.subr.mxu0 0.0
        %653 = vmatpush1.msra.mxu0 %v396
        %654 = vmatprep.subr.mxu0 0.0
        %655 = vmatpush1.msra.mxu0 %v395
        %656 = vmatprep.subr.mxu0 0.0
        %657 = vmatpush1.msra.mxu0 %v394
        %658 = vmatprep.subr.mxu0 0.0
        %659 = vmatpush1.msra.mxu0 %v393
        %660 = vmatprep.subr.mxu0 0.0
        %661 = vmatpush1.msra.mxu0 %v392
        %662 = vmatprep.subr.mxu0 0.0
        %663 = vmatpush1.msra.mxu0 %v391
        %664 = vmatprep.subr.mxu0 0.0
        %665 = vmatpush1.msra.mxu0 %v390
        %666 = vmatprep.subr.mxu0 0.0
        %667 = vmatpush1.msra.mxu0 %v389
        %668 = vmatprep.subr.mxu0 0.0
        %669 = vmatpush1.msra.mxu0 %v388
        %670 = vmatprep.subr.mxu0 0.0
        %671 = vmatpush1.msra.mxu0 %v387
        %672 = vmatprep.subr.mxu0 0.0
        %673 = vmatpush1.msra.mxu0 %v386
        %674 = vmatprep.subr.mxu0 0.0
        %675 = vmatpush1.msra.mxu0 %v385
        %676 = vmatprep.subr.mxu0 0.0
        %677 = vmatpush2.msra.mxu0 0.0
        %678 = vmatprep.subr.mxu0 0.0
        %679 = vmatpush2.msra.mxu0 0.0
        %680 = vmatprep.subr.mxu0 0.0
        %681 = vmatpush2.msra.mxu0 0.0
        %682 = vmatprep.subr.mxu0 0.0
        %683 = vmatpush2.msra.mxu0 0.0
        %684 = vmatprep.subr.mxu0 0.0
        %685 = vmatpush2.msra.mxu0 0.0
        %686 = vmatprep.subr.mxu0 0.0
        %687 = vmatpush2.msra.mxu0 0.0
        %688 = vmatprep.subr.mxu0 0.0
        %689 = vmatpush2.msra.mxu0 0.0
        %690 = vmatprep.subr.mxu0 0.0
        %691 = vmatpush2.msra.mxu0 0.0
        %692 = vmatprep.subr.mxu0 0.0
        %693 = vmatpush2.msra.mxu0 0.0
        %694 = vmatprep.subr.mxu0 0.0
        %695 = vmatpush2.msra.mxu0 0.0
        %696 = vmatprep.subr.mxu0 0.0
        %697 = vmatpush2.msra.mxu0 0.0
        %698 = vmatprep.subr.mxu0 0.0
        %699 = vmatpush2.msra.mxu0 0.0
        %700 = vmatprep.subr.mxu0 0.0
        %701 = vmatpush2.msra.mxu0 0.0
        %702 = vmatprep.subr.mxu0 0.0
        %703 = vmatpush2.msra.mxu0 0.0
        %704 = vmatprep.subr.mxu0 0.0
        %705 = vmatpush2.msra.mxu0 0.0
        %706 = vmatprep.subr.mxu0 0.0
        %707 = vmatpush2.msra.mxu0 0.0
        %708 = vmatprep.mubr.f32.mxu0 0.0
        %709 = vmatmul.mubr.f32.gmra.mxu0 %v643
        %v710 = vpop.f32.mrf.mxu0
        %v711 = vadd.f32 0.0, %v710
        %v712 = vpop.f32.mrf.mxu0
        %713 = vdwg.mxu0
        %v714 = vadd.f32 %v352, %v711
        %s715 = scalar_lea.vmem [#allocation2], 128
        %v716 = vld [vmem:[%s715] sm:$0xff]
        %v717 = vld [vmem:[%s715 + $0x8] sm:$0xff]
        %v718 = vld [vmem:[%s715 + $0x10] sm:$0xff]
        %v719 = vld [vmem:[%s715 + $0x18] sm:$0xff]
        %v720 = vld [vmem:[%s715 + $0x20] sm:$0xff]
        %v721 = vld [vmem:[%s715 + $0x28] sm:$0xff]
        %v722 = vld [vmem:[%s715 + $0x30] sm:$0xff]
        %v723 = vld [vmem:[%s715 + $0x38] sm:$0xff]
        %v724 = vld [vmem:[%s715 + $0x40] sm:$0xff]
        %v725 = vld [vmem:[%s715 + $0x48] sm:$0xff]
        %v726 = vld [vmem:[%s715 + $0x50] sm:$0xff]
        %v727 = vld [vmem:[%s715 + $0x58] sm:$0xff]
        %v728 = vld [vmem:[%s715 + $0x60] sm:$0xff]
        %v729 = vld [vmem:[%s715 + $0x68] sm:$0xff]
        %v730 = vld [vmem:[%s715 + $0x70] sm:$0xff]
        %v731 = vld [vmem:[%s715 + $0x78] sm:$0xff]
        %s732 = scalar_lea.vmem [#allocation5], 128
        %v733 = vld [vmem:[%s732] sm:$0xff]
        %v734 = vld [vmem:[%s732 + $0x8] sm:$0xff]
        %v735 = vld [vmem:[%s732 + $0x10] sm:$0xff]
        %v736 = vld [vmem:[%s732 + $0x18] sm:$0xff]
        %v737 = vld [vmem:[%s732 + $0x20] sm:$0xff]
        %v738 = vld [vmem:[%s732 + $0x28] sm:$0xff]
        %v739 = vld [vmem:[%s732 + $0x30] sm:$0xff]
        %v740 = vld [vmem:[%s732 + $0x38] sm:$0xff]
        %v741 = vld [vmem:[%s732 + $0x40] sm:$0xff]
        %v742 = vld [vmem:[%s732 + $0x48] sm:$0xff]
        %v743 = vld [vmem:[%s732 + $0x50] sm:$0xff]
        %v744 = vld [vmem:[%s732 + $0x58] sm:$0xff]
        %v745 = vld [vmem:[%s732 + $0x60] sm:$0xff]
        %v746 = vld [vmem:[%s732 + $0x68] sm:$0xff]
        %v747 = vld [vmem:[%s732 + $0x70] sm:$0xff]
        %v748 = vld [vmem:[%s732 + $0x78] sm:$0xff]
        %s749 = scalar_lea.vmem [#allocation7], 128
        %v750 = vld [vmem:[%s749] sm:$0xff]
        %v751 = vld [vmem:[%s749 + $0x8] sm:$0xff]
        %v752 = vld [vmem:[%s749 + $0x10] sm:$0xff]
        %v753 = vld [vmem:[%s749 + $0x18] sm:$0xff]
        %v754 = vld [vmem:[%s749 + $0x20] sm:$0xff]
        %v755 = vld [vmem:[%s749 + $0x28] sm:$0xff]
        %v756 = vld [vmem:[%s749 + $0x30] sm:$0xff]
        %v757 = vld [vmem:[%s749 + $0x38] sm:$0xff]
        %v758 = vld [vmem:[%s749 + $0x40] sm:$0xff]
        %v759 = vld [vmem:[%s749 + $0x48] sm:$0xff]
        %v760 = vld [vmem:[%s749 + $0x50] sm:$0xff]
        %v761 = vld [vmem:[%s749 + $0x58] sm:$0xff]
        %v762 = vld [vmem:[%s749 + $0x60] sm:$0xff]
        %v763 = vld [vmem:[%s749 + $0x68] sm:$0xff]
        %v764 = vld [vmem:[%s749 + $0x70] sm:$0xff]
        %v765 = vld [vmem:[%s749 + $0x78] sm:$0xff]
        %s766 = scalar_lea.vmem [#allocation8], 128
        %v767 = vld [vmem:[%s766] sm:$0xff]
        %v768 = vld [vmem:[%s766 + $0x8] sm:$0xff]
        %v769 = vld [vmem:[%s766 + $0x10] sm:$0xff]
        %v770 = vld [vmem:[%s766 + $0x18] sm:$0xff]
        %v771 = vld [vmem:[%s766 + $0x20] sm:$0xff]
        %v772 = vld [vmem:[%s766 + $0x28] sm:$0xff]
        %v773 = vld [vmem:[%s766 + $0x30] sm:$0xff]
        %v774 = vld [vmem:[%s766 + $0x38] sm:$0xff]
        %v775 = vld [vmem:[%s766 + $0x40] sm:$0xff]
        %v776 = vld [vmem:[%s766 + $0x48] sm:$0xff]
        %v777 = vld [vmem:[%s766 + $0x50] sm:$0xff]
        %v778 = vld [vmem:[%s766 + $0x58] sm:$0xff]
        %v779 = vld [vmem:[%s766 + $0x60] sm:$0xff]
        %v780 = vld [vmem:[%s766 + $0x68] sm:$0xff]
        %v781 = vld [vmem:[%s766 + $0x70] sm:$0xff]
        %v782 = vld [vmem:[%s766 + $0x78] sm:$0xff]
        %s783 = scalar_lea.vmem %s4, 1
        %v784 = vld [vmem:[%s783] sm:$0x1]
        %s785 = scalar_lea.vmem %s5, 1
        %v786 = vld [vmem:[%s785] sm:$0x1]
        %v788 = vlaneseq
        %v789 = vshrl.u32 %v788, 7
        %v790 = vsub.s32 0, %v789
        %v791 = vrot.slane %v784, %v790
        %793 = vmatprep.subr.mxu0 0.0
        %794 = vmatpush1.msra.mxu0 %v748
        %795 = vmatprep.subr.mxu0 0.0
        %796 = vmatpush1.msra.mxu0 %v747
        %797 = vmatprep.subr.mxu0 0.0
        %798 = vmatpush1.msra.mxu0 %v746
        %799 = vmatprep.subr.mxu0 0.0
        %800 = vmatpush1.msra.mxu0 %v745
        %801 = vmatprep.subr.mxu0 0.0
        %802 = vmatpush1.msra.mxu0 %v744
        %803 = vmatprep.subr.mxu0 0.0
        %804 = vmatpush1.msra.mxu0 %v743
        %805 = vmatprep.subr.mxu0 0.0
        %806 = vmatpush1.msra.mxu0 %v742
        %807 = vmatprep.subr.mxu0 0.0
        %808 = vmatpush1.msra.mxu0 %v741
        %809 = vmatprep.subr.mxu0 0.0
        %810 = vmatpush1.msra.mxu0 %v740
        %811 = vmatprep.subr.mxu0 0.0
        %812 = vmatpush1.msra.mxu0 %v739
        %813 = vmatprep.subr.mxu0 0.0
        %814 = vmatpush1.msra.mxu0 %v738
        %815 = vmatprep.subr.mxu0 0.0
        %816 = vmatpush1.msra.mxu0 %v737
        %817 = vmatprep.subr.mxu0 0.0
        %818 = vmatpush1.msra.mxu0 %v736
        %819 = vmatprep.subr.mxu0 0.0
        %820 = vmatpush1.msra.mxu0 %v735
        %821 = vmatprep.subr.mxu0 0.0
        %822 = vmatpush1.msra.mxu0 %v734
        %823 = vmatprep.subr.mxu0 0.0
        %824 = vmatpush1.msra.mxu0 %v733
        %825 = vmatprep.subr.mxu0 0.0
        %826 = vmatpush2.msra.mxu0 0.0
        %827 = vmatprep.subr.mxu0 0.0
        %828 = vmatpush2.msra.mxu0 0.0
        %829 = vmatprep.subr.mxu0 0.0
        %830 = vmatpush2.msra.mxu0 0.0
        %831 = vmatprep.subr.mxu0 0.0
        %832 = vmatpush2.msra.mxu0 0.0
        %833 = vmatprep.subr.mxu0 0.0
        %834 = vmatpush2.msra.mxu0 0.0
        %835 = vmatprep.subr.mxu0 0.0
        %836 = vmatpush2.msra.mxu0 0.0
        %837 = vmatprep.subr.mxu0 0.0
        %838 = vmatpush2.msra.mxu0 0.0
        %839 = vmatprep.subr.mxu0 0.0
        %840 = vmatpush2.msra.mxu0 0.0
        %841 = vmatprep.subr.mxu0 0.0
        %842 = vmatpush2.msra.mxu0 0.0
        %843 = vmatprep.subr.mxu0 0.0
        %844 = vmatpush2.msra.mxu0 0.0
        %845 = vmatprep.subr.mxu0 0.0
        %846 = vmatpush2.msra.mxu0 0.0
        %847 = vmatprep.subr.mxu0 0.0
        %848 = vmatpush2.msra.mxu0 0.0
        %849 = vmatprep.subr.mxu0 0.0
        %850 = vmatpush2.msra.mxu0 0.0
        %851 = vmatprep.subr.mxu0 0.0
        %852 = vmatpush2.msra.mxu0 0.0
        %853 = vmatprep.subr.mxu0 0.0
        %854 = vmatpush2.msra.mxu0 0.0
        %855 = vmatprep.subr.mxu0 0.0
        %856 = vmatpush2.msra.mxu0 0.0
        %857 = vmatprep.mubr.f32.mxu0 0.0
        %858 = vmatmul.mubr.f32.gmra.mxu0 %v714
        %v859 = vpop.f32.mrf.mxu0
        %v860 = vadd.f32 %v791, %v859
        %v861 = vpop.f32.mrf.mxu0
        %862 = vdwg.mxu0
        %v863 = vtanh.pop %v860
        %864 = vmatprep.subr.mxu0 0.0
        %865 = vmatpush1.msra.mxu0 %v782
        %866 = vmatprep.subr.mxu0 0.0
        %867 = vmatpush1.msra.mxu0 %v781
        %868 = vmatprep.subr.mxu0 0.0
        %869 = vmatpush1.msra.mxu0 %v780
        %870 = vmatprep.subr.mxu0 0.0
        %871 = vmatpush1.msra.mxu0 %v779
        %872 = vmatprep.subr.mxu0 0.0
        %873 = vmatpush1.msra.mxu0 %v778
        %874 = vmatprep.subr.mxu0 0.0
        %875 = vmatpush1.msra.mxu0 %v777
        %876 = vmatprep.subr.mxu0 0.0
        %877 = vmatpush1.msra.mxu0 %v776
        %878 = vmatprep.subr.mxu0 0.0
        %879 = vmatpush1.msra.mxu0 %v775
        %880 = vmatprep.subr.mxu0 0.0
        %881 = vmatpush1.msra.mxu0 %v774
        %882 = vmatprep.subr.mxu0 0.0
        %883 = vmatpush1.msra.mxu0 %v773
        %884 = vmatprep.subr.mxu0 0.0
        %885 = vmatpush1.msra.mxu0 %v772
        %886 = vmatprep.subr.mxu0 0.0
        %887 = vmatpush1.msra.mxu0 %v771
        %888 = vmatprep.subr.mxu0 0.0
        %889 = vmatpush1.msra.mxu0 %v770
        %890 = vmatprep.subr.mxu0 0.0
        %891 = vmatpush1.msra.mxu0 %v769
        %892 = vmatprep.subr.mxu0 0.0
        %893 = vmatpush1.msra.mxu0 %v768
        %894 = vmatprep.subr.mxu0 0.0
        %895 = vmatpush1.msra.mxu0 %v767
        %896 = vmatprep.subr.mxu0 0.0
        %897 = vmatpush2.msra.mxu0 0.0
        %898 = vmatprep.subr.mxu0 0.0
        %899 = vmatpush2.msra.mxu0 0.0
        %900 = vmatprep.subr.mxu0 0.0
        %901 = vmatpush2.msra.mxu0 0.0
        %902 = vmatprep.subr.mxu0 0.0
        %903 = vmatpush2.msra.mxu0 0.0
        %904 = vmatprep.subr.mxu0 0.0
        %905 = vmatpush2.msra.mxu0 0.0
        %906 = vmatprep.subr.mxu0 0.0
        %907 = vmatpush2.msra.mxu0 0.0
        %908 = vmatprep.subr.mxu0 0.0
        %909 = vmatpush2.msra.mxu0 0.0
        %910 = vmatprep.subr.mxu0 0.0
        %911 = vmatpush2.msra.mxu0 0.0
        %912 = vmatprep.subr.mxu0 0.0
        %913 = vmatpush2.msra.mxu0 0.0
        %914 = vmatprep.subr.mxu0 0.0
        %915 = vmatpush2.msra.mxu0 0.0
        %916 = vmatprep.subr.mxu0 0.0
        %917 = vmatpush2.msra.mxu0 0.0
        %918 = vmatprep.subr.mxu0 0.0
        %919 = vmatpush2.msra.mxu0 0.0
        %920 = vmatprep.subr.mxu0 0.0
        %921 = vmatpush2.msra.mxu0 0.0
        %922 = vmatprep.subr.mxu0 0.0
        %923 = vmatpush2.msra.mxu0 0.0
        %924 = vmatprep.subr.mxu0 0.0
        %925 = vmatpush2.msra.mxu0 0.0
        %926 = vmatprep.subr.mxu0 0.0
        %927 = vmatpush2.msra.mxu0 0.0
        %928 = vmatprep.mubr.f32.mxu0 0.0
        %929 = vmatmul.mubr.f32.gmra.mxu0 %v863
        %v930 = vpop.f32.mrf.mxu0
        %v931 = vadd.f32 0.0, %v930
        %v932 = vpop.f32.mrf.mxu0
        %933 = vdwg.mxu0
        %v934 = vsub.f32 %v566, %v931
        %v936 = vlaneseq
        %v937 = vshrl.u32 %v936, 7
        %v938 = vsub.s32 0, %v937
        %v939 = vrot.slane %v786, %v938
        %941 = vmatprep.subr.mxu0 0.0
        %942 = vmatpush1.msra.mxu0 %v731
        %943 = vmatprep.subr.mxu0 0.0
        %944 = vmatpush1.msra.mxu0 %v730
        %945 = vmatprep.subr.mxu0 0.0
        %946 = vmatpush1.msra.mxu0 %v729
        %947 = vmatprep.subr.mxu0 0.0
        %948 = vmatpush1.msra.mxu0 %v728
        %949 = vmatprep.subr.mxu0 0.0
        %950 = vmatpush1.msra.mxu0 %v727
        %951 = vmatprep.subr.mxu0 0.0
        %952 = vmatpush1.msra.mxu0 %v726
        %953 = vmatprep.subr.mxu0 0.0
        %954 = vmatpush1.msra.mxu0 %v725
        %955 = vmatprep.subr.mxu0 0.0
        %956 = vmatpush1.msra.mxu0 %v724
        %957 = vmatprep.subr.mxu0 0.0
        %958 = vmatpush1.msra.mxu0 %v723
        %959 = vmatprep.subr.mxu0 0.0
        %960 = vmatpush1.msra.mxu0 %v722
        %961 = vmatprep.subr.mxu0 0.0
        %962 = vmatpush1.msra.mxu0 %v721
        %963 = vmatprep.subr.mxu0 0.0
        %964 = vmatpush1.msra.mxu0 %v720
        %965 = vmatprep.subr.mxu0 0.0
        %966 = vmatpush1.msra.mxu0 %v719
        %967 = vmatprep.subr.mxu0 0.0
        %968 = vmatpush1.msra.mxu0 %v718
        %969 = vmatprep.subr.mxu0 0.0
        %970 = vmatpush1.msra.mxu0 %v717
        %971 = vmatprep.subr.mxu0 0.0
        %972 = vmatpush1.msra.mxu0 %v716
        %973 = vmatprep.subr.mxu0 0.0
        %974 = vmatpush2.msra.mxu0 0.0
        %975 = vmatprep.subr.mxu0 0.0
        %976 = vmatpush2.msra.mxu0 0.0
        %977 = vmatprep.subr.mxu0 0.0
        %978 = vmatpush2.msra.mxu0 0.0
        %979 = vmatprep.subr.mxu0 0.0
        %980 = vmatpush2.msra.mxu0 0.0
        %981 = vmatprep.subr.mxu0 0.0
        %982 = vmatpush2.msra.mxu0 0.0
        %983 = vmatprep.subr.mxu0 0.0
        %984 = vmatpush2.msra.mxu0 0.0
        %985 = vmatprep.subr.mxu0 0.0
        %986 = vmatpush2.msra.mxu0 0.0
        %987 = vmatprep.subr.mxu0 0.0
        %988 = vmatpush2.msra.mxu0 0.0
        %989 = vmatprep.subr.mxu0 0.0
        %990 = vmatpush2.msra.mxu0 0.0
        %991 = vmatprep.subr.mxu0 0.0
        %992 = vmatpush2.msra.mxu0 0.0
        %993 = vmatprep.subr.mxu0 0.0
        %994 = vmatpush2.msra.mxu0 0.0
        %995 = vmatprep.subr.mxu0 0.0
        %996 = vmatpush2.msra.mxu0 0.0
        %997 = vmatprep.subr.mxu0 0.0
        %998 = vmatpush2.msra.mxu0 0.0
        %999 = vmatprep.subr.mxu0 0.0
        %1000 = vmatpush2.msra.mxu0 0.0
        %1001 = vmatprep.subr.mxu0 0.0
        %1002 = vmatpush2.msra.mxu0 0.0
        %1003 = vmatprep.subr.mxu0 0.0
        %1004 = vmatpush2.msra.mxu0 0.0
        %1005 = vmatprep.mubr.f32.mxu0 0.0
        %1006 = vmatmul.mubr.f32.gmra.mxu0 %v934
        %v1007 = vpop.f32.mrf.mxu0
        %v1008 = vadd.f32 %v939, %v1007
        %v1009 = vpop.f32.mrf.mxu0
        %1010 = vdwg.mxu0
        %v1011 = vtanh.pop %v1008
        %1012 = vmatprep.subr.mxu0 0.0
        %1013 = vmatpush1.msra.mxu0 %v765
        %1014 = vmatprep.subr.mxu0 0.0
        %1015 = vmatpush1.msra.mxu0 %v764
        %1016 = vmatprep.subr.mxu0 0.0
        %1017 = vmatpush1.msra.mxu0 %v763
        %1018 = vmatprep.subr.mxu0 0.0
        %1019 = vmatpush1.msra.mxu0 %v762
        %1020 = vmatprep.subr.mxu0 0.0
        %1021 = vmatpush1.msra.mxu0 %v761
        %1022 = vmatprep.subr.mxu0 0.0
        %1023 = vmatpush1.msra.mxu0 %v760
        %1024 = vmatprep.subr.mxu0 0.0
        %1025 = vmatpush1.msra.mxu0 %v759
        %1026 = vmatprep.subr.mxu0 0.0
        %1027 = vmatpush1.msra.mxu0 %v758
        %1028 = vmatprep.subr.mxu0 0.0
        %1029 = vmatpush1.msra.mxu0 %v757
        %1030 = vmatprep.subr.mxu0 0.0
        %1031 = vmatpush1.msra.mxu0 %v756
        %1032 = vmatprep.subr.mxu0 0.0
        %1033 = vmatpush1.msra.mxu0 %v755
        %1034 = vmatprep.subr.mxu0 0.0
        %1035 = vmatpush1.msra.mxu0 %v754
        %1036 = vmatprep.subr.mxu0 0.0
        %1037 = vmatpush1.msra.mxu0 %v753
        %1038 = vmatprep.subr.mxu0 0.0
        %1039 = vmatpush1.msra.mxu0 %v752
        %1040 = vmatprep.subr.mxu0 0.0
        %1041 = vmatpush1.msra.mxu0 %v751
        %1042 = vmatprep.subr.mxu0 0.0
        %1043 = vmatpush1.msra.mxu0 %v750
        %1044 = vmatprep.subr.mxu0 0.0
        %1045 = vmatpush2.msra.mxu0 0.0
        %1046 = vmatprep.subr.mxu0 0.0
        %1047 = vmatpush2.msra.mxu0 0.0
        %1048 = vmatprep.subr.mxu0 0.0
        %1049 = vmatpush2.msra.mxu0 0.0
        %1050 = vmatprep.subr.mxu0 0.0
        %1051 = vmatpush2.msra.mxu0 0.0
        %1052 = vmatprep.subr.mxu0 0.0
        %1053 = vmatpush2.msra.mxu0 0.0
        %1054 = vmatprep.subr.mxu0 0.0
        %1055 = vmatpush2.msra.mxu0 0.0
        %1056 = vmatprep.subr.mxu0 0.0
        %1057 = vmatpush2.msra.mxu0 0.0
        %1058 = vmatprep.subr.mxu0 0.0
        %1059 = vmatpush2.msra.mxu0 0.0
        %1060 = vmatprep.subr.mxu0 0.0
        %1061 = vmatpush2.msra.mxu0 0.0
        %1062 = vmatprep.subr.mxu0 0.0
        %1063 = vmatpush2.msra.mxu0 0.0
        %1064 = vmatprep.subr.mxu0 0.0
        %1065 = vmatpush2.msra.mxu0 0.0
        %1066 = vmatprep.subr.mxu0 0.0
        %1067 = vmatpush2.msra.mxu0 0.0
        %1068 = vmatprep.subr.mxu0 0.0
        %1069 = vmatpush2.msra.mxu0 0.0
        %1070 = vmatprep.subr.mxu0 0.0
        %1071 = vmatpush2.msra.mxu0 0.0
        %1072 = vmatprep.subr.mxu0 0.0
        %1073 = vmatpush2.msra.mxu0 0.0
        %1074 = vmatprep.subr.mxu0 0.0
        %1075 = vmatpush2.msra.mxu0 0.0
        %1076 = vmatprep.mubr.f32.mxu0 0.0
        %1077 = vmatmul.mubr.f32.gmra.mxu0 %v1011
        %v1078 = vpop.f32.mrf.mxu0
        %v1079 = vadd.f32 0.0, %v1078
        %v1080 = vpop.f32.mrf.mxu0
        %1081 = vdwg.mxu0
        %v1082 = vadd.f32 %v714, %v1079
        %s1083 = scalar_lea.vmem [#allocation2], 256
        %v1084 = vld [vmem:[%s1083] sm:$0xff]
        %v1085 = vld [vmem:[%s1083 + $0x8] sm:$0xff]
        %v1086 = vld [vmem:[%s1083 + $0x10] sm:$0xff]
        %v1087 = vld [vmem:[%s1083 + $0x18] sm:$0xff]
        %v1088 = vld [vmem:[%s1083 + $0x20] sm:$0xff]
        %v1089 = vld [vmem:[%s1083 + $0x28] sm:$0xff]
        %v1090 = vld [vmem:[%s1083 + $0x30] sm:$0xff]
        %v1091 = vld [vmem:[%s1083 + $0x38] sm:$0xff]
        %v1092 = vld [vmem:[%s1083 + $0x40] sm:$0xff]
        %v1093 = vld [vmem:[%s1083 + $0x48] sm:$0xff]
        %v1094 = vld [vmem:[%s1083 + $0x50] sm:$0xff]
        %v1095 = vld [vmem:[%s1083 + $0x58] sm:$0xff]
        %v1096 = vld [vmem:[%s1083 + $0x60] sm:$0xff]
        %v1097 = vld [vmem:[%s1083 + $0x68] sm:$0xff]
        %v1098 = vld [vmem:[%s1083 + $0x70] sm:$0xff]
        %v1099 = vld [vmem:[%s1083 + $0x78] sm:$0xff]
        %s1100 = scalar_lea.vmem [#allocation5], 256
        %v1101 = vld [vmem:[%s1100] sm:$0xff]
        %v1102 = vld [vmem:[%s1100 + $0x8] sm:$0xff]
        %v1103 = vld [vmem:[%s1100 + $0x10] sm:$0xff]
        %v1104 = vld [vmem:[%s1100 + $0x18] sm:$0xff]
        %v1105 = vld [vmem:[%s1100 + $0x20] sm:$0xff]
        %v1106 = vld [vmem:[%s1100 + $0x28] sm:$0xff]
        %v1107 = vld [vmem:[%s1100 + $0x30] sm:$0xff]
        %v1108 = vld [vmem:[%s1100 + $0x38] sm:$0xff]
        %v1109 = vld [vmem:[%s1100 + $0x40] sm:$0xff]
        %v1110 = vld [vmem:[%s1100 + $0x48] sm:$0xff]
        %v1111 = vld [vmem:[%s1100 + $0x50] sm:$0xff]
        %v1112 = vld [vmem:[%s1100 + $0x58] sm:$0xff]
        %v1113 = vld [vmem:[%s1100 + $0x60] sm:$0xff]
        %v1114 = vld [vmem:[%s1100 + $0x68] sm:$0xff]
        %v1115 = vld [vmem:[%s1100 + $0x70] sm:$0xff]
        %v1116 = vld [vmem:[%s1100 + $0x78] sm:$0xff]
        %s1117 = scalar_lea.vmem [#allocation7], 256
        %v1118 = vld [vmem:[%s1117] sm:$0xff]
        %v1119 = vld [vmem:[%s1117 + $0x8] sm:$0xff]
        %v1120 = vld [vmem:[%s1117 + $0x10] sm:$0xff]
        %v1121 = vld [vmem:[%s1117 + $0x18] sm:$0xff]
        %v1122 = vld [vmem:[%s1117 + $0x20] sm:$0xff]
        %v1123 = vld [vmem:[%s1117 + $0x28] sm:$0xff]
        %v1124 = vld [vmem:[%s1117 + $0x30] sm:$0xff]
        %v1125 = vld [vmem:[%s1117 + $0x38] sm:$0xff]
        %v1126 = vld [vmem:[%s1117 + $0x40] sm:$0xff]
        %v1127 = vld [vmem:[%s1117 + $0x48] sm:$0xff]
        %v1128 = vld [vmem:[%s1117 + $0x50] sm:$0xff]
        %v1129 = vld [vmem:[%s1117 + $0x58] sm:$0xff]
        %v1130 = vld [vmem:[%s1117 + $0x60] sm:$0xff]
        %v1131 = vld [vmem:[%s1117 + $0x68] sm:$0xff]
        %v1132 = vld [vmem:[%s1117 + $0x70] sm:$0xff]
        %v1133 = vld [vmem:[%s1117 + $0x78] sm:$0xff]
        %s1134 = scalar_lea.vmem [#allocation8], 256
        %v1135 = vld [vmem:[%s1134] sm:$0xff]
        %v1136 = vld [vmem:[%s1134 + $0x8] sm:$0xff]
        %v1137 = vld [vmem:[%s1134 + $0x10] sm:$0xff]
        %v1138 = vld [vmem:[%s1134 + $0x18] sm:$0xff]
        %v1139 = vld [vmem:[%s1134 + $0x20] sm:$0xff]
        %v1140 = vld [vmem:[%s1134 + $0x28] sm:$0xff]
        %v1141 = vld [vmem:[%s1134 + $0x30] sm:$0xff]
        %v1142 = vld [vmem:[%s1134 + $0x38] sm:$0xff]
        %v1143 = vld [vmem:[%s1134 + $0x40] sm:$0xff]
        %v1144 = vld [vmem:[%s1134 + $0x48] sm:$0xff]
        %v1145 = vld [vmem:[%s1134 + $0x50] sm:$0xff]
        %v1146 = vld [vmem:[%s1134 + $0x58] sm:$0xff]
        %v1147 = vld [vmem:[%s1134 + $0x60] sm:$0xff]
        %v1148 = vld [vmem:[%s1134 + $0x68] sm:$0xff]
        %v1149 = vld [vmem:[%s1134 + $0x70] sm:$0xff]
        %v1150 = vld [vmem:[%s1134 + $0x78] sm:$0xff]
        %s1151 = scalar_lea.vmem %s4, 2
        %v1152 = vld [vmem:[%s1151] sm:$0x1]
        %s1153 = scalar_lea.vmem %s5, 2
        %v1154 = vld [vmem:[%s1153] sm:$0x1]
        %v1156 = vlaneseq
        %v1157 = vshrl.u32 %v1156, 7
        %v1158 = vsub.s32 0, %v1157
        %v1159 = vrot.slane %v1152, %v1158
        %1161 = vmatprep.subr.mxu0 0.0
        %1162 = vmatpush1.msra.mxu0 %v1116
        %1163 = vmatprep.subr.mxu0 0.0
        %1164 = vmatpush1.msra.mxu0 %v1115
        %1165 = vmatprep.subr.mxu0 0.0
        %1166 = vmatpush1.msra.mxu0 %v1114
        %1167 = vmatprep.subr.mxu0 0.0
        %1168 = vmatpush1.msra.mxu0 %v1113
        %1169 = vmatprep.subr.mxu0 0.0
        %1170 = vmatpush1.msra.mxu0 %v1112
        %1171 = vmatprep.subr.mxu0 0.0
        %1172 = vmatpush1.msra.mxu0 %v1111
        %1173 = vmatprep.subr.mxu0 0.0
        %1174 = vmatpush1.msra.mxu0 %v1110
        %1175 = vmatprep.subr.mxu0 0.0
        %1176 = vmatpush1.msra.mxu0 %v1109
        %1177 = vmatprep.subr.mxu0 0.0
        %1178 = vmatpush1.msra.mxu0 %v1108
        %1179 = vmatprep.subr.mxu0 0.0
        %1180 = vmatpush1.msra.mxu0 %v1107
        %1181 = vmatprep.subr.mxu0 0.0
        %1182 = vmatpush1.msra.mxu0 %v1106
        %1183 = vmatprep.subr.mxu0 0.0
        %1184 = vmatpush1.msra.mxu0 %v1105
        %1185 = vmatprep.subr.mxu0 0.0
        %1186 = vmatpush1.msra.mxu0 %v1104
        %1187 = vmatprep.subr.mxu0 0.0
        %1188 = vmatpush1.msra.mxu0 %v1103
        %1189 = vmatprep.subr.mxu0 0.0
        %1190 = vmatpush1.msra.mxu0 %v1102
        %1191 = vmatprep.subr.mxu0 0.0
        %1192 = vmatpush1.msra.mxu0 %v1101
        %1193 = vmatprep.subr.mxu0 0.0
        %1194 = vmatpush2.msra.mxu0 0.0
        %1195 = vmatprep.subr.mxu0 0.0
        %1196 = vmatpush2.msra.mxu0 0.0
        %1197 = vmatprep.subr.mxu0 0.0
        %1198 = vmatpush2.msra.mxu0 0.0
        %1199 = vmatprep.subr.mxu0 0.0
        %1200 = vmatpush2.msra.mxu0 0.0
        %1201 = vmatprep.subr.mxu0 0.0
        %1202 = vmatpush2.msra.mxu0 0.0
        %1203 = vmatprep.subr.mxu0 0.0
        %1204 = vmatpush2.msra.mxu0 0.0
        %1205 = vmatprep.subr.mxu0 0.0
        %1206 = vmatpush2.msra.mxu0 0.0
        %1207 = vmatprep.subr.mxu0 0.0
        %1208 = vmatpush2.msra.mxu0 0.0
        %1209 = vmatprep.subr.mxu0 0.0
        %1210 = vmatpush2.msra.mxu0 0.0
        %1211 = vmatprep.subr.mxu0 0.0
        %1212 = vmatpush2.msra.mxu0 0.0
        %1213 = vmatprep.subr.mxu0 0.0
        %1214 = vmatpush2.msra.mxu0 0.0
        %1215 = vmatprep.subr.mxu0 0.0
        %1216 = vmatpush2.msra.mxu0 0.0
        %1217 = vmatprep.subr.mxu0 0.0
        %1218 = vmatpush2.msra.mxu0 0.0
        %1219 = vmatprep.subr.mxu0 0.0
        %1220 = vmatpush2.msra.mxu0 0.0
        %1221 = vmatprep.subr.mxu0 0.0
        %1222 = vmatpush2.msra.mxu0 0.0
        %1223 = vmatprep.subr.mxu0 0.0
        %1224 = vmatpush2.msra.mxu0 0.0
        %1225 = vmatprep.mubr.f32.mxu0 0.0
        %1226 = vmatmul.mubr.f32.gmra.mxu0 %v1082
        %v1227 = vpop.f32.mrf.mxu0
        %v1228 = vadd.f32 %v1159, %v1227
        %v1229 = vpop.f32.mrf.mxu0
        %1230 = vdwg.mxu0
        %v1231 = vtanh.pop %v1228
        %1232 = vmatprep.subr.mxu0 0.0
        %1233 = vmatpush1.msra.mxu0 %v1150
        %1234 = vmatprep.subr.mxu0 0.0
        %1235 = vmatpush1.msra.mxu0 %v1149
        %1236 = vmatprep.subr.mxu0 0.0
        %1237 = vmatpush1.msra.mxu0 %v1148
        %1238 = vmatprep.subr.mxu0 0.0
        %1239 = vmatpush1.msra.mxu0 %v1147
        %1240 = vmatprep.subr.mxu0 0.0
        %1241 = vmatpush1.msra.mxu0 %v1146
        %1242 = vmatprep.subr.mxu0 0.0
        %1243 = vmatpush1.msra.mxu0 %v1145
        %1244 = vmatprep.subr.mxu0 0.0
        %1245 = vmatpush1.msra.mxu0 %v1144
        %1246 = vmatprep.subr.mxu0 0.0
        %1247 = vmatpush1.msra.mxu0 %v1143
        %1248 = vmatprep.subr.mxu0 0.0
        %1249 = vmatpush1.msra.mxu0 %v1142
        %1250 = vmatprep.subr.mxu0 0.0
        %1251 = vmatpush1.msra.mxu0 %v1141
        %1252 = vmatprep.subr.mxu0 0.0
        %1253 = vmatpush1.msra.mxu0 %v1140
        %1254 = vmatprep.subr.mxu0 0.0
        %1255 = vmatpush1.msra.mxu0 %v1139
        %1256 = vmatprep.subr.mxu0 0.0
        %1257 = vmatpush1.msra.mxu0 %v1138
        %1258 = vmatprep.subr.mxu0 0.0
        %1259 = vmatpush1.msra.mxu0 %v1137
        %1260 = vmatprep.subr.mxu0 0.0
        %1261 = vmatpush1.msra.mxu0 %v1136
        %1262 = vmatprep.subr.mxu0 0.0
        %1263 = vmatpush1.msra.mxu0 %v1135
        %1264 = vmatprep.subr.mxu0 0.0
        %1265 = vmatpush2.msra.mxu0 0.0
        %1266 = vmatprep.subr.mxu0 0.0
        %1267 = vmatpush2.msra.mxu0 0.0
        %1268 = vmatprep.subr.mxu0 0.0
        %1269 = vmatpush2.msra.mxu0 0.0
        %1270 = vmatprep.subr.mxu0 0.0
        %1271 = vmatpush2.msra.mxu0 0.0
        %1272 = vmatprep.subr.mxu0 0.0
        %1273 = vmatpush2.msra.mxu0 0.0
        %1274 = vmatprep.subr.mxu0 0.0
        %1275 = vmatpush2.msra.mxu0 0.0
        %1276 = vmatprep.subr.mxu0 0.0
        %1277 = vmatpush2.msra.mxu0 0.0
        %1278 = vmatprep.subr.mxu0 0.0
        %1279 = vmatpush2.msra.mxu0 0.0
        %1280 = vmatprep.subr.mxu0 0.0
        %1281 = vmatpush2.msra.mxu0 0.0
        %1282 = vmatprep.subr.mxu0 0.0
        %1283 = vmatpush2.msra.mxu0 0.0
        %1284 = vmatprep.subr.mxu0 0.0
        %1285 = vmatpush2.msra.mxu0 0.0
        %1286 = vmatprep.subr.mxu0 0.0
        %1287 = vmatpush2.msra.mxu0 0.0
        %1288 = vmatprep.subr.mxu0 0.0
        %1289 = vmatpush2.msra.mxu0 0.0
        %1290 = vmatprep.subr.mxu0 0.0
        %1291 = vmatpush2.msra.mxu0 0.0
        %1292 = vmatprep.subr.mxu0 0.0
        %1293 = vmatpush2.msra.mxu0 0.0
        %1294 = vmatprep.subr.mxu0 0.0
        %1295 = vmatpush2.msra.mxu0 0.0
        %1296 = vmatprep.mubr.f32.mxu0 0.0
        %1297 = vmatmul.mubr.f32.gmra.mxu0 %v1231
        %v1298 = vpop.f32.mrf.mxu0
        %v1299 = vadd.f32 0.0, %v1298
        %v1300 = vpop.f32.mrf.mxu0
        %1301 = vdwg.mxu0
        %v1302 = vsub.f32 %v934, %v1299
        %v1304 = vlaneseq
        %v1305 = vshrl.u32 %v1304, 7
        %v1306 = vsub.s32 0, %v1305
        %v1307 = vrot.slane %v1154, %v1306
        %1309 = vmatprep.subr.mxu0 0.0
        %1310 = vmatpush1.msra.mxu0 %v1099
        %1311 = vmatprep.subr.mxu0 0.0
        %1312 = vmatpush1.msra.mxu0 %v1098
        %1313 = vmatprep.subr.mxu0 0.0
        %1314 = vmatpush1.msra.mxu0 %v1097
        %1315 = vmatprep.subr.mxu0 0.0
        %1316 = vmatpush1.msra.mxu0 %v1096
        %1317 = vmatprep.subr.mxu0 0.0
        %1318 = vmatpush1.msra.mxu0 %v1095
        %1319 = vmatprep.subr.mxu0 0.0
        %1320 = vmatpush1.msra.mxu0 %v1094
        %1321 = vmatprep.subr.mxu0 0.0
        %1322 = vmatpush1.msra.mxu0 %v1093
        %1323 = vmatprep.subr.mxu0 0.0
        %1324 = vmatpush1.msra.mxu0 %v1092
        %1325 = vmatprep.subr.mxu0 0.0
        %1326 = vmatpush1.msra.mxu0 %v1091
        %1327 = vmatprep.subr.mxu0 0.0
        %1328 = vmatpush1.msra.mxu0 %v1090
        %1329 = vmatprep.subr.mxu0 0.0
        %1330 = vmatpush1.msra.mxu0 %v1089
        %1331 = vmatprep.subr.mxu0 0.0
        %1332 = vmatpush1.msra.mxu0 %v1088
        %1333 = vmatprep.subr.mxu0 0.0
        %1334 = vmatpush1.msra.mxu0 %v1087
        %1335 = vmatprep.subr.mxu0 0.0
        %1336 = vmatpush1.msra.mxu0 %v1086
        %1337 = vmatprep.subr.mxu0 0.0
        %1338 = vmatpush1.msra.mxu0 %v1085
        %1339 = vmatprep.subr.mxu0 0.0
        %1340 = vmatpush1.msra.mxu0 %v1084
        %1341 = vmatprep.subr.mxu0 0.0
        %1342 = vmatpush2.msra.mxu0 0.0
        %1343 = vmatprep.subr.mxu0 0.0
        %1344 = vmatpush2.msra.mxu0 0.0
        %1345 = vmatprep.subr.mxu0 0.0
        %1346 = vmatpush2.msra.mxu0 0.0
        %1347 = vmatprep.subr.mxu0 0.0
        %1348 = vmatpush2.msra.mxu0 0.0
        %1349 = vmatprep.subr.mxu0 0.0
        %1350 = vmatpush2.msra.mxu0 0.0
        %1351 = vmatprep.subr.mxu0 0.0
        %1352 = vmatpush2.msra.mxu0 0.0
        %1353 = vmatprep.subr.mxu0 0.0
        %1354 = vmatpush2.msra.mxu0 0.0
        %1355 = vmatprep.subr.mxu0 0.0
        %1356 = vmatpush2.msra.mxu0 0.0
        %1357 = vmatprep.subr.mxu0 0.0
        %1358 = vmatpush2.msra.mxu0 0.0
        %1359 = vmatprep.subr.mxu0 0.0
        %1360 = vmatpush2.msra.mxu0 0.0
        %1361 = vmatprep.subr.mxu0 0.0
        %1362 = vmatpush2.msra.mxu0 0.0
        %1363 = vmatprep.subr.mxu0 0.0
        %1364 = vmatpush2.msra.mxu0 0.0
        %1365 = vmatprep.subr.mxu0 0.0
        %1366 = vmatpush2.msra.mxu0 0.0
        %1367 = vmatprep.subr.mxu0 0.0
        %1368 = vmatpush2.msra.mxu0 0.0
        %1369 = vmatprep.subr.mxu0 0.0
        %1370 = vmatpush2.msra.mxu0 0.0
        %1371 = vmatprep.subr.mxu0 0.0
        %1372 = vmatpush2.msra.mxu0 0.0
        %1373 = vmatprep.mubr.f32.mxu0 0.0
        %1374 = vmatmul.mubr.f32.gmra.mxu0 %v1302
        %v1375 = vpop.f32.mrf.mxu0
        %v1376 = vadd.f32 %v1307, %v1375
        %v1377 = vpop.f32.mrf.mxu0
        %1378 = vdwg.mxu0
        %v1379 = vtanh.pop %v1376
        %1380 = vmatprep.subr.mxu0 0.0
        %1381 = vmatpush1.msra.mxu0 %v1133
        %1382 = vmatprep.subr.mxu0 0.0
        %1383 = vmatpush1.msra.mxu0 %v1132
        %1384 = vmatprep.subr.mxu0 0.0
        %1385 = vmatpush1.msra.mxu0 %v1131
        %1386 = vmatprep.subr.mxu0 0.0
        %1387 = vmatpush1.msra.mxu0 %v1130
        %1388 = vmatprep.subr.mxu0 0.0
        %1389 = vmatpush1.msra.mxu0 %v1129
        %1390 = vmatprep.subr.mxu0 0.0
        %1391 = vmatpush1.msra.mxu0 %v1128
        %1392 = vmatprep.subr.mxu0 0.0
        %1393 = vmatpush1.msra.mxu0 %v1127
        %1394 = vmatprep.subr.mxu0 0.0
        %1395 = vmatpush1.msra.mxu0 %v1126
        %1396 = vmatprep.subr.mxu0 0.0
        %1397 = vmatpush1.msra.mxu0 %v1125
        %1398 = vmatprep.subr.mxu0 0.0
        %1399 = vmatpush1.msra.mxu0 %v1124
        %1400 = vmatprep.subr.mxu0 0.0
        %1401 = vmatpush1.msra.mxu0 %v1123
        %1402 = vmatprep.subr.mxu0 0.0
        %1403 = vmatpush1.msra.mxu0 %v1122
        %1404 = vmatprep.subr.mxu0 0.0
        %1405 = vmatpush1.msra.mxu0 %v1121
        %1406 = vmatprep.subr.mxu0 0.0
        %1407 = vmatpush1.msra.mxu0 %v1120
        %1408 = vmatprep.subr.mxu0 0.0
        %1409 = vmatpush1.msra.mxu0 %v1119
        %1410 = vmatprep.subr.mxu0 0.0
        %1411 = vmatpush1.msra.mxu0 %v1118
        %1412 = vmatprep.subr.mxu0 0.0
        %1413 = vmatpush2.msra.mxu0 0.0
        %1414 = vmatprep.subr.mxu0 0.0
        %1415 = vmatpush2.msra.mxu0 0.0
        %1416 = vmatprep.subr.mxu0 0.0
        %1417 = vmatpush2.msra.mxu0 0.0
        %1418 = vmatprep.subr.mxu0 0.0
        %1419 = vmatpush2.msra.mxu0 0.0
        %1420 = vmatprep.subr.mxu0 0.0
        %1421 = vmatpush2.msra.mxu0 0.0
        %1422 = vmatprep.subr.mxu0 0.0
        %1423 = vmatpush2.msra.mxu0 0.0
        %1424 = vmatprep.subr.mxu0 0.0
        %1425 = vmatpush2.msra.mxu0 0.0
        %1426 = vmatprep.subr.mxu0 0.0
        %1427 = vmatpush2.msra.mxu0 0.0
        %1428 = vmatprep.subr.mxu0 0.0
        %1429 = vmatpush2.msra.mxu0 0.0
        %1430 = vmatprep.subr.mxu0 0.0
        %1431 = vmatpush2.msra.mxu0 0.0
        %1432 = vmatprep.subr.mxu0 0.0
        %1433 = vmatpush2.msra.mxu0 0.0
        %1434 = vmatprep.subr.mxu0 0.0
        %1435 = vmatpush2.msra.mxu0 0.0
        %1436 = vmatprep.subr.mxu0 0.0
        %1437 = vmatpush2.msra.mxu0 0.0
        %1438 = vmatprep.subr.mxu0 0.0
        %1439 = vmatpush2.msra.mxu0 0.0
        %1440 = vmatprep.subr.mxu0 0.0
        %1441 = vmatpush2.msra.mxu0 0.0
        %1442 = vmatprep.subr.mxu0 0.0
        %1443 = vmatpush2.msra.mxu0 0.0
        %1444 = vmatprep.mubr.f32.mxu0 0.0
        %1445 = vmatmul.mubr.f32.gmra.mxu0 %v1379
        %v1446 = vpop.f32.mrf.mxu0
        %v1447 = vadd.f32 0.0, %v1446
        %v1448 = vpop.f32.mrf.mxu0
        %1449 = vdwg.mxu0
        %v1450 = vadd.f32 %v1082, %v1447
        %s1451 = scalar_lea.vmem [#allocation2], 384
        %v1452 = vld [vmem:[%s1451] sm:$0xff]
        %v1453 = vld [vmem:[%s1451 + $0x8] sm:$0xff]
        %v1454 = vld [vmem:[%s1451 + $0x10] sm:$0xff]
        %v1455 = vld [vmem:[%s1451 + $0x18] sm:$0xff]
        %v1456 = vld [vmem:[%s1451 + $0x20] sm:$0xff]
        %v1457 = vld [vmem:[%s1451 + $0x28] sm:$0xff]
        %v1458 = vld [vmem:[%s1451 + $0x30] sm:$0xff]
        %v1459 = vld [vmem:[%s1451 + $0x38] sm:$0xff]
        %v1460 = vld [vmem:[%s1451 + $0x40] sm:$0xff]
        %v1461 = vld [vmem:[%s1451 + $0x48] sm:$0xff]
        %v1462 = vld [vmem:[%s1451 + $0x50] sm:$0xff]
        %v1463 = vld [vmem:[%s1451 + $0x58] sm:$0xff]
        %v1464 = vld [vmem:[%s1451 + $0x60] sm:$0xff]
        %v1465 = vld [vmem:[%s1451 + $0x68] sm:$0xff]
        %v1466 = vld [vmem:[%s1451 + $0x70] sm:$0xff]
        %v1467 = vld [vmem:[%s1451 + $0x78] sm:$0xff]
        %s1468 = scalar_lea.vmem [#allocation5], 384
        %v1469 = vld [vmem:[%s1468] sm:$0xff]
        %v1470 = vld [vmem:[%s1468 + $0x8] sm:$0xff]
        %v1471 = vld [vmem:[%s1468 + $0x10] sm:$0xff]
        %v1472 = vld [vmem:[%s1468 + $0x18] sm:$0xff]
        %v1473 = vld [vmem:[%s1468 + $0x20] sm:$0xff]
        %v1474 = vld [vmem:[%s1468 + $0x28] sm:$0xff]
        %v1475 = vld [vmem:[%s1468 + $0x30] sm:$0xff]
        %v1476 = vld [vmem:[%s1468 + $0x38] sm:$0xff]
        %v1477 = vld [vmem:[%s1468 + $0x40] sm:$0xff]
        %v1478 = vld [vmem:[%s1468 + $0x48] sm:$0xff]
        %v1479 = vld [vmem:[%s1468 + $0x50] sm:$0xff]
        %v1480 = vld [vmem:[%s1468 + $0x58] sm:$0xff]
        %v1481 = vld [vmem:[%s1468 + $0x60] sm:$0xff]
        %v1482 = vld [vmem:[%s1468 + $0x68] sm:$0xff]
        %v1483 = vld [vmem:[%s1468 + $0x70] sm:$0xff]
        %v1484 = vld [vmem:[%s1468 + $0x78] sm:$0xff]
        %s1485 = scalar_lea.vmem [#allocation7], 384
        %v1486 = vld [vmem:[%s1485] sm:$0xff]
        %v1487 = vld [vmem:[%s1485 + $0x8] sm:$0xff]
        %v1488 = vld [vmem:[%s1485 + $0x10] sm:$0xff]
        %v1489 = vld [vmem:[%s1485 + $0x18] sm:$0xff]
        %v1490 = vld [vmem:[%s1485 + $0x20] sm:$0xff]
        %v1491 = vld [vmem:[%s1485 + $0x28] sm:$0xff]
        %v1492 = vld [vmem:[%s1485 + $0x30] sm:$0xff]
        %v1493 = vld [vmem:[%s1485 + $0x38] sm:$0xff]
        %v1494 = vld [vmem:[%s1485 + $0x40] sm:$0xff]
        %v1495 = vld [vmem:[%s1485 + $0x48] sm:$0xff]
        %v1496 = vld [vmem:[%s1485 + $0x50] sm:$0xff]
        %v1497 = vld [vmem:[%s1485 + $0x58] sm:$0xff]
        %v1498 = vld [vmem:[%s1485 + $0x60] sm:$0xff]
        %v1499 = vld [vmem:[%s1485 + $0x68] sm:$0xff]
        %v1500 = vld [vmem:[%s1485 + $0x70] sm:$0xff]
        %v1501 = vld [vmem:[%s1485 + $0x78] sm:$0xff]
        %s1502 = scalar_lea.vmem [#allocation8], 384
        %v1503 = vld [vmem:[%s1502] sm:$0xff]
        %v1504 = vld [vmem:[%s1502 + $0x8] sm:$0xff]
        %v1505 = vld [vmem:[%s1502 + $0x10] sm:$0xff]
        %v1506 = vld [vmem:[%s1502 + $0x18] sm:$0xff]
        %v1507 = vld [vmem:[%s1502 + $0x20] sm:$0xff]
        %v1508 = vld [vmem:[%s1502 + $0x28] sm:$0xff]
        %v1509 = vld [vmem:[%s1502 + $0x30] sm:$0xff]
        %v1510 = vld [vmem:[%s1502 + $0x38] sm:$0xff]
        %v1511 = vld [vmem:[%s1502 + $0x40] sm:$0xff]
        %v1512 = vld [vmem:[%s1502 + $0x48] sm:$0xff]
        %v1513 = vld [vmem:[%s1502 + $0x50] sm:$0xff]
        %v1514 = vld [vmem:[%s1502 + $0x58] sm:$0xff]
        %v1515 = vld [vmem:[%s1502 + $0x60] sm:$0xff]
        %v1516 = vld [vmem:[%s1502 + $0x68] sm:$0xff]
        %v1517 = vld [vmem:[%s1502 + $0x70] sm:$0xff]
        %v1518 = vld [vmem:[%s1502 + $0x78] sm:$0xff]
        %s1519 = scalar_lea.vmem %s4, 3
        %v1520 = vld [vmem:[%s1519] sm:$0x1]
        %s1521 = scalar_lea.vmem %s5, 3
        %v1522 = vld [vmem:[%s1521] sm:$0x1]
        %v1524 = vlaneseq
        %v1525 = vshrl.u32 %v1524, 7
        %v1526 = vsub.s32 0, %v1525
        %v1527 = vrot.slane %v1520, %v1526
        %1529 = vmatprep.subr.mxu0 0.0
        %1530 = vmatpush1.msra.mxu0 %v1484
        %1531 = vmatprep.subr.mxu0 0.0
        %1532 = vmatpush1.msra.mxu0 %v1483
        %1533 = vmatprep.subr.mxu0 0.0
        %1534 = vmatpush1.msra.mxu0 %v1482
        %1535 = vmatprep.subr.mxu0 0.0
        %1536 = vmatpush1.msra.mxu0 %v1481
        %1537 = vmatprep.subr.mxu0 0.0
        %1538 = vmatpush1.msra.mxu0 %v1480
        %1539 = vmatprep.subr.mxu0 0.0
        %1540 = vmatpush1.msra.mxu0 %v1479
        %1541 = vmatprep.subr.mxu0 0.0
        %1542 = vmatpush1.msra.mxu0 %v1478
        %1543 = vmatprep.subr.mxu0 0.0
        %1544 = vmatpush1.msra.mxu0 %v1477
        %1545 = vmatprep.subr.mxu0 0.0
        %1546 = vmatpush1.msra.mxu0 %v1476
        %1547 = vmatprep.subr.mxu0 0.0
        %1548 = vmatpush1.msra.mxu0 %v1475
        %1549 = vmatprep.subr.mxu0 0.0
        %1550 = vmatpush1.msra.mxu0 %v1474
        %1551 = vmatprep.subr.mxu0 0.0
        %1552 = vmatpush1.msra.mxu0 %v1473
        %1553 = vmatprep.subr.mxu0 0.0
        %1554 = vmatpush1.msra.mxu0 %v1472
        %1555 = vmatprep.subr.mxu0 0.0
        %1556 = vmatpush1.msra.mxu0 %v1471
        %1557 = vmatprep.subr.mxu0 0.0
        %1558 = vmatpush1.msra.mxu0 %v1470
        %1559 = vmatprep.subr.mxu0 0.0
        %1560 = vmatpush1.msra.mxu0 %v1469
        %1561 = vmatprep.subr.mxu0 0.0
        %1562 = vmatpush2.msra.mxu0 0.0
        %1563 = vmatprep.subr.mxu0 0.0
        %1564 = vmatpush2.msra.mxu0 0.0
        %1565 = vmatprep.subr.mxu0 0.0
        %1566 = vmatpush2.msra.mxu0 0.0
        %1567 = vmatprep.subr.mxu0 0.0
        %1568 = vmatpush2.msra.mxu0 0.0
        %1569 = vmatprep.subr.mxu0 0.0
        %1570 = vmatpush2.msra.mxu0 0.0
        %1571 = vmatprep.subr.mxu0 0.0
        %1572 = vmatpush2.msra.mxu0 0.0
        %1573 = vmatprep.subr.mxu0 0.0
        %1574 = vmatpush2.msra.mxu0 0.0
        %1575 = vmatprep.subr.mxu0 0.0
        %1576 = vmatpush2.msra.mxu0 0.0
        %1577 = vmatprep.subr.mxu0 0.0
        %1578 = vmatpush2.msra.mxu0 0.0
        %1579 = vmatprep.subr.mxu0 0.0
        %1580 = vmatpush2.msra.mxu0 0.0
        %1581 = vmatprep.subr.mxu0 0.0
        %1582 = vmatpush2.msra.mxu0 0.0
        %1583 = vmatprep.subr.mxu0 0.0
        %1584 = vmatpush2.msra.mxu0 0.0
        %1585 = vmatprep.subr.mxu0 0.0
        %1586 = vmatpush2.msra.mxu0 0.0
        %1587 = vmatprep.subr.mxu0 0.0
        %1588 = vmatpush2.msra.mxu0 0.0
        %1589 = vmatprep.subr.mxu0 0.0
        %1590 = vmatpush2.msra.mxu0 0.0
        %1591 = vmatprep.subr.mxu0 0.0
        %1592 = vmatpush2.msra.mxu0 0.0
        %1593 = vmatprep.mubr.f32.mxu0 0.0
        %1594 = vmatmul.mubr.f32.gmra.mxu0 %v1450
        %v1595 = vpop.f32.mrf.mxu0
        %v1596 = vadd.f32 %v1527, %v1595
        %v1597 = vpop.f32.mrf.mxu0
        %1598 = vdwg.mxu0
        %v1599 = vtanh.pop %v1596
        %1600 = vmatprep.subr.mxu0 0.0
        %1601 = vmatpush1.msra.mxu0 %v1518
        %1602 = vmatprep.subr.mxu0 0.0
        %1603 = vmatpush1.msra.mxu0 %v1517
        %1604 = vmatprep.subr.mxu0 0.0
        %1605 = vmatpush1.msra.mxu0 %v1516
        %1606 = vmatprep.subr.mxu0 0.0
        %1607 = vmatpush1.msra.mxu0 %v1515
        %1608 = vmatprep.subr.mxu0 0.0
        %1609 = vmatpush1.msra.mxu0 %v1514
        %1610 = vmatprep.subr.mxu0 0.0
        %1611 = vmatpush1.msra.mxu0 %v1513
        %1612 = vmatprep.subr.mxu0 0.0
        %1613 = vmatpush1.msra.mxu0 %v1512
        %1614 = vmatprep.subr.mxu0 0.0
        %1615 = vmatpush1.msra.mxu0 %v1511
        %1616 = vmatprep.subr.mxu0 0.0
        %1617 = vmatpush1.msra.mxu0 %v1510
        %1618 = vmatprep.subr.mxu0 0.0
        %1619 = vmatpush1.msra.mxu0 %v1509
        %1620 = vmatprep.subr.mxu0 0.0
        %1621 = vmatpush1.msra.mxu0 %v1508
        %1622 = vmatprep.subr.mxu0 0.0
        %1623 = vmatpush1.msra.mxu0 %v1507
        %1624 = vmatprep.subr.mxu0 0.0
        %1625 = vmatpush1.msra.mxu0 %v1506
        %1626 = vmatprep.subr.mxu0 0.0
        %1627 = vmatpush1.msra.mxu0 %v1505
        %1628 = vmatprep.subr.mxu0 0.0
        %1629 = vmatpush1.msra.mxu0 %v1504
        %1630 = vmatprep.subr.mxu0 0.0
        %1631 = vmatpush1.msra.mxu0 %v1503
        %1632 = vmatprep.subr.mxu0 0.0
        %1633 = vmatpush2.msra.mxu0 0.0
        %1634 = vmatprep.subr.mxu0 0.0
        %1635 = vmatpush2.msra.mxu0 0.0
        %1636 = vmatprep.subr.mxu0 0.0
        %1637 = vmatpush2.msra.mxu0 0.0
        %1638 = vmatprep.subr.mxu0 0.0
        %1639 = vmatpush2.msra.mxu0 0.0
        %1640 = vmatprep.subr.mxu0 0.0
        %1641 = vmatpush2.msra.mxu0 0.0
        %1642 = vmatprep.subr.mxu0 0.0
        %1643 = vmatpush2.msra.mxu0 0.0
        %1644 = vmatprep.subr.mxu0 0.0
        %1645 = vmatpush2.msra.mxu0 0.0
        %1646 = vmatprep.subr.mxu0 0.0
        %1647 = vmatpush2.msra.mxu0 0.0
        %1648 = vmatprep.subr.mxu0 0.0
        %1649 = vmatpush2.msra.mxu0 0.0
        %1650 = vmatprep.subr.mxu0 0.0
        %1651 = vmatpush2.msra.mxu0 0.0
        %1652 = vmatprep.subr.mxu0 0.0
        %1653 = vmatpush2.msra.mxu0 0.0
        %1654 = vmatprep.subr.mxu0 0.0
        %1655 = vmatpush2.msra.mxu0 0.0
        %1656 = vmatprep.subr.mxu0 0.0
        %1657 = vmatpush2.msra.mxu0 0.0
        %1658 = vmatprep.subr.mxu0 0.0
        %1659 = vmatpush2.msra.mxu0 0.0
        %1660 = vmatprep.subr.mxu0 0.0
        %1661 = vmatpush2.msra.mxu0 0.0
        %1662 = vmatprep.subr.mxu0 0.0
        %1663 = vmatpush2.msra.mxu0 0.0
        %1664 = vmatprep.mubr.f32.mxu0 0.0
        %1665 = vmatmul.mubr.f32.gmra.mxu0 %v1599
        %v1666 = vpop.f32.mrf.mxu0
        %v1667 = vadd.f32 0.0, %v1666
        %v1668 = vpop.f32.mrf.mxu0
        %1669 = vdwg.mxu0
        %v1670 = vsub.f32 %v1302, %v1667
        %v1672 = vlaneseq
        %v1673 = vshrl.u32 %v1672, 7
        %v1674 = vsub.s32 0, %v1673
        %v1675 = vrot.slane %v1522, %v1674
        %1677 = vmatprep.subr.mxu0 0.0
        %1678 = vmatpush1.msra.mxu0 %v1467
        %1679 = vmatprep.subr.mxu0 0.0
        %1680 = vmatpush1.msra.mxu0 %v1466
        %1681 = vmatprep.subr.mxu0 0.0
        %1682 = vmatpush1.msra.mxu0 %v1465
        %1683 = vmatprep.subr.mxu0 0.0
        %1684 = vmatpush1.msra.mxu0 %v1464
        %1685 = vmatprep.subr.mxu0 0.0
        %1686 = vmatpush1.msra.mxu0 %v1463
        %1687 = vmatprep.subr.mxu0 0.0
        %1688 = vmatpush1.msra.mxu0 %v1462
        %1689 = vmatprep.subr.mxu0 0.0
        %1690 = vmatpush1.msra.mxu0 %v1461
        %1691 = vmatprep.subr.mxu0 0.0
        %1692 = vmatpush1.msra.mxu0 %v1460
        %1693 = vmatprep.subr.mxu0 0.0
        %1694 = vmatpush1.msra.mxu0 %v1459
        %1695 = vmatprep.subr.mxu0 0.0
        %1696 = vmatpush1.msra.mxu0 %v1458
        %1697 = vmatprep.subr.mxu0 0.0
        %1698 = vmatpush1.msra.mxu0 %v1457
        %1699 = vmatprep.subr.mxu0 0.0
        %1700 = vmatpush1.msra.mxu0 %v1456
        %1701 = vmatprep.subr.mxu0 0.0
        %1702 = vmatpush1.msra.mxu0 %v1455
        %1703 = vmatprep.subr.mxu0 0.0
        %1704 = vmatpush1.msra.mxu0 %v1454
        %1705 = vmatprep.subr.mxu0 0.0
        %1706 = vmatpush1.msra.mxu0 %v1453
        %1707 = vmatprep.subr.mxu0 0.0
        %1708 = vmatpush1.msra.mxu0 %v1452
        %1709 = vmatprep.subr.mxu0 0.0
        %1710 = vmatpush2.msra.mxu0 0.0
        %1711 = vmatprep.subr.mxu0 0.0
        %1712 = vmatpush2.msra.mxu0 0.0
        %1713 = vmatprep.subr.mxu0 0.0
        %1714 = vmatpush2.msra.mxu0 0.0
        %1715 = vmatprep.subr.mxu0 0.0
        %1716 = vmatpush2.msra.mxu0 0.0
        %1717 = vmatprep.subr.mxu0 0.0
        %1718 = vmatpush2.msra.mxu0 0.0
        %1719 = vmatprep.subr.mxu0 0.0
        %1720 = vmatpush2.msra.mxu0 0.0
        %1721 = vmatprep.subr.mxu0 0.0
        %1722 = vmatpush2.msra.mxu0 0.0
        %1723 = vmatprep.subr.mxu0 0.0
        %1724 = vmatpush2.msra.mxu0 0.0
        %1725 = vmatprep.subr.mxu0 0.0
        %1726 = vmatpush2.msra.mxu0 0.0
        %1727 = vmatprep.subr.mxu0 0.0
        %1728 = vmatpush2.msra.mxu0 0.0
        %1729 = vmatprep.subr.mxu0 0.0
        %1730 = vmatpush2.msra.mxu0 0.0
        %1731 = vmatprep.subr.mxu0 0.0
        %1732 = vmatpush2.msra.mxu0 0.0
        %1733 = vmatprep.subr.mxu0 0.0
        %1734 = vmatpush2.msra.mxu0 0.0
        %1735 = vmatprep.subr.mxu0 0.0
        %1736 = vmatpush2.msra.mxu0 0.0
        %1737 = vmatprep.subr.mxu0 0.0
        %1738 = vmatpush2.msra.mxu0 0.0
        %1739 = vmatprep.subr.mxu0 0.0
        %1740 = vmatpush2.msra.mxu0 0.0
        %1741 = vmatprep.mubr.f32.mxu0 0.0
        %1742 = vmatmul.mubr.f32.gmra.mxu0 %v1670
        %v1743 = vpop.f32.mrf.mxu0
        %v1744 = vadd.f32 %v1675, %v1743
        %v1745 = vpop.f32.mrf.mxu0
        %1746 = vdwg.mxu0
        %v1747 = vtanh.pop %v1744
        %1748 = vmatprep.subr.mxu0 0.0
        %1749 = vmatpush1.msra.mxu0 %v1501
        %1750 = vmatprep.subr.mxu0 0.0
        %1751 = vmatpush1.msra.mxu0 %v1500
        %1752 = vmatprep.subr.mxu0 0.0
        %1753 = vmatpush1.msra.mxu0 %v1499
        %1754 = vmatprep.subr.mxu0 0.0
        %1755 = vmatpush1.msra.mxu0 %v1498
        %1756 = vmatprep.subr.mxu0 0.0
        %1757 = vmatpush1.msra.mxu0 %v1497
        %1758 = vmatprep.subr.mxu0 0.0
        %1759 = vmatpush1.msra.mxu0 %v1496
        %1760 = vmatprep.subr.mxu0 0.0
        %1761 = vmatpush1.msra.mxu0 %v1495
        %1762 = vmatprep.subr.mxu0 0.0
        %1763 = vmatpush1.msra.mxu0 %v1494
        %1764 = vmatprep.subr.mxu0 0.0
        %1765 = vmatpush1.msra.mxu0 %v1493
        %1766 = vmatprep.subr.mxu0 0.0
        %1767 = vmatpush1.msra.mxu0 %v1492
        %1768 = vmatprep.subr.mxu0 0.0
        %1769 = vmatpush1.msra.mxu0 %v1491
        %1770 = vmatprep.subr.mxu0 0.0
        %1771 = vmatpush1.msra.mxu0 %v1490
        %1772 = vmatprep.subr.mxu0 0.0
        %1773 = vmatpush1.msra.mxu0 %v1489
        %1774 = vmatprep.subr.mxu0 0.0
        %1775 = vmatpush1.msra.mxu0 %v1488
        %1776 = vmatprep.subr.mxu0 0.0
        %1777 = vmatpush1.msra.mxu0 %v1487
        %1778 = vmatprep.subr.mxu0 0.0
        %1779 = vmatpush1.msra.mxu0 %v1486
        %1780 = vmatprep.subr.mxu0 0.0
        %1781 = vmatpush2.msra.mxu0 0.0
        %1782 = vmatprep.subr.mxu0 0.0
        %1783 = vmatpush2.msra.mxu0 0.0
        %1784 = vmatprep.subr.mxu0 0.0
        %1785 = vmatpush2.msra.mxu0 0.0
        %1786 = vmatprep.subr.mxu0 0.0
        %1787 = vmatpush2.msra.mxu0 0.0
        %1788 = vmatprep.subr.mxu0 0.0
        %1789 = vmatpush2.msra.mxu0 0.0
        %1790 = vmatprep.subr.mxu0 0.0
        %1791 = vmatpush2.msra.mxu0 0.0
        %1792 = vmatprep.subr.mxu0 0.0
        %1793 = vmatpush2.msra.mxu0 0.0
        %1794 = vmatprep.subr.mxu0 0.0
        %1795 = vmatpush2.msra.mxu0 0.0
        %1796 = vmatprep.subr.mxu0 0.0
        %1797 = vmatpush2.msra.mxu0 0.0
        %1798 = vmatprep.subr.mxu0 0.0
        %1799 = vmatpush2.msra.mxu0 0.0
        %1800 = vmatprep.subr.mxu0 0.0
        %1801 = vmatpush2.msra.mxu0 0.0
        %1802 = vmatprep.subr.mxu0 0.0
        %1803 = vmatpush2.msra.mxu0 0.0
        %1804 = vmatprep.subr.mxu0 0.0
        %1805 = vmatpush2.msra.mxu0 0.0
        %1806 = vmatprep.subr.mxu0 0.0
        %1807 = vmatpush2.msra.mxu0 0.0
        %1808 = vmatprep.subr.mxu0 0.0
        %1809 = vmatpush2.msra.mxu0 0.0
        %1810 = vmatprep.subr.mxu0 0.0
        %1811 = vmatpush2.msra.mxu0 0.0
        %1812 = vmatprep.mubr.f32.mxu0 0.0
        %1813 = vmatmul.mubr.f32.gmra.mxu0 %v1747
        %v1814 = vpop.f32.mrf.mxu0
        %v1815 = vadd.f32 0.0, %v1814
        %v1816 = vpop.f32.mrf.mxu0
        %1817 = vdwg.mxu0
        %v1818 = vadd.f32 %v1450, %v1815
        %1819 = vst [vmem:[%s350] sm:$0xff] %v1670
        %1820 = vst [vmem:[%s350 + $0x8] sm:$0xff] %v1818
        %s1821 = sand.u32 %s184, 1
        %s1822 = scalar_lea.sflag [#allocation4], %s1821
        %s1823 = sand.u32 %s184, 1
        %s1824 = smul.addr %s1823, 16
        %s1825 = scalar_lea.vmem [#allocation11], %s1824
        // Predicated region
        $region69: #{tpu_custom_call.1} parent=47 // pred_check
          %p1826 = pneg %p194
        $region70: #{tpu_custom_call.1} parent=47 // pred_check_branch
          %1828 = sbr.rel (%p1826) target = $region72
        $region71: #{tpu_custom_call.1} parent=47 // pred_region
          %s1830 = ssub.s32 256, 256
          %1831 = vsyncadd %s1822, %s1830
          %s1832 = smul.addr %s24, 2
          %s1833 = smul.addr %s1832, 128
          %s1834 = scalar_lea.hbm %s7, %s1833
          %s1836 = sshll.u32 %s1825, 4
          %s1837 = int_to_ptr.vmem [resolvable:$true] %s1836
          %1839 = dma.vmem_to_hbm [thread:$0]  %s1837, 256, %s1834, %s1822
        $region72: #{tpu_custom_call.1} parent=47 // pred_fallthru
          _
      $region48: #{tpu_custom_call.1} parent=5 // pred_fallthru
        _
      %p1840 = scmp.le.s32.totalorder 2, %s19
      // Predicated region
      $region73: #{tpu_custom_call.1} parent=5 // pred_check
        %p1841 = pneg %p1840
      $region74: #{tpu_custom_call.1} parent=5 // pred_check_branch
        %1843 = sbr.rel (%p1841) target = $region76
      $region75: #{tpu_custom_call.1} parent=5 // pred_region
        %s1844 = ssub.s32 %s19, 2
        // Predicated region
        $region77: #{tpu_custom_call.1} parent=75 // pred_check
          %p1845 = pneg %p200
        $region78: #{tpu_custom_call.1} parent=75 // pred_check_branch
          %1847 = sbr.rel (%p1845) target = $region80
        $region79: #{tpu_custom_call.1} parent=75 // pred_region
          %s1848 = sand.u32 %s185, 1
          %s1849 = scalar_lea.sflag [#allocation4], %s1848
          %s1850 = sand.u32 %s185, 1
          %s1851 = smul.addr %s1850, 16
          %s1852 = scalar_lea.vmem [#allocation11], %s1851
          %1853 = dma.done %s1849, 256
        $region80: #{tpu_custom_call.1} parent=75 // pred_fallthru
          _
      $region76: #{tpu_custom_call.1} parent=5 // pred_fallthru
        _
    $region6: #{tpu_custom_call.1} parent=1 // loop_footer
      %s23 = sadd.s32 1, %s19
    $region7: #{tpu_custom_call.1} parent=1 // loop_footer_branch
      %18 = sbr.rel target = $region3
    $region8: #{tpu_custom_call.1} parent=1 // loop_exit
      _
    %1854 = vsyncpa [#allocation3], 1
    %s1855 = scalar_lea.sflag [#allocation3], 1
    %1856 = vsyncpa %s1855, 1
    %1857 = vsyncpa [#allocation6], 1
    %1858 = vsyncpa [#allocation9], 1
    %1859 = vsyncpa [#allocation4], 1
    %s1860 = scalar_lea.sflag [#allocation4], 1
    %1861 = vsyncpa %s1860, 1

// kernel: tpu_custom_call.1
$region0: #{tpu_custom_call.1}
  #allocation0 [shape = 'u32[]', space=smem, size = 0x4, offset = 0x4, fixed_abs, tag = 'smem constant byte address 0x4 - core index']
  #allocation1 [shape = 'u32[144,128]{1,0:T(1,128)}', space=vmem, size = 0x12000, scoped, tag = 'internal scratch']
  %s0 = inlined_call_operand.hbm [shape: f32[4,128,128], index: 0, kind: input, shape index: {}]
  %s1 = inlined_call_operand.hbm [shape: f32[4,128,128], index: 1, kind: input, shape index: {}]
  %s2 = inlined_call_operand.hbm [shape: f32[4,128,128], index: 2, kind: input, shape index: {}]
  %s3 = inlined_call_operand.hbm [shape: f32[4,128,128], index: 3, kind: input, shape index: {}]
  %s4 = inlined_call_operand.vmem [shape: f32[4,1,128], index: 4, kind: input, shape index: {}]
  %s5 = inlined_call_operand.vmem [shape: f32[4,1,128], index: 5, kind: input, shape index: {}]
  %s6 = inlined_call_operand.hbm [shape: f32[16,256], index: 6, kind: input, shape index: {}]
  %s7 = inlined_call_operand.hbm [shape: f32[16,256], index: 7, kind: output, shape index: {}]
  %s8 = sld [smem:[#allocation0]]
  $region81: #{tpu_custom_call.1} parent=0
    _
  %s10 = ssub.s32 1, %s8
  %s11 = scalar_select 0, %s10, %s8
  $region1: #{tpu_custom_call.1} parent=0
    #allocation2 [shape = 'u8[262144]{0}', space=vmem, size = 0x40000, scoped, tag = 'input window, operand 0, single buffered']
    #allocation3 [shape = 's32[2]{0}', space=sflag, size = 0x8, scoped, tag = 'scoped memory for tpu_custom_call.1']
    #allocation4 [shape = 's32[2]{0}', space=sflag, size = 0x8, scoped, tag = 'scoped memory for tpu_custom_call.1']
    #allocation5 [shape = 'u8[262144]{0}', space=vmem, size = 0x40000, scoped, tag = 'input window, operand 1, single buffered']
    #allocation6 [shape = 's32[1]{0}', space=sflag, size = 0x4, scoped, tag = 'scoped memory for tpu_custom_call.1']
    #allocation7 [shape = 'u8[262144]{0}', space=vmem, size = 0x40000, scoped, tag = 'input window, operand 2, single buffered']
    #allocation8 [shape = 'u8[262144]{0}', space=vmem, size = 0x40000, scoped, tag = 'input window, operand 3, single buffered']
    #allocation9 [shape = 's32[1]{0}', space=sflag, size = 0x4, scoped, tag = 'scoped memory for tpu_custom_call.1']
    #allocation10 [shape = 'u8[16384]{0}', space=vmem, size = 0x4000, scoped, tag = 'input window, operand 6']
    #allocation11 [shape = 'u8[16384]{0}', space=vmem, size = 0x4000, scoped, tag = 'output window, operand 0']
    %12 = vsyncpa [#allocation3], 0
    %13 = vsyncpa [#allocation6], 0
    %14 = vsyncpa [#allocation9], 0
    %15 = vsyncpa [#allocation4], 0
    %s16 = scalar_lea.sflag [#allocation4], 1
    %17 = vsyncpa %s16, 0
    loop: start=0, step=1, limit=4
    $region2: #{tpu_custom_call.1} parent=1 // loop_pre_header
      _
    $region3: #{tpu_custom_call.1} parent=1 // loop_header
      %s19 = sphi 0, %s23
      %p20 = scmp.ge.s32.totalorder %s19, 4
      %s27 = sphi 0, %s27
      %s29 = sphi 0, %s27
      %s30 = sphi 0, %s29
      %s44 = sphi 0, %s30
      %s48 = sphi 0, %s48
      %s50 = sphi 0, %s48
      %s51 = sphi 0, %s50
      %s65 = sphi 0, %s51
      %s69 = sphi 0, %s69
      %s71 = sphi 0, %s69
      %s72 = sphi 0, %s71
      %s86 = sphi 0, %s72
      %s90 = sphi 0, %s90
      %s92 = sphi 0, %s90
      %s93 = sphi 0, %s92
      %s107 = sphi 0, %s93
      %s111 = sphi 0, %s111
      %s113 = sphi 0, %s111
      %s114 = sphi 0, %s113
      %s128 = sphi 0, %s114
      %s132 = sphi 0, %s132
      %s134 = sphi 0, %s132
      %s135 = sphi 0, %s134
      %s149 = sphi 0, %s135
      %s155 = sphi 0, %s157
      %s158 = sphi 0, %s155
      %s159 = sphi 0, %s158
      %s175 = sphi 0, %s159
      %s181 = sphi 0, %s183
      %s184 = sphi 0, %s181
      %s185 = sphi 0, %s184
      %s201 = sphi 0, %s185
    $region4: #{tpu_custom_call.1} parent=1 // loop_header_branch
      %22 = sbr.rel (%p20) target = $region8
    $region5: #{tpu_custom_call.1} parent=1 // loop_body
      %s24 = ssub.s32 %s19, 1
      %s25 = ssub.s32 %s19, 2
      %s26 = sadd.s32 %s19, 1
      %s28 = sadd.s32 %s27, 1
      %p31 = scmp.eq.s32.totalorder %s19, 1
      %p32 = scmp.ne.s32.totalorder %s27, %s29
      %p33 = scmp.eq.s32.totalorder %s19, 0
      %p34 = por %p32, %p33
      %p35 = scmp.ne.s32.totalorder %s27, %s29
      %p36 = scmp.eq.s32.totalorder %s24, 1
      %p37 = por %p35, %p36
      %p38 = scmp.ne.s32.totalorder %s29, %s30
      %p39 = scmp.eq.s32.totalorder %s24, 0
      %p40 = por %p38, %p39
      %p41 = scmp.ne.s32.totalorder %s29, %s30
      %p42 = scmp.eq.s32.totalorder %s25, 1
      %p43 = por %p41, %p42
      %p45 = scmp.ne.s32.totalorder %s30, %s44
      %p46 = scmp.eq.s32.totalorder %s25, 0
      %p47 = por %p45, %p46
      %s49 = sadd.s32 %s48, 1
      %p52 = scmp.eq.s32.totalorder %s19, 1
      %p53 = scmp.ne.s32.totalorder %s48, %s50
      %p54 = scmp.eq.s32.totalorder %s19, 0
      %p55 = por %p53, %p54
      %p56 = scmp.ne.s32.totalorder %s48, %s50
      %p57 = scmp.eq.s32.totalorder %s24, 1
      %p58 = por %p56, %p57
      %p59 = scmp.ne.s32.totalorder %s50, %s51
      %p60 = scmp.eq.s32.totalorder %s24, 0
      %p61 = por %p59, %p60
      %p62 = scmp.ne.s32.totalorder %s50, %s51
      %p63 = scmp.eq.s32.totalorder %s25, 1
      %p64 = por %p62, %p63
      %p66 = scmp.ne.s32.totalorder %s51, %s65
      %p67 = scmp.eq.s32.totalorder %s25, 0
      %p68 = por %p66, %p67
      %s70 = sadd.s32 %s69, 1
      %p73 = scmp.eq.s32.totalorder %s19, 1
      %p74 = scmp.ne.s32.totalorder %s69, %s71
      %p75 = scmp.eq.s32.totalorder %s19, 0
      %p76 = por %p74, %p75
      %p77 = scmp.ne.s32.totalorder %s69, %s71
      %p78 = scmp.eq.s32.totalorder %s24, 1
      %p79 = por %p77, %p78
      %p80 = scmp.ne.s32.totalorder %s71, %s72
      %p81 = scmp.eq.s32.totalorder %s24, 0
      %p82 = por %p80, %p81
      %p83 = scmp.ne.s32.totalorder %s71, %s72
      %p84 = scmp.eq.s32.totalorder %s25, 1
      %p85 = por %p83, %p84
      %p87 = scmp.ne.s32.totalorder %s72, %s86
      %p88 = scmp.eq.s32.totalorder %s25, 0
      %p89 = por %p87, %p88
      %s91 = sadd.s32 %s90, 1
      %p94 = scmp.eq.s32.totalorder %s19, 1
      %p95 = scmp.ne.s32.totalorder %s90, %s92
      %p96 = scmp.eq.s32.totalorder %s19, 0
      %p97 = por %p95, %p96
      %p98 = scmp.ne.s32.totalorder %s90, %s92
      %p99 = scmp.eq.s32.totalorder %s24, 1
      %p100 = por %p98, %p99
      %p101 = scmp.ne.s32.totalorder %s92, %s93
      %p102 = scmp.eq.s32.totalorder %s24, 0
      %p103 = por %p101, %p102
      %p104 = scmp.ne.s32.totalorder %s92, %s93
      %p105 = scmp.eq.s32.totalorder %s25, 1
      %p106 = por %p104, %p105
      %p108 = scmp.ne.s32.totalorder %s93, %s107
      %p109 = scmp.eq.s32.totalorder %s25, 0
      %p110 = por %p108, %p109
      %s112 = sadd.s32 %s111, 1
      %p115 = scmp.eq.s32.totalorder %s19, 1
      %p116 = scmp.ne.s32.totalorder %s111, %s113
      %p117 = scmp.eq.s32.totalorder %s19, 0
      %p118 = por %p116, %p117
      %p119 = scmp.ne.s32.totalorder %s111, %s113
      %p120 = scmp.eq.s32.totalorder %s24, 1
      %p121 = por %p119, %p120
      %p122 = scmp.ne.s32.totalorder %s113, %s114
      %p123 = scmp.eq.s32.totalorder %s24, 0
      %p124 = por %p122, %p123
      %p125 = scmp.ne.s32.totalorder %s113, %s114
      %p126 = scmp.eq.s32.totalorder %s25, 1
      %p127 = por %p125, %p126
      %p129 = scmp.ne.s32.totalorder %s114, %s128
      %p130 = scmp.eq.s32.totalorder %s25, 0
      %p131 = por %p129, %p130
      %s133 = sadd.s32 %s132, 1
      %p136 = scmp.eq.s32.totalorder %s19, 1
      %p137 = scmp.ne.s32.totalorder %s132, %s134
      %p138 = scmp.eq.s32.totalorder %s19, 0
      %p139 = por %p137, %p138
      %p140 = scmp.ne.s32.totalorder %s132, %s134
      %p141 = scmp.eq.s32.totalorder %s24, 1
      %p142 = por %p140, %p141
      %p143 = scmp.ne.s32.totalorder %s134, %s135
      %p144 = scmp.eq.s32.totalorder %s24, 0
      %p145 = por %p143, %p144
      %p146 = scmp.ne.s32.totalorder %s134, %s135
      %p147 = scmp.eq.s32.totalorder %s25, 1
      %p148 = por %p146, %p147
      %p150 = scmp.ne.s32.totalorder %s135, %s149
      %p151 = scmp.eq.s32.totalorder %s25, 0
      %p152 = por %p150, %p151
      %s153 = ssub.s32 %s19, %s26
      %p154 = scmp.eq.s32.totalorder %s153, 0
      %s156 = sadd.s32 %s155, 1
      %s157 = scalar_select %p154, %s155, %s156
      %p160 = pneg %p154
      %p161 = scmp.eq.s32.totalorder %s19, 1
      %p162 = por %p160, %p161
      %p163 = scmp.ne.s32.totalorder %s155, %s158
      %p164 = scmp.eq.s32.totalorder %s19, 0
      %p165 = por %p163, %p164
      %p166 = scmp.ne.s32.totalorder %s155, %s158
      %p167 = scmp.eq.s32.totalorder %s24, 1
      %p168 = por %p166, %p167
      %p169 = scmp.ne.s32.totalorder %s158, %s159
      %p170 = scmp.eq.s32.totalorder %s24, 0
      %p171 = por %p169, %p170
      %p172 = scmp.ne.s32.totalorder %s158, %s159
      %p173 = scmp.eq.s32.totalorder %s25, 1
      %p174 = por %p172, %p173
      %p176 = scmp.ne.s32.totalorder %s159, %s175
      %p177 = scmp.eq.s32.totalorder %s25, 0
      %p178 = por %p176, %p177
      %s179 = ssub.s32 %s19, %s26
      %p180 = scmp.eq.s32.totalorder %s179, 0
      %s182 = sadd.s32 %s181, 1
      %s183 = scalar_select %p180, %s181, %s182
      %p186 = pneg %p180
      %p187 = scmp.eq.s32.totalorder %s19, 1
      %p188 = por %p186, %p187
      %p189 = scmp.ne.s32.totalorder %s181, %s184
      %p190 = scmp.eq.s32.totalorder %s19, 0
      %p191 = por %p189, %p190
      %p192 = scmp.ne.s32.totalorder %s181, %s184
      %p193 = scmp.eq.s32.totalorder %s24, 1
      %p194 = por %p192, %p193
      %p195 = scmp.ne.s32.totalorder %s184, %s185
      %p196 = scmp.eq.s32.totalorder %s24, 0
      %p197 = por %p195, %p196
      %p198 = scmp.ne.s32.totalorder %s184, %s185
      %p199 = scmp.eq.s32.totalorder %s25, 1
      %p200 = por %p198, %p199
      %p202 = scmp.ne.s32.totalorder %s185, %s201
      %p203 = scmp.eq.s32.totalorder %s25, 0
      %p204 = por %p202, %p203
      %p205 = scmp.le.s32.totalorder 1, %s19
      %p206 = scmp.lt.s32.totalorder %s19, 3
      %p207 = pnand %p205, %p206
      %p208 = pneg %p207
      // Predicated region
      $region9: #{tpu_custom_call.1} parent=5 // pred_check
        _
      $region10: #{tpu_custom_call.1} parent=5 // pred_check_branch
        %210 = sbr.rel (%p207) target = $region12
      $region11: #{tpu_custom_call.1} parent=5 // pred_region
        %s211 = ssub.s32 %s19, 1
        // Predicated region
        $region13: #{tpu_custom_call.1} parent=11 // pred_check
          %p212 = pneg %p40
        $region14: #{tpu_custom_call.1} parent=11 // pred_check_branch
          %214 = sbr.rel (%p212) target = $region16
        $region15: #{tpu_custom_call.1} parent=11 // pred_region
          %s216 = ssub.s32 8192, 8192
          %217 = vsyncadd [#allocation3], %s216
          %s218 = sshll.u32 [#allocation2], 4
          %s219 = int_to_ptr.vmem [resolvable:$true] %s218
          %224 = dma.hbm_to_vmem [thread:$0]  %s0, 8192, %s219, [#allocation3], 128, 128, 8
        $region16: #{tpu_custom_call.1} parent=11 // pred_fallthru
          _
        // Predicated region
        $region17: #{tpu_custom_call.1} parent=11 // pred_check
          %p225 = pneg %p61
        $region18: #{tpu_custom_call.1} parent=11 // pred_check_branch
          %227 = sbr.rel (%p225) target = $region20
        $region19: #{tpu_custom_call.1} parent=11 // pred_region
          %s229 = ssub.s32 8192, 8192
          %230 = vsyncadd [#allocation6], %s229
          %s231 = sshll.u32 [#allocation5], 4
          %s232 = int_to_ptr.vmem [resolvable:$true] %s231
          %237 = dma.hbm_to_vmem [thread:$0]  %s1, 8192, %s232, [#allocation6], 128, 128, 8
        $region20: #{tpu_custom_call.1} parent=11 // pred_fallthru
          _
        // Predicated region
        $region21: #{tpu_custom_call.1} parent=11 // pred_check
          %p238 = pneg %p82
        $region22: #{tpu_custom_call.1} parent=11 // pred_check_branch
          %240 = sbr.rel (%p238) target = $region24
        $region23: #{tpu_custom_call.1} parent=11 // pred_region
          %s242 = ssub.s32 8192, 8192
          %243 = vsyncadd [#allocation6], %s242
          %s244 = sshll.u32 [#allocation7], 4
          %s245 = int_to_ptr.vmem [resolvable:$true] %s244
          %250 = dma.hbm_to_vmem [thread:$0]  %s2, 8192, %s245, [#allocation6], 128, 128, 8
        $region24: #{tpu_custom_call.1} parent=11 // pred_fallthru
          _
        // Predicated region
        $region25: #{tpu_custom_call.1} parent=11 // pred_check
          %p251 = pneg %p103
        $region26: #{tpu_custom_call.1} parent=11 // pred_check_branch
          %253 = sbr.rel (%p251) target = $region28
        $region27: #{tpu_custom_call.1} parent=11 // pred_region
          %s255 = ssub.s32 8192, 8192
          %256 = vsyncadd [#allocation9], %s255
          %s257 = sshll.u32 [#allocation8], 4
          %s258 = int_to_ptr.vmem [resolvable:$true] %s257
          %263 = dma.hbm_to_vmem [thread:$0]  %s3, 8192, %s258, [#allocation9], 128, 128, 8
        $region28: #{tpu_custom_call.1} parent=11 // pred_fallthru
          _
        // Predicated region
        $region29: #{tpu_custom_call.1} parent=11 // pred_check
          %p264 = pneg %p124
        $region30: #{tpu_custom_call.1} parent=11 // pred_check_branch
          %266 = sbr.rel (%p264) target = $region32
        $region31: #{tpu_custom_call.1} parent=11 // pred_region
          _
        $region32: #{tpu_custom_call.1} parent=11 // pred_fallthru
          _
        // Predicated region
        $region33: #{tpu_custom_call.1} parent=11 // pred_check
          %p267 = pneg %p145
        $region34: #{tpu_custom_call.1} parent=11 // pred_check_branch
          %269 = sbr.rel (%p267) target = $region36
        $region35: #{tpu_custom_call.1} parent=11 // pred_region
          _
        $region36: #{tpu_custom_call.1} parent=11 // pred_fallthru
          _
      $region12: #{tpu_custom_call.1} parent=5 // pred_fallthru
        _
      %p270 = scmp.lt.s32.totalorder %s19, 2
      // Predicated region
      $region37: #{tpu_custom_call.1} parent=5 // pred_check
        %p271 = pneg %p270
      $region38: #{tpu_custom_call.1} parent=5 // pred_check_branch
        %273 = sbr.rel (%p271) target = $region40
      $region39: #{tpu_custom_call.1} parent=5 // pred_region
        // Predicated region
        $region41: #{tpu_custom_call.1} parent=39 // pred_check
          %p274 = pneg %p165
        $region42: #{tpu_custom_call.1} parent=39 // pred_check_branch
          %276 = sbr.rel (%p274) target = $region44
        $region43: #{tpu_custom_call.1} parent=39 // pred_region
          %s277 = sand.u32 %s19, 1
          %s278 = scalar_lea.sflag [#allocation3], %s277
          %s279 = sand.u32 %s155, 1
          %s280 = smul.addr %s279, 16
          %s281 = scalar_lea.vmem [#allocation10], %s280
          %s283 = ssub.s32 256, 256
          %284 = vsyncadd %s278, %s283
          %s285 = smul.addr %s19, 2
          %s286 = smul.addr %s285, 128
          %s287 = scalar_lea.hbm %s6, %s286
          %s289 = sshll.u32 %s281, 4
          %s290 = int_to_ptr.vmem [resolvable:$true] %s289
          %292 = dma.hbm_to_vmem [thread:$0]  %s287, 256, %s290, %s278
        $region44: #{tpu_custom_call.1} parent=39 // pred_fallthru
          _
      $region40: #{tpu_custom_call.1} parent=5 // pred_fallthru
        _
      %p293 = scmp.le.s32.totalorder 1, %s19
      %p294 = scmp.lt.s32.totalorder %s19, 3
      %p295 = pnand %p293, %p294
      %p296 = pneg %p295
      // Predicated region
      $region45: #{tpu_custom_call.1} parent=5 // pred_check
        _
      $region46: #{tpu_custom_call.1} parent=5 // pred_check_branch
        %298 = sbr.rel (%p295) target = $region48
      $region47: #{tpu_custom_call.1} parent=5 // pred_region
        %s299 = ssub.s32 %s19, 1
        // Predicated region
        $region49: #{tpu_custom_call.1} parent=47 // pred_check
          %p300 = pneg %p40
        $region50: #{tpu_custom_call.1} parent=47 // pred_check_branch
          %302 = sbr.rel (%p300) target = $region52
        $region51: #{tpu_custom_call.1} parent=47 // pred_region
          %303 = dma.done [#allocation3], 8192
        $region52: #{tpu_custom_call.1} parent=47 // pred_fallthru
          _
        // Predicated region
        $region53: #{tpu_custom_call.1} parent=47 // pred_check
          %p304 = pneg %p61
        $region54: #{tpu_custom_call.1} parent=47 // pred_check_branch
          %306 = sbr.rel (%p304) target = $region56
        $region55: #{tpu_custom_call.1} parent=47 // pred_region
          %307 = dma.done [#allocation6], 8192
        $region56: #{tpu_custom_call.1} parent=47 // pred_fallthru
          _
        // Predicated region
        $region57: #{tpu_custom_call.1} parent=47 // pred_check
          %p308 = pneg %p82
        $region58: #{tpu_custom_call.1} parent=47 // pred_check_branch
          %310 = sbr.rel (%p308) target = $region60
        $region59: #{tpu_custom_call.1} parent=47 // pred_region
          %311 = dma.done [#allocation6], 8192
        $region60: #{tpu_custom_call.1} parent=47 // pred_fallthru
          _
        // Predicated region
        $region61: #{tpu_custom_call.1} parent=47 // pred_check
          %p312 = pneg %p103
        $region62: #{tpu_custom_call.1} parent=47 // pred_check_branch
          %314 = sbr.rel (%p312) target = $region64
        $region63: #{tpu_custom_call.1} parent=47 // pred_region
          %315 = dma.done [#allocation9], 8192
        $region64: #{tpu_custom_call.1} parent=47 // pred_fallthru
          _
        %s316 = sand.u32 %s24, 1
        %s317 = scalar_lea.sflag [#allocation3], %s316
        %s318 = sand.u32 %s158, 1
        %s319 = smul.addr %s318, 16
        %s320 = scalar_lea.vmem [#allocation10], %s319
        // Predicated region
        $region65: #{tpu_custom_call.1} parent=47 // pred_check
          %p321 = pneg %p171
        $region66: #{tpu_custom_call.1} parent=47 // pred_check_branch
          %323 = sbr.rel (%p321) target = $region68
        $region67: #{tpu_custom_call.1} parent=47 // pred_region
          %324 = dma.done %s317, 256
        $region68: #{tpu_custom_call.1} parent=47 // pred_fallthru
          _
        %p325 = pneg %p40
        %p326 = pneg %p37
        %p327 = pneg %p61
        %p328 = pneg %p58
        %p329 = pneg %p82
        %p330 = pneg %p79
        %p331 = pneg %p103
        %p332 = pneg %p100
        %p333 = pneg %p124
        %p334 = pneg %p121
        %p335 = pneg %p145
        %p336 = pneg %p142
        %s337 = sand.u32 %s24, 1
        %s338 = scalar_lea.sflag [#allocation3], %s337
        %s339 = sand.u32 %s158, 1
        %s340 = smul.addr %s339, 16
        %s341 = scalar_lea.vmem [#allocation10], %s340
        %p342 = pneg %p171
        %p343 = pneg %p168
        %p344 = pneg %p197
        %p345 = pneg %p194
        %s346 = sand.u32 %s184, 1
        %s347 = scalar_lea.sflag [#allocation4], %s346
        %s348 = sand.u32 %s184, 1
        %s349 = smul.addr %s348, 16
        %s350 = scalar_lea.vmem [#allocation11], %s349
        %v351 = vld [vmem:[%s320] sm:$0xff]
        %v352 = vld [vmem:[%s320 + $0x8] sm:$0xff]
        %v353 = vld [vmem:[#allocation2] sm:$0xff]
        %v354 = vld [vmem:[#allocation2 + $0x8] sm:$0xff]
        %v355 = vld [vmem:[#allocation2 + $0x10] sm:$0xff]
        %v356 = vld [vmem:[#allocation2 + $0x18] sm:$0xff]
        %v357 = vld [vmem:[#allocation2 + $0x20] sm:$0xff]
        %v358 = vld [vmem:[#allocation2 + $0x28] sm:$0xff]
        %v359 = vld [vmem:[#allocation2 + $0x30] sm:$0xff]
        %v360 = vld [vmem:[#allocation2 + $0x38] sm:$0xff]
        %v361 = vld [vmem:[#allocation2 + $0x40] sm:$0xff]
        %v362 = vld [vmem:[#allocation2 + $0x48] sm:$0xff]
        %v363 = vld [vmem:[#allocation2 + $0x50] sm:$0xff]
        %v364 = vld [vmem:[#allocation2 + $0x58] sm:$0xff]
        %v365 = vld [vmem:[#allocation2 + $0x60] sm:$0xff]
        %v366 = vld [vmem:[#allocation2 + $0x68] sm:$0xff]
        %v367 = vld [vmem:[#allocation2 + $0x70] sm:$0xff]
        %v368 = vld [vmem:[#allocation2 + $0x78] sm:$0xff]
        %v369 = vld [vmem:[#allocation5] sm:$0xff]
        %v370 = vld [vmem:[#allocation5 + $0x8] sm:$0xff]
        %v371 = vld [vmem:[#allocation5 + $0x10] sm:$0xff]
        %v372 = vld [vmem:[#allocation5 + $0x18] sm:$0xff]
        %v373 = vld [vmem:[#allocation5 + $0x20] sm:$0xff]
        %v374 = vld [vmem:[#allocation5 + $0x28] sm:$0xff]
        %v375 = vld [vmem:[#allocation5 + $0x30] sm:$0xff]
        %v376 = vld [vmem:[#allocation5 + $0x38] sm:$0xff]
        %v377 = vld [vmem:[#allocation5 + $0x40] sm:$0xff]
        %v378 = vld [vmem:[#allocation5 + $0x48] sm:$0xff]
        %v379 = vld [vmem:[#allocation5 + $0x50] sm:$0xff]
        %v380 = vld [vmem:[#allocation5 + $0x58] sm:$0xff]
        %v381 = vld [vmem:[#allocation5 + $0x60] sm:$0xff]
        %v382 = vld [vmem:[#allocation5 + $0x68] sm:$0xff]
        %v383 = vld [vmem:[#allocation5 + $0x70] sm:$0xff]
        %v384 = vld [vmem:[#allocation5 + $0x78] sm:$0xff]
        %v385 = vld [vmem:[#allocation7] sm:$0xff]
        %v386 = vld [vmem:[#allocation7 + $0x8] sm:$0xff]
        %v387 = vld [vmem:[#allocation7 + $0x10] sm:$0xff]
        %v388 = vld [vmem:[#allocation7 + $0x18] sm:$0xff]
        %v389 = vld [vmem:[#allocation7 + $0x20] sm:$0xff]
        %v390 = vld [vmem:[#allocation7 + $0x28] sm:$0xff]
        %v391 = vld [vmem:[#allocation7 + $0x30] sm:$0xff]
        %v392 = vld [vmem:[#allocation7 + $0x38] sm:$0xff]
        %v393 = vld [vmem:[#allocation7 + $0x40] sm:$0xff]
        %v394 = vld [vmem:[#allocation7 + $0x48] sm:$0xff]
        %v395 = vld [vmem:[#allocation7 + $0x50] sm:$0xff]
        %v396 = vld [vmem:[#allocation7 + $0x58] sm:$0xff]
        %v397 = vld [vmem:[#allocation7 + $0x60] sm:$0xff]
        %v398 = vld [vmem:[#allocation7 + $0x68] sm:$0xff]
        %v399 = vld [vmem:[#allocation7 + $0x70] sm:$0xff]
        %v400 = vld [vmem:[#allocation7 + $0x78] sm:$0xff]
        %v401 = vld [vmem:[#allocation8] sm:$0xff]
        %v402 = vld [vmem:[#allocation8 + $0x8] sm:$0xff]
        %v403 = vld [vmem:[#allocation8 + $0x10] sm:$0xff]
        %v404 = vld [vmem:[#allocation8 + $0x18] sm:$0xff]
        %v405 = vld [vmem:[#allocation8 + $0x20] sm:$0xff]
        %v406 = vld [vmem:[#allocation8 + $0x28] sm:$0xff]
        %v407 = vld [vmem:[#allocation8 + $0x30] sm:$0xff]
        %v408 = vld [vmem:[#allocation8 + $0x38] sm:$0xff]
        %v409 = vld [vmem:[#allocation8 + $0x40] sm:$0xff]
        %v410 = vld [vmem:[#allocation8 + $0x48] sm:$0xff]
        %v411 = vld [vmem:[#allocation8 + $0x50] sm:$0xff]
        %v412 = vld [vmem:[#allocation8 + $0x58] sm:$0xff]
        %v413 = vld [vmem:[#allocation8 + $0x60] sm:$0xff]
        %v414 = vld [vmem:[#allocation8 + $0x68] sm:$0xff]
        %v415 = vld [vmem:[#allocation8 + $0x70] sm:$0xff]
        %v416 = vld [vmem:[#allocation8 + $0x78] sm:$0xff]
        %v417 = vld [vmem:[%s4] sm:$0x1]
        %v418 = vld [vmem:[%s5] sm:$0x1]
        %v420 = vlaneseq
        %v421 = vshrl.u32 %v420, 7
        %v422 = vsub.s32 0, %v421
        %v423 = vrot.slane %v417, %v422
        %425 = vmatprep.subr.mxu0 0.0
        %426 = vmatpush1.msra.mxu0 %v384
        %427 = vmatprep.subr.mxu0 0.0
        %428 = vmatpush1.msra.mxu0 %v383
        %429 = vmatprep.subr.mxu0 0.0
        %430 = vmatpush1.msra.mxu0 %v382
        %431 = vmatprep.subr.mxu0 0.0
        %432 = vmatpush1.msra.mxu0 %v381
        %433 = vmatprep.subr.mxu0 0.0
        %434 = vmatpush1.msra.mxu0 %v380
        %435 = vmatprep.subr.mxu0 0.0
        %436 = vmatpush1.msra.mxu0 %v379
        %437 = vmatprep.subr.mxu0 0.0
        %438 = vmatpush1.msra.mxu0 %v378
        %439 = vmatprep.subr.mxu0 0.0
        %440 = vmatpush1.msra.mxu0 %v377
        %441 = vmatprep.subr.mxu0 0.0
        %442 = vmatpush1.msra.mxu0 %v376
        %443 = vmatprep.subr.mxu0 0.0
        %444 = vmatpush1.msra.mxu0 %v375
        %445 = vmatprep.subr.mxu0 0.0
        %446 = vmatpush1.msra.mxu0 %v374
        %447 = vmatprep.subr.mxu0 0.0
        %448 = vmatpush1.msra.mxu0 %v373
        %449 = vmatprep.subr.mxu0 0.0
        %450 = vmatpush1.msra.mxu0 %v372
        %451 = vmatprep.subr.mxu0 0.0
        %452 = vmatpush1.msra.mxu0 %v371
        %453 = vmatprep.subr.mxu0 0.0
        %454 = vmatpush1.msra.mxu0 %v370
        %455 = vmatprep.subr.mxu0 0.0
        %456 = vmatpush1.msra.mxu0 %v369
        %457 = vmatprep.subr.mxu0 0.0
        %458 = vmatpush2.msra.mxu0 0.0
        %459 = vmatprep.subr.mxu0 0.0
        %460 = vmatpush2.msra.mxu0 0.0
        %461 = vmatprep.subr.mxu0 0.0
        %462 = vmatpush2.msra.mxu0 0.0
        %463 = vmatprep.subr.mxu0 0.0
        %464 = vmatpush2.msra.mxu0 0.0
        %465 = vmatprep.subr.mxu0 0.0
        %466 = vmatpush2.msra.mxu0 0.0
        %467 = vmatprep.subr.mxu0 0.0
        %468 = vmatpush2.msra.mxu0 0.0
        %469 = vmatprep.subr.mxu0 0.0
        %470 = vmatpush2.msra.mxu0 0.0
        %471 = vmatprep.subr.mxu0 0.0
        %472 = vmatpush2.msra.mxu0 0.0
        %473 = vmatprep.subr.mxu0 0.0
        %474 = vmatpush2.msra.mxu0 0.0
        %475 = vmatprep.subr.mxu0 0.0
        %476 = vmatpush2.msra.mxu0 0.0
        %477 = vmatprep.subr.mxu0 0.0
        %478 = vmatpush2.msra.mxu0 0.0
        %479 = vmatprep.subr.mxu0 0.0
        %480 = vmatpush2.msra.mxu0 0.0
        %481 = vmatprep.subr.mxu0 0.0
        %482 = vmatpush2.msra.mxu0 0.0
        %483 = vmatprep.subr.mxu0 0.0
        %484 = vmatpush2.msra.mxu0 0.0
        %485 = vmatprep.subr.mxu0 0.0
        %486 = vmatpush2.msra.mxu0 0.0
        %487 = vmatprep.subr.mxu0 0.0
        %488 = vmatpush2.msra.mxu0 0.0
        %489 = vmatprep.mubr.f32.mxu0 0.0
        %490 = vmatmul.mubr.f32.gmra.mxu0 %v352
        %v491 = vpop.f32.mrf.mxu0
        %v492 = vadd.f32 %v423, %v491
        %v493 = vpop.f32.mrf.mxu0
        %494 = vdwg.mxu0
        %v495 = vtanh.pop %v492
        %496 = vmatprep.subr.mxu0 0.0
        %497 = vmatpush1.msra.mxu0 %v416
        %498 = vmatprep.subr.mxu0 0.0
        %499 = vmatpush1.msra.mxu0 %v415
        %500 = vmatprep.subr.mxu0 0.0
        %501 = vmatpush1.msra.mxu0 %v414
        %502 = vmatprep.subr.mxu0 0.0
        %503 = vmatpush1.msra.mxu0 %v413
        %504 = vmatprep.subr.mxu0 0.0
        %505 = vmatpush1.msra.mxu0 %v412
        %506 = vmatprep.subr.mxu0 0.0
        %507 = vmatpush1.msra.mxu0 %v411
        %508 = vmatprep.subr.mxu0 0.0
        %509 = vmatpush1.msra.mxu0 %v410
        %510 = vmatprep.subr.mxu0 0.0
        %511 = vmatpush1.msra.mxu0 %v409
        %512 = vmatprep.subr.mxu0 0.0
        %513 = vmatpush1.msra.mxu0 %v408
        %514 = vmatprep.subr.mxu0 0.0
        %515 = vmatpush1.msra.mxu0 %v407
        %516 = vmatprep.subr.mxu0 0.0
        %517 = vmatpush1.msra.mxu0 %v406
        %518 = vmatprep.subr.mxu0 0.0
        %519 = vmatpush1.msra.mxu0 %v405
        %520 = vmatprep.subr.mxu0 0.0
        %521 = vmatpush1.msra.mxu0 %v404
        %522 = vmatprep.subr.mxu0 0.0
        %523 = vmatpush1.msra.mxu0 %v403
        %524 = vmatprep.subr.mxu0 0.0
        %525 = vmatpush1.msra.mxu0 %v402
        %526 = vmatprep.subr.mxu0 0.0
        %527 = vmatpush1.msra.mxu0 %v401
        %528 = vmatprep.subr.mxu0 0.0
        %529 = vmatpush2.msra.mxu0 0.0
        %530 = vmatprep.subr.mxu0 0.0
        %531 = vmatpush2.msra.mxu0 0.0
        %532 = vmatprep.subr.mxu0 0.0
        %533 = vmatpush2.msra.mxu0 0.0
        %534 = vmatprep.subr.mxu0 0.0
        %535 = vmatpush2.msra.mxu0 0.0
        %536 = vmatprep.subr.mxu0 0.0
        %537 = vmatpush2.msra.mxu0 0.0
        %538 = vmatprep.subr.mxu0 0.0
        %539 = vmatpush2.msra.mxu0 0.0
        %540 = vmatprep.subr.mxu0 0.0
        %541 = vmatpush2.msra.mxu0 0.0
        %542 = vmatprep.subr.mxu0 0.0
        %543 = vmatpush2.msra.mxu0 0.0
        %544 = vmatprep.subr.mxu0 0.0
        %545 = vmatpush2.msra.mxu0 0.0
        %546 = vmatprep.subr.mxu0 0.0
        %547 = vmatpush2.msra.mxu0 0.0
        %548 = vmatprep.subr.mxu0 0.0
        %549 = vmatpush2.msra.mxu0 0.0
        %550 = vmatprep.subr.mxu0 0.0
        %551 = vmatpush2.msra.mxu0 0.0
        %552 = vmatprep.subr.mxu0 0.0
        %553 = vmatpush2.msra.mxu0 0.0
        %554 = vmatprep.subr.mxu0 0.0
        %555 = vmatpush2.msra.mxu0 0.0
        %556 = vmatprep.subr.mxu0 0.0
        %557 = vmatpush2.msra.mxu0 0.0
        %558 = vmatprep.subr.mxu0 0.0
        %559 = vmatpush2.msra.mxu0 0.0
        %560 = vmatprep.mubr.f32.mxu0 0.0
        %561 = vmatmul.mubr.f32.gmra.mxu0 %v495
        %v562 = vpop.f32.mrf.mxu0
        %v563 = vadd.f32 0.0, %v562
        %v564 = vpop.f32.mrf.mxu0
        %565 = vdwg.mxu0
        %v566 = vsub.f32 %v351, %v563
        %v568 = vlaneseq
        %v569 = vshrl.u32 %v568, 7
        %v570 = vsub.s32 0, %v569
        %v571 = vrot.slane %v418, %v570
        %573 = vmatprep.subr.mxu0 0.0
        %574 = vmatpush1.msra.mxu0 %v368
        %575 = vmatprep.subr.mxu0 0.0
        %576 = vmatpush1.msra.mxu0 %v367
        %577 = vmatprep.subr.mxu0 0.0
        %578 = vmatpush1.msra.mxu0 %v366
        %579 = vmatprep.subr.mxu0 0.0
        %580 = vmatpush1.msra.mxu0 %v365
        %581 = vmatprep.subr.mxu0 0.0
        %582 = vmatpush1.msra.mxu0 %v364
        %583 = vmatprep.subr.mxu0 0.0
        %584 = vmatpush1.msra.mxu0 %v363
        %585 = vmatprep.subr.mxu0 0.0
        %586 = vmatpush1.msra.mxu0 %v362
        %587 = vmatprep.subr.mxu0 0.0
        %588 = vmatpush1.msra.mxu0 %v361
        %589 = vmatprep.subr.mxu0 0.0
        %590 = vmatpush1.msra.mxu0 %v360
        %591 = vmatprep.subr.mxu0 0.0
        %592 = vmatpush1.msra.mxu0 %v359
        %593 = vmatprep.subr.mxu0 0.0
        %594 = vmatpush1.msra.mxu0 %v358
        %595 = vmatprep.subr.mxu0 0.0
        %596 = vmatpush1.msra.mxu0 %v357
        %597 = vmatprep.subr.mxu0 0.0
        %598 = vmatpush1.msra.mxu0 %v356
        %599 = vmatprep.subr.mxu0 0.0
        %600 = vmatpush1.msra.mxu0 %v355
        %601 = vmatprep.subr.mxu0 0.0
        %602 = vmatpush1.msra.mxu0 %v354
        %603 = vmatprep.subr.mxu0 0.0
        %604 = vmatpush1.msra.mxu0 %v353
        %605 = vmatprep.subr.mxu0 0.0
        %606 = vmatpush2.msra.mxu0 0.0
        %607 = vmatprep.subr.mxu0 0.0
        %608 = vmatpush2.msra.mxu0 0.0
        %609 = vmatprep.subr.mxu0 0.0
        %610 = vmatpush2.msra.mxu0 0.0
        %611 = vmatprep.subr.mxu0 0.0
        %612 = vmatpush2.msra.mxu0 0.0
        %613 = vmatprep.subr.mxu0 0.0
        %614 = vmatpush2.msra.mxu0 0.0
        %615 = vmatprep.subr.mxu0 0.0
        %616 = vmatpush2.msra.mxu0 0.0
        %617 = vmatprep.subr.mxu0 0.0
        %618 = vmatpush2.msra.mxu0 0.0
        %619 = vmatprep.subr.mxu0 0.0
        %620 = vmatpush2.msra.mxu0 0.0
        %621 = vmatprep.subr.mxu0 0.0
        %622 = vmatpush2.msra.mxu0 0.0
        %623 = vmatprep.subr.mxu0 0.0
        %624 = vmatpush2.msra.mxu0 0.0
        %625 = vmatprep.subr.mxu0 0.0
        %626 = vmatpush2.msra.mxu0 0.0
        %627 = vmatprep.subr.mxu0 0.0
        %628 = vmatpush2.msra.mxu0 0.0
        %629 = vmatprep.subr.mxu0 0.0
        %630 = vmatpush2.msra.mxu0 0.0
        %631 = vmatprep.subr.mxu0 0.0
        %632 = vmatpush2.msra.mxu0 0.0
        %633 = vmatprep.subr.mxu0 0.0
        %634 = vmatpush2.msra.mxu0 0.0
        %635 = vmatprep.subr.mxu0 0.0
        %636 = vmatpush2.msra.mxu0 0.0
        %637 = vmatprep.mubr.f32.mxu0 0.0
        %638 = vmatmul.mubr.f32.gmra.mxu0 %v566
        %v639 = vpop.f32.mrf.mxu0
        %v640 = vadd.f32 %v571, %v639
        %v641 = vpop.f32.mrf.mxu0
        %642 = vdwg.mxu0
        %v643 = vtanh.pop %v640
        %644 = vmatprep.subr.mxu0 0.0
        %645 = vmatpush1.msra.mxu0 %v400
        %646 = vmatprep.subr.mxu0 0.0
        %647 = vmatpush1.msra.mxu0 %v399
        %648 = vmatprep.subr.mxu0 0.0
        %649 = vmatpush1.msra.mxu0 %v398
        %650 = vmatprep.subr.mxu0 0.0
        %651 = vmatpush1.msra.mxu0 %v397
        %652 = vmatprep.subr.mxu0 0.0
        %653 = vmatpush1.msra.mxu0 %v396
        %654 = vmatprep.subr.mxu0 0.0
        %655 = vmatpush1.msra.mxu0 %v395
        %656 = vmatprep.subr.mxu0 0.0
        %657 = vmatpush1.msra.mxu0 %v394
        %658 = vmatprep.subr.mxu0 0.0
        %659 = vmatpush1.msra.mxu0 %v393
        %660 = vmatprep.subr.mxu0 0.0
        %661 = vmatpush1.msra.mxu0 %v392
        %662 = vmatprep.subr.mxu0 0.0
        %663 = vmatpush1.msra.mxu0 %v391
        %664 = vmatprep.subr.mxu0 0.0
        %665 = vmatpush1.msra.mxu0 %v390
        %666 = vmatprep.subr.mxu0 0.0
        %667 = vmatpush1.msra.mxu0 %v389
        %668 = vmatprep.subr.mxu0 0.0
        %669 = vmatpush1.msra.mxu0 %v388
        %670 = vmatprep.subr.mxu0 0.0
        %671 = vmatpush1.msra.mxu0 %v387
        %672 = vmatprep.subr.mxu0 0.0
        %673 = vmatpush1.msra.mxu0 %v386
        %674 = vmatprep.subr.mxu0 0.0
        %675 = vmatpush1.msra.mxu0 %v385
        %676 = vmatprep.subr.mxu0 0.0
        %677 = vmatpush2.msra.mxu0 0.0
        %678 = vmatprep.subr.mxu0 0.0
        %679 = vmatpush2.msra.mxu0 0.0
        %680 = vmatprep.subr.mxu0 0.0
        %681 = vmatpush2.msra.mxu0 0.0
        %682 = vmatprep.subr.mxu0 0.0
        %683 = vmatpush2.msra.mxu0 0.0
        %684 = vmatprep.subr.mxu0 0.0
        %685 = vmatpush2.msra.mxu0 0.0
        %686 = vmatprep.subr.mxu0 0.0
        %687 = vmatpush2.msra.mxu0 0.0
        %688 = vmatprep.subr.mxu0 0.0
        %689 = vmatpush2.msra.mxu0 0.0
        %690 = vmatprep.subr.mxu0 0.0
        %691 = vmatpush2.msra.mxu0 0.0
        %692 = vmatprep.subr.mxu0 0.0
        %693 = vmatpush2.msra.mxu0 0.0
        %694 = vmatprep.subr.mxu0 0.0
        %695 = vmatpush2.msra.mxu0 0.0
        %696 = vmatprep.subr.mxu0 0.0
        %697 = vmatpush2.msra.mxu0 0.0
        %698 = vmatprep.subr.mxu0 0.0
        %699 = vmatpush2.msra.mxu0 0.0
        %700 = vmatprep.subr.mxu0 0.0
        %701 = vmatpush2.msra.mxu0 0.0
        %702 = vmatprep.subr.mxu0 0.0
        %703 = vmatpush2.msra.mxu0 0.0
        %704 = vmatprep.subr.mxu0 0.0
        %705 = vmatpush2.msra.mxu0 0.0
        %706 = vmatprep.subr.mxu0 0.0
        %707 = vmatpush2.msra.mxu0 0.0
        %708 = vmatprep.mubr.f32.mxu0 0.0
        %709 = vmatmul.mubr.f32.gmra.mxu0 %v643
        %v710 = vpop.f32.mrf.mxu0
        %v711 = vadd.f32 0.0, %v710
        %v712 = vpop.f32.mrf.mxu0
        %713 = vdwg.mxu0
        %v714 = vadd.f32 %v352, %v711
        %s715 = scalar_lea.vmem [#allocation2], 128
        %v716 = vld [vmem:[%s715] sm:$0xff]
        %v717 = vld [vmem:[%s715 + $0x8] sm:$0xff]
        %v718 = vld [vmem:[%s715 + $0x10] sm:$0xff]
        %v719 = vld [vmem:[%s715 + $0x18] sm:$0xff]
        %v720 = vld [vmem:[%s715 + $0x20] sm:$0xff]
        %v721 = vld [vmem:[%s715 + $0x28] sm:$0xff]
        %v722 = vld [vmem:[%s715 + $0x30] sm:$0xff]
        %v723 = vld [vmem:[%s715 + $0x38] sm:$0xff]
        %v724 = vld [vmem:[%s715 + $0x40] sm:$0xff]
        %v725 = vld [vmem:[%s715 + $0x48] sm:$0xff]
        %v726 = vld [vmem:[%s715 + $0x50] sm:$0xff]
        %v727 = vld [vmem:[%s715 + $0x58] sm:$0xff]
        %v728 = vld [vmem:[%s715 + $0x60] sm:$0xff]
        %v729 = vld [vmem:[%s715 + $0x68] sm:$0xff]
        %v730 = vld [vmem:[%s715 + $0x70] sm:$0xff]
        %v731 = vld [vmem:[%s715 + $0x78] sm:$0xff]
        %s732 = scalar_lea.vmem [#allocation5], 128
        %v733 = vld [vmem:[%s732] sm:$0xff]
        %v734 = vld [vmem:[%s732 + $0x8] sm:$0xff]
        %v735 = vld [vmem:[%s732 + $0x10] sm:$0xff]
        %v736 = vld [vmem:[%s732 + $0x18] sm:$0xff]
        %v737 = vld [vmem:[%s732 + $0x20] sm:$0xff]
        %v738 = vld [vmem:[%s732 + $0x28] sm:$0xff]
        %v739 = vld [vmem:[%s732 + $0x30] sm:$0xff]
        %v740 = vld [vmem:[%s732 + $0x38] sm:$0xff]
        %v741 = vld [vmem:[%s732 + $0x40] sm:$0xff]
        %v742 = vld [vmem:[%s732 + $0x48] sm:$0xff]
        %v743 = vld [vmem:[%s732 + $0x50] sm:$0xff]
        %v744 = vld [vmem:[%s732 + $0x58] sm:$0xff]
        %v745 = vld [vmem:[%s732 + $0x60] sm:$0xff]
        %v746 = vld [vmem:[%s732 + $0x68] sm:$0xff]
        %v747 = vld [vmem:[%s732 + $0x70] sm:$0xff]
        %v748 = vld [vmem:[%s732 + $0x78] sm:$0xff]
        %s749 = scalar_lea.vmem [#allocation7], 128
        %v750 = vld [vmem:[%s749] sm:$0xff]
        %v751 = vld [vmem:[%s749 + $0x8] sm:$0xff]
        %v752 = vld [vmem:[%s749 + $0x10] sm:$0xff]
        %v753 = vld [vmem:[%s749 + $0x18] sm:$0xff]
        %v754 = vld [vmem:[%s749 + $0x20] sm:$0xff]
        %v755 = vld [vmem:[%s749 + $0x28] sm:$0xff]
        %v756 = vld [vmem:[%s749 + $0x30] sm:$0xff]
        %v757 = vld [vmem:[%s749 + $0x38] sm:$0xff]
        %v758 = vld [vmem:[%s749 + $0x40] sm:$0xff]
        %v759 = vld [vmem:[%s749 + $0x48] sm:$0xff]
        %v760 = vld [vmem:[%s749 + $0x50] sm:$0xff]
        %v761 = vld [vmem:[%s749 + $0x58] sm:$0xff]
        %v762 = vld [vmem:[%s749 + $0x60] sm:$0xff]
        %v763 = vld [vmem:[%s749 + $0x68] sm:$0xff]
        %v764 = vld [vmem:[%s749 + $0x70] sm:$0xff]
        %v765 = vld [vmem:[%s749 + $0x78] sm:$0xff]
        %s766 = scalar_lea.vmem [#allocation8], 128
        %v767 = vld [vmem:[%s766] sm:$0xff]
        %v768 = vld [vmem:[%s766 + $0x8] sm:$0xff]
        %v769 = vld [vmem:[%s766 + $0x10] sm:$0xff]
        %v770 = vld [vmem:[%s766 + $0x18] sm:$0xff]
        %v771 = vld [vmem:[%s766 + $0x20] sm:$0xff]
        %v772 = vld [vmem:[%s766 + $0x28] sm:$0xff]
        %v773 = vld [vmem:[%s766 + $0x30] sm:$0xff]
        %v774 = vld [vmem:[%s766 + $0x38] sm:$0xff]
        %v775 = vld [vmem:[%s766 + $0x40] sm:$0xff]
        %v776 = vld [vmem:[%s766 + $0x48] sm:$0xff]
        %v777 = vld [vmem:[%s766 + $0x50] sm:$0xff]
        %v778 = vld [vmem:[%s766 + $0x58] sm:$0xff]
        %v779 = vld [vmem:[%s766 + $0x60] sm:$0xff]
        %v780 = vld [vmem:[%s766 + $0x68] sm:$0xff]
        %v781 = vld [vmem:[%s766 + $0x70] sm:$0xff]
        %v782 = vld [vmem:[%s766 + $0x78] sm:$0xff]
        %s783 = scalar_lea.vmem %s4, 1
        %v784 = vld [vmem:[%s783] sm:$0x1]
        %s785 = scalar_lea.vmem %s5, 1
        %v786 = vld [vmem:[%s785] sm:$0x1]
        %v788 = vlaneseq
        %v789 = vshrl.u32 %v788, 7
        %v790 = vsub.s32 0, %v789
        %v791 = vrot.slane %v784, %v790
        %793 = vmatprep.subr.mxu0 0.0
        %794 = vmatpush1.msra.mxu0 %v748
        %795 = vmatprep.subr.mxu0 0.0
        %796 = vmatpush1.msra.mxu0 %v747
        %797 = vmatprep.subr.mxu0 0.0
        %798 = vmatpush1.msra.mxu0 %v746
        %799 = vmatprep.subr.mxu0 0.0
        %800 = vmatpush1.msra.mxu0 %v745
        %801 = vmatprep.subr.mxu0 0.0
        %802 = vmatpush1.msra.mxu0 %v744
        %803 = vmatprep.subr.mxu0 0.0
        %804 = vmatpush1.msra.mxu0 %v743
        %805 = vmatprep.subr.mxu0 0.0
        %806 = vmatpush1.msra.mxu0 %v742
        %807 = vmatprep.subr.mxu0 0.0
        %808 = vmatpush1.msra.mxu0 %v741
        %809 = vmatprep.subr.mxu0 0.0
        %810 = vmatpush1.msra.mxu0 %v740
        %811 = vmatprep.subr.mxu0 0.0
        %812 = vmatpush1.msra.mxu0 %v739
        %813 = vmatprep.subr.mxu0 0.0
        %814 = vmatpush1.msra.mxu0 %v738
        %815 = vmatprep.subr.mxu0 0.0
        %816 = vmatpush1.msra.mxu0 %v737
        %817 = vmatprep.subr.mxu0 0.0
        %818 = vmatpush1.msra.mxu0 %v736
        %819 = vmatprep.subr.mxu0 0.0
        %820 = vmatpush1.msra.mxu0 %v735
        %821 = vmatprep.subr.mxu0 0.0
        %822 = vmatpush1.msra.mxu0 %v734
        %823 = vmatprep.subr.mxu0 0.0
        %824 = vmatpush1.msra.mxu0 %v733
        %825 = vmatprep.subr.mxu0 0.0
        %826 = vmatpush2.msra.mxu0 0.0
        %827 = vmatprep.subr.mxu0 0.0
        %828 = vmatpush2.msra.mxu0 0.0
        %829 = vmatprep.subr.mxu0 0.0
        %830 = vmatpush2.msra.mxu0 0.0
        %831 = vmatprep.subr.mxu0 0.0
        %832 = vmatpush2.msra.mxu0 0.0
        %833 = vmatprep.subr.mxu0 0.0
        %834 = vmatpush2.msra.mxu0 0.0
        %835 = vmatprep.subr.mxu0 0.0
        %836 = vmatpush2.msra.mxu0 0.0
        %837 = vmatprep.subr.mxu0 0.0
        %838 = vmatpush2.msra.mxu0 0.0
        %839 = vmatprep.subr.mxu0 0.0
        %840 = vmatpush2.msra.mxu0 0.0
        %841 = vmatprep.subr.mxu0 0.0
        %842 = vmatpush2.msra.mxu0 0.0
        %843 = vmatprep.subr.mxu0 0.0
        %844 = vmatpush2.msra.mxu0 0.0
        %845 = vmatprep.subr.mxu0 0.0
        %846 = vmatpush2.msra.mxu0 0.0
        %847 = vmatprep.subr.mxu0 0.0
        %848 = vmatpush2.msra.mxu0 0.0
        %849 = vmatprep.subr.mxu0 0.0
        %850 = vmatpush2.msra.mxu0 0.0
        %851 = vmatprep.subr.mxu0 0.0
        %852 = vmatpush2.msra.mxu0 0.0
        %853 = vmatprep.subr.mxu0 0.0
        %854 = vmatpush2.msra.mxu0 0.0
        %855 = vmatprep.subr.mxu0 0.0
        %856 = vmatpush2.msra.mxu0 0.0
        %857 = vmatprep.mubr.f32.mxu0 0.0
        %858 = vmatmul.mubr.f32.gmra.mxu0 %v714
        %v859 = vpop.f32.mrf.mxu0
        %v860 = vadd.f32 %v791, %v859
        %v861 = vpop.f32.mrf.mxu0
        %862 = vdwg.mxu0
        %v863 = vtanh.pop %v860
        %864 = vmatprep.subr.mxu0 0.0
        %865 = vmatpush1.msra.mxu0 %v782
        %866 = vmatprep.subr.mxu0 0.0
        %867 = vmatpush1.msra.mxu0 %v781
        %868 = vmatprep.subr.mxu0 0.0
        %869 = vmatpush1.msra.mxu0 %v780
        %870 = vmatprep.subr.mxu0 0.0
        %871 = vmatpush1.msra.mxu0 %v779
        %872 = vmatprep.subr.mxu0 0.0
        %873 = vmatpush1.msra.mxu0 %v778
        %874 = vmatprep.subr.mxu0 0.0
        %875 = vmatpush1.msra.mxu0 %v777
        %876 = vmatprep.subr.mxu0 0.0
        %877 = vmatpush1.msra.mxu0 %v776
        %878 = vmatprep.subr.mxu0 0.0
        %879 = vmatpush1.msra.mxu0 %v775
        %880 = vmatprep.subr.mxu0 0.0
        %881 = vmatpush1.msra.mxu0 %v774
        %882 = vmatprep.subr.mxu0 0.0
        %883 = vmatpush1.msra.mxu0 %v773
        %884 = vmatprep.subr.mxu0 0.0
        %885 = vmatpush1.msra.mxu0 %v772
        %886 = vmatprep.subr.mxu0 0.0
        %887 = vmatpush1.msra.mxu0 %v771
        %888 = vmatprep.subr.mxu0 0.0
        %889 = vmatpush1.msra.mxu0 %v770
        %890 = vmatprep.subr.mxu0 0.0
        %891 = vmatpush1.msra.mxu0 %v769
        %892 = vmatprep.subr.mxu0 0.0
        %893 = vmatpush1.msra.mxu0 %v768
        %894 = vmatprep.subr.mxu0 0.0
        %895 = vmatpush1.msra.mxu0 %v767
        %896 = vmatprep.subr.mxu0 0.0
        %897 = vmatpush2.msra.mxu0 0.0
        %898 = vmatprep.subr.mxu0 0.0
        %899 = vmatpush2.msra.mxu0 0.0
        %900 = vmatprep.subr.mxu0 0.0
        %901 = vmatpush2.msra.mxu0 0.0
        %902 = vmatprep.subr.mxu0 0.0
        %903 = vmatpush2.msra.mxu0 0.0
        %904 = vmatprep.subr.mxu0 0.0
        %905 = vmatpush2.msra.mxu0 0.0
        %906 = vmatprep.subr.mxu0 0.0
        %907 = vmatpush2.msra.mxu0 0.0
        %908 = vmatprep.subr.mxu0 0.0
        %909 = vmatpush2.msra.mxu0 0.0
        %910 = vmatprep.subr.mxu0 0.0
        %911 = vmatpush2.msra.mxu0 0.0
        %912 = vmatprep.subr.mxu0 0.0
        %913 = vmatpush2.msra.mxu0 0.0
        %914 = vmatprep.subr.mxu0 0.0
        %915 = vmatpush2.msra.mxu0 0.0
        %916 = vmatprep.subr.mxu0 0.0
        %917 = vmatpush2.msra.mxu0 0.0
        %918 = vmatprep.subr.mxu0 0.0
        %919 = vmatpush2.msra.mxu0 0.0
        %920 = vmatprep.subr.mxu0 0.0
        %921 = vmatpush2.msra.mxu0 0.0
        %922 = vmatprep.subr.mxu0 0.0
        %923 = vmatpush2.msra.mxu0 0.0
        %924 = vmatprep.subr.mxu0 0.0
        %925 = vmatpush2.msra.mxu0 0.0
        %926 = vmatprep.subr.mxu0 0.0
        %927 = vmatpush2.msra.mxu0 0.0
        %928 = vmatprep.mubr.f32.mxu0 0.0
        %929 = vmatmul.mubr.f32.gmra.mxu0 %v863
        %v930 = vpop.f32.mrf.mxu0
        %v931 = vadd.f32 0.0, %v930
        %v932 = vpop.f32.mrf.mxu0
        %933 = vdwg.mxu0
        %v934 = vsub.f32 %v566, %v931
        %v936 = vlaneseq
        %v937 = vshrl.u32 %v936, 7
        %v938 = vsub.s32 0, %v937
        %v939 = vrot.slane %v786, %v938
        %941 = vmatprep.subr.mxu0 0.0
        %942 = vmatpush1.msra.mxu0 %v731
        %943 = vmatprep.subr.mxu0 0.0
        %944 = vmatpush1.msra.mxu0 %v730
        %945 = vmatprep.subr.mxu0 0.0
        %946 = vmatpush1.msra.mxu0 %v729
        %947 = vmatprep.subr.mxu0 0.0
        %948 = vmatpush1.msra.mxu0 %v728
        %949 = vmatprep.subr.mxu0 0.0
        %950 = vmatpush1.msra.mxu0 %v727
        %951 = vmatprep.subr.mxu0 0.0
        %952 = vmatpush1.msra.mxu0 %v726
        %953 = vmatprep.subr.mxu0 0.0
        %954 = vmatpush1.msra.mxu0 %v725
        %955 = vmatprep.subr.mxu0 0.0
        %956 = vmatpush1.msra.mxu0 %v724
        %957 = vmatprep.subr.mxu0 0.0
        %958 = vmatpush1.msra.mxu0 %v723
        %959 = vmatprep.subr.mxu0 0.0
        %960 = vmatpush1.msra.mxu0 %v722
        %961 = vmatprep.subr.mxu0 0.0
        %962 = vmatpush1.msra.mxu0 %v721
        %963 = vmatprep.subr.mxu0 0.0
        %964 = vmatpush1.msra.mxu0 %v720
        %965 = vmatprep.subr.mxu0 0.0
        %966 = vmatpush1.msra.mxu0 %v719
        %967 = vmatprep.subr.mxu0 0.0
        %968 = vmatpush1.msra.mxu0 %v718
        %969 = vmatprep.subr.mxu0 0.0
        %970 = vmatpush1.msra.mxu0 %v717
        %971 = vmatprep.subr.mxu0 0.0
        %972 = vmatpush1.msra.mxu0 %v716
        %973 = vmatprep.subr.mxu0 0.0
        %974 = vmatpush2.msra.mxu0 0.0
        %975 = vmatprep.subr.mxu0 0.0
        %976 = vmatpush2.msra.mxu0 0.0
        %977 = vmatprep.subr.mxu0 0.0
        %978 = vmatpush2.msra.mxu0 0.0
        %979 = vmatprep.subr.mxu0 0.0
        %980 = vmatpush2.msra.mxu0 0.0
        %981 = vmatprep.subr.mxu0 0.0
        %982 = vmatpush2.msra.mxu0 0.0
        %983 = vmatprep.subr.mxu0 0.0
        %984 = vmatpush2.msra.mxu0 0.0
        %985 = vmatprep.subr.mxu0 0.0
        %986 = vmatpush2.msra.mxu0 0.0
        %987 = vmatprep.subr.mxu0 0.0
        %988 = vmatpush2.msra.mxu0 0.0
        %989 = vmatprep.subr.mxu0 0.0
        %990 = vmatpush2.msra.mxu0 0.0
        %991 = vmatprep.subr.mxu0 0.0
        %992 = vmatpush2.msra.mxu0 0.0
        %993 = vmatprep.subr.mxu0 0.0
        %994 = vmatpush2.msra.mxu0 0.0
        %995 = vmatprep.subr.mxu0 0.0
        %996 = vmatpush2.msra.mxu0 0.0
        %997 = vmatprep.subr.mxu0 0.0
        %998 = vmatpush2.msra.mxu0 0.0
        %999 = vmatprep.subr.mxu0 0.0
        %1000 = vmatpush2.msra.mxu0 0.0
        %1001 = vmatprep.subr.mxu0 0.0
        %1002 = vmatpush2.msra.mxu0 0.0
        %1003 = vmatprep.subr.mxu0 0.0
        %1004 = vmatpush2.msra.mxu0 0.0
        %1005 = vmatprep.mubr.f32.mxu0 0.0
        %1006 = vmatmul.mubr.f32.gmra.mxu0 %v934
        %v1007 = vpop.f32.mrf.mxu0
        %v1008 = vadd.f32 %v939, %v1007
        %v1009 = vpop.f32.mrf.mxu0
        %1010 = vdwg.mxu0
        %v1011 = vtanh.pop %v1008
        %1012 = vmatprep.subr.mxu0 0.0
        %1013 = vmatpush1.msra.mxu0 %v765
        %1014 = vmatprep.subr.mxu0 0.0
        %1015 = vmatpush1.msra.mxu0 %v764
        %1016 = vmatprep.subr.mxu0 0.0
        %1017 = vmatpush1.msra.mxu0 %v763
        %1018 = vmatprep.subr.mxu0 0.0
        %1019 = vmatpush1.msra.mxu0 %v762
        %1020 = vmatprep.subr.mxu0 0.0
        %1021 = vmatpush1.msra.mxu0 %v761
        %1022 = vmatprep.subr.mxu0 0.0
        %1023 = vmatpush1.msra.mxu0 %v760
        %1024 = vmatprep.subr.mxu0 0.0
        %1025 = vmatpush1.msra.mxu0 %v759
        %1026 = vmatprep.subr.mxu0 0.0
        %1027 = vmatpush1.msra.mxu0 %v758
        %1028 = vmatprep.subr.mxu0 0.0
        %1029 = vmatpush1.msra.mxu0 %v757
        %1030 = vmatprep.subr.mxu0 0.0
        %1031 = vmatpush1.msra.mxu0 %v756
        %1032 = vmatprep.subr.mxu0 0.0
        %1033 = vmatpush1.msra.mxu0 %v755
        %1034 = vmatprep.subr.mxu0 0.0
        %1035 = vmatpush1.msra.mxu0 %v754
        %1036 = vmatprep.subr.mxu0 0.0
        %1037 = vmatpush1.msra.mxu0 %v753
        %1038 = vmatprep.subr.mxu0 0.0
        %1039 = vmatpush1.msra.mxu0 %v752
        %1040 = vmatprep.subr.mxu0 0.0
        %1041 = vmatpush1.msra.mxu0 %v751
        %1042 = vmatprep.subr.mxu0 0.0
        %1043 = vmatpush1.msra.mxu0 %v750
        %1044 = vmatprep.subr.mxu0 0.0
        %1045 = vmatpush2.msra.mxu0 0.0
        %1046 = vmatprep.subr.mxu0 0.0
        %1047 = vmatpush2.msra.mxu0 0.0
        %1048 = vmatprep.subr.mxu0 0.0
        %1049 = vmatpush2.msra.mxu0 0.0
        %1050 = vmatprep.subr.mxu0 0.0
        %1051 = vmatpush2.msra.mxu0 0.0
        %1052 = vmatprep.subr.mxu0 0.0
        %1053 = vmatpush2.msra.mxu0 0.0
        %1054 = vmatprep.subr.mxu0 0.0
        %1055 = vmatpush2.msra.mxu0 0.0
        %1056 = vmatprep.subr.mxu0 0.0
        %1057 = vmatpush2.msra.mxu0 0.0
        %1058 = vmatprep.subr.mxu0 0.0
        %1059 = vmatpush2.msra.mxu0 0.0
        %1060 = vmatprep.subr.mxu0 0.0
        %1061 = vmatpush2.msra.mxu0 0.0
        %1062 = vmatprep.subr.mxu0 0.0
        %1063 = vmatpush2.msra.mxu0 0.0
        %1064 = vmatprep.subr.mxu0 0.0
        %1065 = vmatpush2.msra.mxu0 0.0
        %1066 = vmatprep.subr.mxu0 0.0
        %1067 = vmatpush2.msra.mxu0 0.0
        %1068 = vmatprep.subr.mxu0 0.0
        %1069 = vmatpush2.msra.mxu0 0.0
        %1070 = vmatprep.subr.mxu0 0.0
        %1071 = vmatpush2.msra.mxu0 0.0
        %1072 = vmatprep.subr.mxu0 0.0
        %1073 = vmatpush2.msra.mxu0 0.0
        %1074 = vmatprep.subr.mxu0 0.0
        %1075 = vmatpush2.msra.mxu0 0.0
        %1076 = vmatprep.mubr.f32.mxu0 0.0
        %1077 = vmatmul.mubr.f32.gmra.mxu0 %v1011
        %v1078 = vpop.f32.mrf.mxu0
        %v1079 = vadd.f32 0.0, %v1078
        %v1080 = vpop.f32.mrf.mxu0
        %1081 = vdwg.mxu0
        %v1082 = vadd.f32 %v714, %v1079
        %s1083 = scalar_lea.vmem [#allocation2], 256
        %v1084 = vld [vmem:[%s1083] sm:$0xff]
        %v1085 = vld [vmem:[%s1083 + $0x8] sm:$0xff]
        %v1086 = vld [vmem:[%s1083 + $0x10] sm:$0xff]
        %v1087 = vld [vmem:[%s1083 + $0x18] sm:$0xff]
        %v1088 = vld [vmem:[%s1083 + $0x20] sm:$0xff]
        %v1089 = vld [vmem:[%s1083 + $0x28] sm:$0xff]
        %v1090 = vld [vmem:[%s1083 + $0x30] sm:$0xff]
        %v1091 = vld [vmem:[%s1083 + $0x38] sm:$0xff]
        %v1092 = vld [vmem:[%s1083 + $0x40] sm:$0xff]
        %v1093 = vld [vmem:[%s1083 + $0x48] sm:$0xff]
        %v1094 = vld [vmem:[%s1083 + $0x50] sm:$0xff]
        %v1095 = vld [vmem:[%s1083 + $0x58] sm:$0xff]
        %v1096 = vld [vmem:[%s1083 + $0x60] sm:$0xff]
        %v1097 = vld [vmem:[%s1083 + $0x68] sm:$0xff]
        %v1098 = vld [vmem:[%s1083 + $0x70] sm:$0xff]
        %v1099 = vld [vmem:[%s1083 + $0x78] sm:$0xff]
        %s1100 = scalar_lea.vmem [#allocation5], 256
        %v1101 = vld [vmem:[%s1100] sm:$0xff]
        %v1102 = vld [vmem:[%s1100 + $0x8] sm:$0xff]
        %v1103 = vld [vmem:[%s1100 + $0x10] sm:$0xff]
        %v1104 = vld [vmem:[%s1100 + $0x18] sm:$0xff]
        %v1105 = vld [vmem:[%s1100 + $0x20] sm:$0xff]
        %v1106 = vld [vmem:[%s1100 + $0x28] sm:$0xff]
        %v1107 = vld [vmem:[%s1100 + $0x30] sm:$0xff]
        %v1108 = vld [vmem:[%s1100 + $0x38] sm:$0xff]
        %v1109 = vld [vmem:[%s1100 + $0x40] sm:$0xff]
        %v1110 = vld [vmem:[%s1100 + $0x48] sm:$0xff]
        %v1111 = vld [vmem:[%s1100 + $0x50] sm:$0xff]
        %v1112 = vld [vmem:[%s1100 + $0x58] sm:$0xff]
        %v1113 = vld [vmem:[%s1100 + $0x60] sm:$0xff]
        %v1114 = vld [vmem:[%s1100 + $0x68] sm:$0xff]
        %v1115 = vld [vmem:[%s1100 + $0x70] sm:$0xff]
        %v1116 = vld [vmem:[%s1100 + $0x78] sm:$0xff]
        %s1117 = scalar_lea.vmem [#allocation7], 256
        %v1118 = vld [vmem:[%s1117] sm:$0xff]
        %v1119 = vld [vmem:[%s1117 + $0x8] sm:$0xff]
        %v1120 = vld [vmem:[%s1117 + $0x10] sm:$0xff]
        %v1121 = vld [vmem:[%s1117 + $0x18] sm:$0xff]
        %v1122 = vld [vmem:[%s1117 + $0x20] sm:$0xff]
        %v1123 = vld [vmem:[%s1117 + $0x28] sm:$0xff]
        %v1124 = vld [vmem:[%s1117 + $0x30] sm:$0xff]
        %v1125 = vld [vmem:[%s1117 + $0x38] sm:$0xff]
        %v1126 = vld [vmem:[%s1117 + $0x40] sm:$0xff]
        %v1127 = vld [vmem:[%s1117 + $0x48] sm:$0xff]
        %v1128 = vld [vmem:[%s1117 + $0x50] sm:$0xff]
        %v1129 = vld [vmem:[%s1117 + $0x58] sm:$0xff]
        %v1130 = vld [vmem:[%s1117 + $0x60] sm:$0xff]
        %v1131 = vld [vmem:[%s1117 + $0x68] sm:$0xff]
        %v1132 = vld [vmem:[%s1117 + $0x70] sm:$0xff]
        %v1133 = vld [vmem:[%s1117 + $0x78] sm:$0xff]
        %s1134 = scalar_lea.vmem [#allocation8], 256
        %v1135 = vld [vmem:[%s1134] sm:$0xff]
        %v1136 = vld [vmem:[%s1134 + $0x8] sm:$0xff]
        %v1137 = vld [vmem:[%s1134 + $0x10] sm:$0xff]
        %v1138 = vld [vmem:[%s1134 + $0x18] sm:$0xff]
        %v1139 = vld [vmem:[%s1134 + $0x20] sm:$0xff]
        %v1140 = vld [vmem:[%s1134 + $0x28] sm:$0xff]
        %v1141 = vld [vmem:[%s1134 + $0x30] sm:$0xff]
        %v1142 = vld [vmem:[%s1134 + $0x38] sm:$0xff]
        %v1143 = vld [vmem:[%s1134 + $0x40] sm:$0xff]
        %v1144 = vld [vmem:[%s1134 + $0x48] sm:$0xff]
        %v1145 = vld [vmem:[%s1134 + $0x50] sm:$0xff]
        %v1146 = vld [vmem:[%s1134 + $0x58] sm:$0xff]
        %v1147 = vld [vmem:[%s1134 + $0x60] sm:$0xff]
        %v1148 = vld [vmem:[%s1134 + $0x68] sm:$0xff]
        %v1149 = vld [vmem:[%s1134 + $0x70] sm:$0xff]
        %v1150 = vld [vmem:[%s1134 + $0x78] sm:$0xff]
        %s1151 = scalar_lea.vmem %s4, 2
        %v1152 = vld [vmem:[%s1151] sm:$0x1]
        %s1153 = scalar_lea.vmem %s5, 2
        %v1154 = vld [vmem:[%s1153] sm:$0x1]
        %v1156 = vlaneseq
        %v1157 = vshrl.u32 %v1156, 7
        %v1158 = vsub.s32 0, %v1157
        %v1159 = vrot.slane %v1152, %v1158
        %1161 = vmatprep.subr.mxu0 0.0
        %1162 = vmatpush1.msra.mxu0 %v1116
        %1163 = vmatprep.subr.mxu0 0.0
        %1164 = vmatpush1.msra.mxu0 %v1115
        %1165 = vmatprep.subr.mxu0 0.0
        %1166 = vmatpush1.msra.mxu0 %v1114
        %1167 = vmatprep.subr.mxu0 0.0
        %1168 = vmatpush1.msra.mxu0 %v1113
        %1169 = vmatprep.subr.mxu0 0.0
        %1170 = vmatpush1.msra.mxu0 %v1112
        %1171 = vmatprep.subr.mxu0 0.0
        %1172 = vmatpush1.msra.mxu0 %v1111
        %1173 = vmatprep.subr.mxu0 0.0
        %1174 = vmatpush1.msra.mxu0 %v1110
        %1175 = vmatprep.subr.mxu0 0.0
        %1176 = vmatpush1.msra.mxu0 %v1109
        %1177 = vmatprep.subr.mxu0 0.0
        %1178 = vmatpush1.msra.mxu0 %v1108
        %1179 = vmatprep.subr.mxu0 0.0
        %1180 = vmatpush1.msra.mxu0 %v1107
        %1181 = vmatprep.subr.mxu0 0.0
        %1182 = vmatpush1.msra.mxu0 %v1106
        %1183 = vmatprep.subr.mxu0 0.0
        %1184 = vmatpush1.msra.mxu0 %v1105
        %1185 = vmatprep.subr.mxu0 0.0
        %1186 = vmatpush1.msra.mxu0 %v1104
        %1187 = vmatprep.subr.mxu0 0.0
        %1188 = vmatpush1.msra.mxu0 %v1103
        %1189 = vmatprep.subr.mxu0 0.0
        %1190 = vmatpush1.msra.mxu0 %v1102
        %1191 = vmatprep.subr.mxu0 0.0
        %1192 = vmatpush1.msra.mxu0 %v1101
        %1193 = vmatprep.subr.mxu0 0.0
        %1194 = vmatpush2.msra.mxu0 0.0
        %1195 = vmatprep.subr.mxu0 0.0
        %1196 = vmatpush2.msra.mxu0 0.0
        %1197 = vmatprep.subr.mxu0 0.0
        %1198 = vmatpush2.msra.mxu0 0.0
        %1199 = vmatprep.subr.mxu0 0.0
        %1200 = vmatpush2.msra.mxu0 0.0
        %1201 = vmatprep.subr.mxu0 0.0
        %1202 = vmatpush2.msra.mxu0 0.0
        %1203 = vmatprep.subr.mxu0 0.0
        %1204 = vmatpush2.msra.mxu0 0.0
        %1205 = vmatprep.subr.mxu0 0.0
        %1206 = vmatpush2.msra.mxu0 0.0
        %1207 = vmatprep.subr.mxu0 0.0
        %1208 = vmatpush2.msra.mxu0 0.0
        %1209 = vmatprep.subr.mxu0 0.0
        %1210 = vmatpush2.msra.mxu0 0.0
        %1211 = vmatprep.subr.mxu0 0.0
        %1212 = vmatpush2.msra.mxu0 0.0
        %1213 = vmatprep.subr.mxu0 0.0
        %1214 = vmatpush2.msra.mxu0 0.0
        %1215 = vmatprep.subr.mxu0 0.0
        %1216 = vmatpush2.msra.mxu0 0.0
        %1217 = vmatprep.subr.mxu0 0.0
        %1218 = vmatpush2.msra.mxu0 0.0
        %1219 = vmatprep.subr.mxu0 0.0
        %1220 = vmatpush2.msra.mxu0 0.0
        %1221 = vmatprep.subr.mxu0 0.0
        %1222 = vmatpush2.msra.mxu0 0.0
        %1223 = vmatprep.subr.mxu0 0.0
        %1224 = vmatpush2.msra.mxu0 0.0
        %1225 = vmatprep.mubr.f32.mxu0 0.0
        %1226 = vmatmul.mubr.f32.gmra.mxu0 %v1082
        %v1227 = vpop.f32.mrf.mxu0
        %v1228 = vadd.f32 %v1159, %v1227
        %v1229 = vpop.f32.mrf.mxu0
        %1230 = vdwg.mxu0
        %v1231 = vtanh.pop %v1228
        %1232 = vmatprep.subr.mxu0 0.0
        %1233 = vmatpush1.msra.mxu0 %v1150
        %1234 = vmatprep.subr.mxu0 0.0
        %1235 = vmatpush1.msra.mxu0 %v1149
        %1236 = vmatprep.subr.mxu0 0.0
        %1237 = vmatpush1.msra.mxu0 %v1148
        %1238 = vmatprep.subr.mxu0 0.0
        %1239 = vmatpush1.msra.mxu0 %v1147
        %1240 = vmatprep.subr.mxu0 0.0
        %1241 = vmatpush1.msra.mxu0 %v1146
        %1242 = vmatprep.subr.mxu0 0.0
        %1243 = vmatpush1.msra.mxu0 %v1145
        %1244 = vmatprep.subr.mxu0 0.0
        %1245 = vmatpush1.msra.mxu0 %v1144
        %1246 = vmatprep.subr.mxu0 0.0
        %1247 = vmatpush1.msra.mxu0 %v1143
        %1248 = vmatprep.subr.mxu0 0.0
        %1249 = vmatpush1.msra.mxu0 %v1142
        %1250 = vmatprep.subr.mxu0 0.0
        %1251 = vmatpush1.msra.mxu0 %v1141
        %1252 = vmatprep.subr.mxu0 0.0
        %1253 = vmatpush1.msra.mxu0 %v1140
        %1254 = vmatprep.subr.mxu0 0.0
        %1255 = vmatpush1.msra.mxu0 %v1139
        %1256 = vmatprep.subr.mxu0 0.0
        %1257 = vmatpush1.msra.mxu0 %v1138
        %1258 = vmatprep.subr.mxu0 0.0
        %1259 = vmatpush1.msra.mxu0 %v1137
        %1260 = vmatprep.subr.mxu0 0.0
        %1261 = vmatpush1.msra.mxu0 %v1136
        %1262 = vmatprep.subr.mxu0 0.0
        %1263 = vmatpush1.msra.mxu0 %v1135
        %1264 = vmatprep.subr.mxu0 0.0
        %1265 = vmatpush2.msra.mxu0 0.0
        %1266 = vmatprep.subr.mxu0 0.0
        %1267 = vmatpush2.msra.mxu0 0.0
        %1268 = vmatprep.subr.mxu0 0.0
        %1269 = vmatpush2.msra.mxu0 0.0
        %1270 = vmatprep.subr.mxu0 0.0
        %1271 = vmatpush2.msra.mxu0 0.0
        %1272 = vmatprep.subr.mxu0 0.0
        %1273 = vmatpush2.msra.mxu0 0.0
        %1274 = vmatprep.subr.mxu0 0.0
        %1275 = vmatpush2.msra.mxu0 0.0
        %1276 = vmatprep.subr.mxu0 0.0
        %1277 = vmatpush2.msra.mxu0 0.0
        %1278 = vmatprep.subr.mxu0 0.0
        %1279 = vmatpush2.msra.mxu0 0.0
        %1280 = vmatprep.subr.mxu0 0.0
        %1281 = vmatpush2.msra.mxu0 0.0
        %1282 = vmatprep.subr.mxu0 0.0
        %1283 = vmatpush2.msra.mxu0 0.0
        %1284 = vmatprep.subr.mxu0 0.0
        %1285 = vmatpush2.msra.mxu0 0.0
        %1286 = vmatprep.subr.mxu0 0.0
        %1287 = vmatpush2.msra.mxu0 0.0
        %1288 = vmatprep.subr.mxu0 0.0
        %1289 = vmatpush2.msra.mxu0 0.0
        %1290 = vmatprep.subr.mxu0 0.0
        %1291 = vmatpush2.msra.mxu0 0.0
        %1292 = vmatprep.subr.mxu0 0.0
        %1293 = vmatpush2.msra.mxu0 0.0
        %1294 = vmatprep.subr.mxu0 0.0
        %1295 = vmatpush2.msra.mxu0 0.0
        %1296 = vmatprep.mubr.f32.mxu0 0.0
        %1297 = vmatmul.mubr.f32.gmra.mxu0 %v1231
        %v1298 = vpop.f32.mrf.mxu0
        %v1299 = vadd.f32 0.0, %v1298
        %v1300 = vpop.f32.mrf.mxu0
        %1301 = vdwg.mxu0
        %v1302 = vsub.f32 %v934, %v1299
        %v1304 = vlaneseq
        %v1305 = vshrl.u32 %v1304, 7
        %v1306 = vsub.s32 0, %v1305
        %v1307 = vrot.slane %v1154, %v1306
        %1309 = vmatprep.subr.mxu0 0.0
        %1310 = vmatpush1.msra.mxu0 %v1099
        %1311 = vmatprep.subr.mxu0 0.0
        %1312 = vmatpush1.msra.mxu0 %v1098
        %1313 = vmatprep.subr.mxu0 0.0
        %1314 = vmatpush1.msra.mxu0 %v1097
        %1315 = vmatprep.subr.mxu0 0.0
        %1316 = vmatpush1.msra.mxu0 %v1096
        %1317 = vmatprep.subr.mxu0 0.0
        %1318 = vmatpush1.msra.mxu0 %v1095
        %1319 = vmatprep.subr.mxu0 0.0
        %1320 = vmatpush1.msra.mxu0 %v1094
        %1321 = vmatprep.subr.mxu0 0.0
        %1322 = vmatpush1.msra.mxu0 %v1093
        %1323 = vmatprep.subr.mxu0 0.0
        %1324 = vmatpush1.msra.mxu0 %v1092
        %1325 = vmatprep.subr.mxu0 0.0
        %1326 = vmatpush1.msra.mxu0 %v1091
        %1327 = vmatprep.subr.mxu0 0.0
        %1328 = vmatpush1.msra.mxu0 %v1090
        %1329 = vmatprep.subr.mxu0 0.0
        %1330 = vmatpush1.msra.mxu0 %v1089
        %1331 = vmatprep.subr.mxu0 0.0
        %1332 = vmatpush1.msra.mxu0 %v1088
        %1333 = vmatprep.subr.mxu0 0.0
        %1334 = vmatpush1.msra.mxu0 %v1087
        %1335 = vmatprep.subr.mxu0 0.0
        %1336 = vmatpush1.msra.mxu0 %v1086
        %1337 = vmatprep.subr.mxu0 0.0
        %1338 = vmatpush1.msra.mxu0 %v1085
        %1339 = vmatprep.subr.mxu0 0.0
        %1340 = vmatpush1.msra.mxu0 %v1084
        %1341 = vmatprep.subr.mxu0 0.0
        %1342 = vmatpush2.msra.mxu0 0.0
        %1343 = vmatprep.subr.mxu0 0.0
        %1344 = vmatpush2.msra.mxu0 0.0
        %1345 = vmatprep.subr.mxu0 0.0
        %1346 = vmatpush2.msra.mxu0 0.0
        %1347 = vmatprep.subr.mxu0 0.0
        %1348 = vmatpush2.msra.mxu0 0.0
        %1349 = vmatprep.subr.mxu0 0.0
        %1350 = vmatpush2.msra.mxu0 0.0
        %1351 = vmatprep.subr.mxu0 0.0
        %1352 = vmatpush2.msra.mxu0 0.0
        %1353 = vmatprep.subr.mxu0 0.0
        %1354 = vmatpush2.msra.mxu0 0.0
        %1355 = vmatprep.subr.mxu0 0.0
        %1356 = vmatpush2.msra.mxu0 0.0
        %1357 = vmatprep.subr.mxu0 0.0
        %1358 = vmatpush2.msra.mxu0 0.0
        %1359 = vmatprep.subr.mxu0 0.0
        %1360 = vmatpush2.msra.mxu0 0.0
        %1361 = vmatprep.subr.mxu0 0.0
        %1362 = vmatpush2.msra.mxu0 0.0
        %1363 = vmatprep.subr.mxu0 0.0
        %1364 = vmatpush2.msra.mxu0 0.0
        %1365 = vmatprep.subr.mxu0 0.0
        %1366 = vmatpush2.msra.mxu0 0.0
        %1367 = vmatprep.subr.mxu0 0.0
        %1368 = vmatpush2.msra.mxu0 0.0
        %1369 = vmatprep.subr.mxu0 0.0
        %1370 = vmatpush2.msra.mxu0 0.0
        %1371 = vmatprep.subr.mxu0 0.0
        %1372 = vmatpush2.msra.mxu0 0.0
        %1373 = vmatprep.mubr.f32.mxu0 0.0
        %1374 = vmatmul.mubr.f32.gmra.mxu0 %v1302
        %v1375 = vpop.f32.mrf.mxu0
        %v1376 = vadd.f32 %v1307, %v1375
        %v1377 = vpop.f32.mrf.mxu0
        %1378 = vdwg.mxu0
        %v1379 = vtanh.pop %v1376
        %1380 = vmatprep.subr.mxu0 0.0
        %1381 = vmatpush1.msra.mxu0 %v1133
        %1382 = vmatprep.subr.mxu0 0.0
        %1383 = vmatpush1.msra.mxu0 %v1132
        %1384 = vmatprep.subr.mxu0 0.0
        %1385 = vmatpush1.msra.mxu0 %v1131
        %1386 = vmatprep.subr.mxu0 0.0
        %1387 = vmatpush1.msra.mxu0 %v1130
        %1388 = vmatprep.subr.mxu0 0.0
        %1389 = vmatpush1.msra.mxu0 %v1129
        %1390 = vmatprep.subr.mxu0 0.0
        %1391 = vmatpush1.msra.mxu0 %v1128
        %1392 = vmatprep.subr.mxu0 0.0
        %1393 = vmatpush1.msra.mxu0 %v1127
        %1394 = vmatprep.subr.mxu0 0.0
        %1395 = vmatpush1.msra.mxu0 %v1126
        %1396 = vmatprep.subr.mxu0 0.0
        %1397 = vmatpush1.msra.mxu0 %v1125
        %1398 = vmatprep.subr.mxu0 0.0
        %1399 = vmatpush1.msra.mxu0 %v1124
        %1400 = vmatprep.subr.mxu0 0.0
        %1401 = vmatpush1.msra.mxu0 %v1123
        %1402 = vmatprep.subr.mxu0 0.0
        %1403 = vmatpush1.msra.mxu0 %v1122
        %1404 = vmatprep.subr.mxu0 0.0
        %1405 = vmatpush1.msra.mxu0 %v1121
        %1406 = vmatprep.subr.mxu0 0.0
        %1407 = vmatpush1.msra.mxu0 %v1120
        %1408 = vmatprep.subr.mxu0 0.0
        %1409 = vmatpush1.msra.mxu0 %v1119
        %1410 = vmatprep.subr.mxu0 0.0
        %1411 = vmatpush1.msra.mxu0 %v1118
        %1412 = vmatprep.subr.mxu0 0.0
        %1413 = vmatpush2.msra.mxu0 0.0
        %1414 = vmatprep.subr.mxu0 0.0
        %1415 = vmatpush2.msra.mxu0 0.0
        %1416 = vmatprep.subr.mxu0 0.0
        %1417 = vmatpush2.msra.mxu0 0.0
        %1418 = vmatprep.subr.mxu0 0.0
        %1419 = vmatpush2.msra.mxu0 0.0
        %1420 = vmatprep.subr.mxu0 0.0
        %1421 = vmatpush2.msra.mxu0 0.0
        %1422 = vmatprep.subr.mxu0 0.0
        %1423 = vmatpush2.msra.mxu0 0.0
        %1424 = vmatprep.subr.mxu0 0.0
        %1425 = vmatpush2.msra.mxu0 0.0
        %1426 = vmatprep.subr.mxu0 0.0
        %1427 = vmatpush2.msra.mxu0 0.0
        %1428 = vmatprep.subr.mxu0 0.0
        %1429 = vmatpush2.msra.mxu0 0.0
        %1430 = vmatprep.subr.mxu0 0.0
        %1431 = vmatpush2.msra.mxu0 0.0
        %1432 = vmatprep.subr.mxu0 0.0
        %1433 = vmatpush2.msra.mxu0 0.0
        %1434 = vmatprep.subr.mxu0 0.0
        %1435 = vmatpush2.msra.mxu0 0.0
        %1436 = vmatprep.subr.mxu0 0.0
        %1437 = vmatpush2.msra.mxu0 0.0
        %1438 = vmatprep.subr.mxu0 0.0
        %1439 = vmatpush2.msra.mxu0 0.0
        %1440 = vmatprep.subr.mxu0 0.0
        %1441 = vmatpush2.msra.mxu0 0.0
        %1442 = vmatprep.subr.mxu0 0.0
        %1443 = vmatpush2.msra.mxu0 0.0
        %1444 = vmatprep.mubr.f32.mxu0 0.0
        %1445 = vmatmul.mubr.f32.gmra.mxu0 %v1379
        %v1446 = vpop.f32.mrf.mxu0
        %v1447 = vadd.f32 0.0, %v1446
        %v1448 = vpop.f32.mrf.mxu0
        %1449 = vdwg.mxu0
        %v1450 = vadd.f32 %v1082, %v1447
        %s1451 = scalar_lea.vmem [#allocation2], 384
        %v1452 = vld [vmem:[%s1451] sm:$0xff]
        %v1453 = vld [vmem:[%s1451 + $0x8] sm:$0xff]
        %v1454 = vld [vmem:[%s1451 + $0x10] sm:$0xff]
        %v1455 = vld [vmem:[%s1451 + $0x18] sm:$0xff]
        %v1456 = vld [vmem:[%s1451 + $0x20] sm:$0xff]
        %v1457 = vld [vmem:[%s1451 + $0x28] sm:$0xff]
        %v1458 = vld [vmem:[%s1451 + $0x30] sm:$0xff]
        %v1459 = vld [vmem:[%s1451 + $0x38] sm:$0xff]
        %v1460 = vld [vmem:[%s1451 + $0x40] sm:$0xff]
        %v1461 = vld [vmem:[%s1451 + $0x48] sm:$0xff]
        %v1462 = vld [vmem:[%s1451 + $0x50] sm:$0xff]
        %v1463 = vld [vmem:[%s1451 + $0x58] sm:$0xff]
        %v1464 = vld [vmem:[%s1451 + $0x60] sm:$0xff]
        %v1465 = vld [vmem:[%s1451 + $0x68] sm:$0xff]
        %v1466 = vld [vmem:[%s1451 + $0x70] sm:$0xff]
        %v1467 = vld [vmem:[%s1451 + $0x78] sm:$0xff]
        %s1468 = scalar_lea.vmem [#allocation5], 384
        %v1469 = vld [vmem:[%s1468] sm:$0xff]
        %v1470 = vld [vmem:[%s1468 + $0x8] sm:$0xff]
        %v1471 = vld [vmem:[%s1468 + $0x10] sm:$0xff]
        %v1472 = vld [vmem:[%s1468 + $0x18] sm:$0xff]
        %v1473 = vld [vmem:[%s1468 + $0x20] sm:$0xff]
        %v1474 = vld [vmem:[%s1468 + $0x28] sm:$0xff]
        %v1475 = vld [vmem:[%s1468 + $0x30] sm:$0xff]
        %v1476 = vld [vmem:[%s1468 + $0x38] sm:$0xff]
        %v1477 = vld [vmem:[%s1468 + $0x40] sm:$0xff]
        %v1478 = vld [vmem:[%s1468 + $0x48] sm:$0xff]
        %v1479 = vld [vmem:[%s1468 + $0x50] sm:$0xff]
        %v1480 = vld [vmem:[%s1468 + $0x58] sm:$0xff]
        %v1481 = vld [vmem:[%s1468 + $0x60] sm:$0xff]
        %v1482 = vld [vmem:[%s1468 + $0x68] sm:$0xff]
        %v1483 = vld [vmem:[%s1468 + $0x70] sm:$0xff]
        %v1484 = vld [vmem:[%s1468 + $0x78] sm:$0xff]
        %s1485 = scalar_lea.vmem [#allocation7], 384
        %v1486 = vld [vmem:[%s1485] sm:$0xff]
        %v1487 = vld [vmem:[%s1485 + $0x8] sm:$0xff]
        %v1488 = vld [vmem:[%s1485 + $0x10] sm:$0xff]
        %v1489 = vld [vmem:[%s1485 + $0x18] sm:$0xff]
        %v1490 = vld [vmem:[%s1485 + $0x20] sm:$0xff]
        %v1491 = vld [vmem:[%s1485 + $0x28] sm:$0xff]
        %v1492 = vld [vmem:[%s1485 + $0x30] sm:$0xff]
        %v1493 = vld [vmem:[%s1485 + $0x38] sm:$0xff]
        %v1494 = vld [vmem:[%s1485 + $0x40] sm:$0xff]
        %v1495 = vld [vmem:[%s1485 + $0x48] sm:$0xff]
        %v1496 = vld [vmem:[%s1485 + $0x50] sm:$0xff]
        %v1497 = vld [vmem:[%s1485 + $0x58] sm:$0xff]
        %v1498 = vld [vmem:[%s1485 + $0x60] sm:$0xff]
        %v1499 = vld [vmem:[%s1485 + $0x68] sm:$0xff]
        %v1500 = vld [vmem:[%s1485 + $0x70] sm:$0xff]
        %v1501 = vld [vmem:[%s1485 + $0x78] sm:$0xff]
        %s1502 = scalar_lea.vmem [#allocation8], 384
        %v1503 = vld [vmem:[%s1502] sm:$0xff]
        %v1504 = vld [vmem:[%s1502 + $0x8] sm:$0xff]
        %v1505 = vld [vmem:[%s1502 + $0x10] sm:$0xff]
        %v1506 = vld [vmem:[%s1502 + $0x18] sm:$0xff]
        %v1507 = vld [vmem:[%s1502 + $0x20] sm:$0xff]
        %v1508 = vld [vmem:[%s1502 + $0x28] sm:$0xff]
        %v1509 = vld [vmem:[%s1502 + $0x30] sm:$0xff]
        %v1510 = vld [vmem:[%s1502 + $0x38] sm:$0xff]
        %v1511 = vld [vmem:[%s1502 + $0x40] sm:$0xff]
        %v1512 = vld [vmem:[%s1502 + $0x48] sm:$0xff]
        %v1513 = vld [vmem:[%s1502 + $0x50] sm:$0xff]
        %v1514 = vld [vmem:[%s1502 + $0x58] sm:$0xff]
        %v1515 = vld [vmem:[%s1502 + $0x60] sm:$0xff]
        %v1516 = vld [vmem:[%s1502 + $0x68] sm:$0xff]
        %v1517 = vld [vmem:[%s1502 + $0x70] sm:$0xff]
        %v1518 = vld [vmem:[%s1502 + $0x78] sm:$0xff]
        %s1519 = scalar_lea.vmem %s4, 3
        %v1520 = vld [vmem:[%s1519] sm:$0x1]
        %s1521 = scalar_lea.vmem %s5, 3
        %v1522 = vld [vmem:[%s1521] sm:$0x1]
        %v1524 = vlaneseq
        %v1525 = vshrl.u32 %v1524, 7
        %v1526 = vsub.s32 0, %v1525
        %v1527 = vrot.slane %v1520, %v1526
        %1529 = vmatprep.subr.mxu0 0.0
        %1530 = vmatpush1.msra.mxu0 %v1484
        %1531 = vmatprep.subr.mxu0 0.0
        %1532 = vmatpush1.msra.mxu0 %v1483
        %1533 = vmatprep.subr.mxu0 0.0
        %1534 = vmatpush1.msra.mxu0 %v1482
        %1535 = vmatprep.subr.mxu0 0.0
        %1536 = vmatpush1.msra.mxu0 %v1481
        %1537 = vmatprep.subr.mxu0 0.0
        %1538 = vmatpush1.msra.mxu0 %v1480
        %1539 = vmatprep.subr.mxu0 0.0
        %1540 = vmatpush1.msra.mxu0 %v1479
        %1541 = vmatprep.subr.mxu0 0.0
        %1542 = vmatpush1.msra.mxu0 %v1478
        %1543 = vmatprep.subr.mxu0 0.0
        %1544 = vmatpush1.msra.mxu0 %v1477
        %1545 = vmatprep.subr.mxu0 0.0
        %1546 = vmatpush1.msra.mxu0 %v1476
        %1547 = vmatprep.subr.mxu0 0.0
        %1548 = vmatpush1.msra.mxu0 %v1475
        %1549 = vmatprep.subr.mxu0 0.0
        %1550 = vmatpush1.msra.mxu0 %v1474
        %1551 = vmatprep.subr.mxu0 0.0
        %1552 = vmatpush1.msra.mxu0 %v1473
        %1553 = vmatprep.subr.mxu0 0.0
        %1554 = vmatpush1.msra.mxu0 %v1472
        %1555 = vmatprep.subr.mxu0 0.0
        %1556 = vmatpush1.msra.mxu0 %v1471
        %1557 = vmatprep.subr.mxu0 0.0
        %1558 = vmatpush1.msra.mxu0 %v1470
        %1559 = vmatprep.subr.mxu0 0.0
        %1560 = vmatpush1.msra.mxu0 %v1469
        %1561 = vmatprep.subr.mxu0 0.0
        %1562 = vmatpush2.msra.mxu0 0.0
        %1563 = vmatprep.subr.mxu0 0.0
        %1564 = vmatpush2.msra.mxu0 0.0
        %1565 = vmatprep.subr.mxu0 0.0
        %1566 = vmatpush2.msra.mxu0 0.0
        %1567 = vmatprep.subr.mxu0 0.0
        %1568 = vmatpush2.msra.mxu0 0.0
        %1569 = vmatprep.subr.mxu0 0.0
        %1570 = vmatpush2.msra.mxu0 0.0
        %1571 = vmatprep.subr.mxu0 0.0
        %1572 = vmatpush2.msra.mxu0 0.0
        %1573 = vmatprep.subr.mxu0 0.0
        %1574 = vmatpush2.msra.mxu0 0.0
        %1575 = vmatprep.subr.mxu0 0.0
        %1576 = vmatpush2.msra.mxu0 0.0
        %1577 = vmatprep.subr.mxu0 0.0
        %1578 = vmatpush2.msra.mxu0 0.0
        %1579 = vmatprep.subr.mxu0 0.0
        %1580 = vmatpush2.msra.mxu0 0.0
        %1581 = vmatprep.subr.mxu0 0.0
        %1582 = vmatpush2.msra.mxu0 0.0
        %1583 = vmatprep.subr.mxu0 0.0
        %1584 = vmatpush2.msra.mxu0 0.0
        %1585 = vmatprep.subr.mxu0 0.0
        %1586 = vmatpush2.msra.mxu0 0.0
        %1587 = vmatprep.subr.mxu0 0.0
        %1588 = vmatpush2.msra.mxu0 0.0
        %1589 = vmatprep.subr.mxu0 0.0
        %1590 = vmatpush2.msra.mxu0 0.0
        %1591 = vmatprep.subr.mxu0 0.0
        %1592 = vmatpush2.msra.mxu0 0.0
        %1593 = vmatprep.mubr.f32.mxu0 0.0
        %1594 = vmatmul.mubr.f32.gmra.mxu0 %v1450
        %v1595 = vpop.f32.mrf.mxu0
        %v1596 = vadd.f32 %v1527, %v1595
        %v1597 = vpop.f32.mrf.mxu0
        %1598 = vdwg.mxu0
        %v1599 = vtanh.pop %v1596
        %1600 = vmatprep.subr.mxu0 0.0
        %1601 = vmatpush1.msra.mxu0 %v1518
        %1602 = vmatprep.subr.mxu0 0.0
        %1603 = vmatpush1.msra.mxu0 %v1517
        %1604 = vmatprep.subr.mxu0 0.0
        %1605 = vmatpush1.msra.mxu0 %v1516
        %1606 = vmatprep.subr.mxu0 0.0
        %1607 = vmatpush1.msra.mxu0 %v1515
        %1608 = vmatprep.subr.mxu0 0.0
        %1609 = vmatpush1.msra.mxu0 %v1514
        %1610 = vmatprep.subr.mxu0 0.0
        %1611 = vmatpush1.msra.mxu0 %v1513
        %1612 = vmatprep.subr.mxu0 0.0
        %1613 = vmatpush1.msra.mxu0 %v1512
        %1614 = vmatprep.subr.mxu0 0.0
        %1615 = vmatpush1.msra.mxu0 %v1511
        %1616 = vmatprep.subr.mxu0 0.0
        %1617 = vmatpush1.msra.mxu0 %v1510
        %1618 = vmatprep.subr.mxu0 0.0
        %1619 = vmatpush1.msra.mxu0 %v1509
        %1620 = vmatprep.subr.mxu0 0.0
        %1621 = vmatpush1.msra.mxu0 %v1508
        %1622 = vmatprep.subr.mxu0 0.0
        %1623 = vmatpush1.msra.mxu0 %v1507
        %1624 = vmatprep.subr.mxu0 0.0
        %1625 = vmatpush1.msra.mxu0 %v1506
        %1626 = vmatprep.subr.mxu0 0.0
        %1627 = vmatpush1.msra.mxu0 %v1505
        %1628 = vmatprep.subr.mxu0 0.0
        %1629 = vmatpush1.msra.mxu0 %v1504
        %1630 = vmatprep.subr.mxu0 0.0
        %1631 = vmatpush1.msra.mxu0 %v1503
        %1632 = vmatprep.subr.mxu0 0.0
        %1633 = vmatpush2.msra.mxu0 0.0
        %1634 = vmatprep.subr.mxu0 0.0
        %1635 = vmatpush2.msra.mxu0 0.0
        %1636 = vmatprep.subr.mxu0 0.0
        %1637 = vmatpush2.msra.mxu0 0.0
        %1638 = vmatprep.subr.mxu0 0.0
        %1639 = vmatpush2.msra.mxu0 0.0
        %1640 = vmatprep.subr.mxu0 0.0
        %1641 = vmatpush2.msra.mxu0 0.0
        %1642 = vmatprep.subr.mxu0 0.0
        %1643 = vmatpush2.msra.mxu0 0.0
        %1644 = vmatprep.subr.mxu0 0.0
        %1645 = vmatpush2.msra.mxu0 0.0
        %1646 = vmatprep.subr.mxu0 0.0
        %1647 = vmatpush2.msra.mxu0 0.0
        %1648 = vmatprep.subr.mxu0 0.0
        %1649 = vmatpush2.msra.mxu0 0.0
        %1650 = vmatprep.subr.mxu0 0.0
        %1651 = vmatpush2.msra.mxu0 0.0
        %1652 = vmatprep.subr.mxu0 0.0
        %1653 = vmatpush2.msra.mxu0 0.0
        %1654 = vmatprep.subr.mxu0 0.0
        %1655 = vmatpush2.msra.mxu0 0.0
        %1656 = vmatprep.subr.mxu0 0.0
        %1657 = vmatpush2.msra.mxu0 0.0
        %1658 = vmatprep.subr.mxu0 0.0
        %1659 = vmatpush2.msra.mxu0 0.0
        %1660 = vmatprep.subr.mxu0 0.0
        %1661 = vmatpush2.msra.mxu0 0.0
        %1662 = vmatprep.subr.mxu0 0.0
        %1663 = vmatpush2.msra.mxu0 0.0
        %1664 = vmatprep.mubr.f32.mxu0 0.0
        %1665 = vmatmul.mubr.f32.gmra.mxu0 %v1599
        %v1666 = vpop.f32.mrf.mxu0
        %v1667 = vadd.f32 0.0, %v1666
        %v1668 = vpop.f32.mrf.mxu0
        %1669 = vdwg.mxu0
        %v1670 = vsub.f32 %v1302, %v1667
        %v1672 = vlaneseq
        %v1673 = vshrl.u32 %v1672, 7
        %v1674 = vsub.s32 0, %v1673
        %v1675 = vrot.slane %v1522, %v1674
        %1677 = vmatprep.subr.mxu0 0.0
        %1678 = vmatpush1.msra.mxu0 %v1467
        %1679 = vmatprep.subr.mxu0 0.0
        %1680 = vmatpush1.msra.mxu0 %v1466
        %1681 = vmatprep.subr.mxu0 0.0
        %1682 = vmatpush1.msra.mxu0 %v1465
        %1683 = vmatprep.subr.mxu0 0.0
        %1684 = vmatpush1.msra.mxu0 %v1464
        %1685 = vmatprep.subr.mxu0 0.0
        %1686 = vmatpush1.msra.mxu0 %v1463
        %1687 = vmatprep.subr.mxu0 0.0
        %1688 = vmatpush1.msra.mxu0 %v1462
        %1689 = vmatprep.subr.mxu0 0.0
        %1690 = vmatpush1.msra.mxu0 %v1461
        %1691 = vmatprep.subr.mxu0 0.0
        %1692 = vmatpush1.msra.mxu0 %v1460
        %1693 = vmatprep.subr.mxu0 0.0
        %1694 = vmatpush1.msra.mxu0 %v1459
        %1695 = vmatprep.subr.mxu0 0.0
        %1696 = vmatpush1.msra.mxu0 %v1458
        %1697 = vmatprep.subr.mxu0 0.0
        %1698 = vmatpush1.msra.mxu0 %v1457
        %1699 = vmatprep.subr.mxu0 0.0
        %1700 = vmatpush1.msra.mxu0 %v1456
        %1701 = vmatprep.subr.mxu0 0.0
        %1702 = vmatpush1.msra.mxu0 %v1455
        %1703 = vmatprep.subr.mxu0 0.0
        %1704 = vmatpush1.msra.mxu0 %v1454
        %1705 = vmatprep.subr.mxu0 0.0
        %1706 = vmatpush1.msra.mxu0 %v1453
        %1707 = vmatprep.subr.mxu0 0.0
        %1708 = vmatpush1.msra.mxu0 %v1452
        %1709 = vmatprep.subr.mxu0 0.0
        %1710 = vmatpush2.msra.mxu0 0.0
        %1711 = vmatprep.subr.mxu0 0.0
        %1712 = vmatpush2.msra.mxu0 0.0
        %1713 = vmatprep.subr.mxu0 0.0
        %1714 = vmatpush2.msra.mxu0 0.0
        %1715 = vmatprep.subr.mxu0 0.0
        %1716 = vmatpush2.msra.mxu0 0.0
        %1717 = vmatprep.subr.mxu0 0.0
        %1718 = vmatpush2.msra.mxu0 0.0
        %1719 = vmatprep.subr.mxu0 0.0
        %1720 = vmatpush2.msra.mxu0 0.0
        %1721 = vmatprep.subr.mxu0 0.0
        %1722 = vmatpush2.msra.mxu0 0.0
        %1723 = vmatprep.subr.mxu0 0.0
        %1724 = vmatpush2.msra.mxu0 0.0
        %1725 = vmatprep.subr.mxu0 0.0
        %1726 = vmatpush2.msra.mxu0 0.0
        %1727 = vmatprep.subr.mxu0 0.0
        %1728 = vmatpush2.msra.mxu0 0.0
        %1729 = vmatprep.subr.mxu0 0.0
        %1730 = vmatpush2.msra.mxu0 0.0
        %1731 = vmatprep.subr.mxu0 0.0
        %1732 = vmatpush2.msra.mxu0 0.0
        %1733 = vmatprep.subr.mxu0 0.0
        %1734 = vmatpush2.msra.mxu0 0.0
        %1735 = vmatprep.subr.mxu0 0.0
        %1736 = vmatpush2.msra.mxu0 0.0
        %1737 = vmatprep.subr.mxu0 0.0
        %1738 = vmatpush2.msra.mxu0 0.0
        %1739 = vmatprep.subr.mxu0 0.0
        %1740 = vmatpush2.msra.mxu0 0.0
        %1741 = vmatprep.mubr.f32.mxu0 0.0
        %1742 = vmatmul.mubr.f32.gmra.mxu0 %v1670
        %v1743 = vpop.f32.mrf.mxu0
        %v1744 = vadd.f32 %v1675, %v1743
        %v1745 = vpop.f32.mrf.mxu0
        %1746 = vdwg.mxu0
        %v1747 = vtanh.pop %v1744
        %1748 = vmatprep.subr.mxu0 0.0
        %1749 = vmatpush1.msra.mxu0 %v1501
        %1750 = vmatprep.subr.mxu0 0.0
        %1751 = vmatpush1.msra.mxu0 %v1500
        %1752 = vmatprep.subr.mxu0 0.0
        %1753 = vmatpush1.msra.mxu0 %v1499
        %1754 = vmatprep.subr.mxu0 0.0
        %1755 = vmatpush1.msra.mxu0 %v1498
        %1756 = vmatprep.subr.mxu0 0.0
        %1757 = vmatpush1.msra.mxu0 %v1497
        %1758 = vmatprep.subr.mxu0 0.0
        %1759 = vmatpush1.msra.mxu0 %v1496
        %1760 = vmatprep.subr.mxu0 0.0
        %1761 = vmatpush1.msra.mxu0 %v1495
        %1762 = vmatprep.subr.mxu0 0.0
        %1763 = vmatpush1.msra.mxu0 %v1494
        %1764 = vmatprep.subr.mxu0 0.0
        %1765 = vmatpush1.msra.mxu0 %v1493
        %1766 = vmatprep.subr.mxu0 0.0
        %1767 = vmatpush1.msra.mxu0 %v1492
        %1768 = vmatprep.subr.mxu0 0.0
        %1769 = vmatpush1.msra.mxu0 %v1491
        %1770 = vmatprep.subr.mxu0 0.0
        %1771 = vmatpush1.msra.mxu0 %v1490
        %1772 = vmatprep.subr.mxu0 0.0
        %1773 = vmatpush1.msra.mxu0 %v1489
        %1774 = vmatprep.subr.mxu0 0.0
        %1775 = vmatpush1.msra.mxu0 %v1488
        %1776 = vmatprep.subr.mxu0 0.0
        %1777 = vmatpush1.msra.mxu0 %v1487
        %1778 = vmatprep.subr.mxu0 0.0
        %1779 = vmatpush1.msra.mxu0 %v1486
        %1780 = vmatprep.subr.mxu0 0.0
        %1781 = vmatpush2.msra.mxu0 0.0
        %1782 = vmatprep.subr.mxu0 0.0
        %1783 = vmatpush2.msra.mxu0 0.0
        %1784 = vmatprep.subr.mxu0 0.0
        %1785 = vmatpush2.msra.mxu0 0.0
        %1786 = vmatprep.subr.mxu0 0.0
        %1787 = vmatpush2.msra.mxu0 0.0
        %1788 = vmatprep.subr.mxu0 0.0
        %1789 = vmatpush2.msra.mxu0 0.0
        %1790 = vmatprep.subr.mxu0 0.0
        %1791 = vmatpush2.msra.mxu0 0.0
        %1792 = vmatprep.subr.mxu0 0.0
        %1793 = vmatpush2.msra.mxu0 0.0
        %1794 = vmatprep.subr.mxu0 0.0
        %1795 = vmatpush2.msra.mxu0 0.0
        %1796 = vmatprep.subr.mxu0 0.0
        %1797 = vmatpush2.msra.mxu0 0.0
        %1798 = vmatprep.subr.mxu0 0.0
        %1799 = vmatpush2.msra.mxu0 0.0
        %1800 = vmatprep.subr.mxu0 0.0
        %1801 = vmatpush2.msra.mxu0 0.0
        %1802 = vmatprep.subr.mxu0 0.0
        %1803 = vmatpush2.msra.mxu0 0.0
        %1804 = vmatprep.subr.mxu0 0.0
        %1805 = vmatpush2.msra.mxu0 0.0
        %1806 = vmatprep.subr.mxu0 0.0
        %1807 = vmatpush2.msra.mxu0 0.0
        %1808 = vmatprep.subr.mxu0 0.0
        %1809 = vmatpush2.msra.mxu0 0.0
        %1810 = vmatprep.subr.mxu0 0.0
        %1811 = vmatpush2.msra.mxu0 0.0
        %1812 = vmatprep.mubr.f32.mxu0 0.0
        %1813 = vmatmul.mubr.f32.gmra.mxu0 %v1747
        %v1814 = vpop.f32.mrf.mxu0
        %v1815 = vadd.f32 0.0, %v1814
        %v1816 = vpop.f32.mrf.mxu0
        %1817 = vdwg.mxu0
        %v1818 = vadd.f32 %v1450, %v1815
        %1819 = vst [vmem:[%s350] sm:$0xff] %v1670
        %1820 = vst [vmem:[%s350 + $0x8] sm:$0xff] %v1818
        %s1821 = sand.u32 %s184, 1
        %s1822 = scalar_lea.sflag [#allocation4], %s1821
        %s1823 = sand.u32 %s184, 1
        %s1824 = smul.addr %s1823, 16
        %s1825 = scalar_lea.vmem [#allocation11], %s1824
        // Predicated region
        $region69: #{tpu_custom_call.1} parent=47 // pred_check
          %p1826 = pneg %p194
        $region70: #{tpu_custom_call.1} parent=47 // pred_check_branch
          %1828 = sbr.rel (%p1826) target = $region72
        $region71: #{tpu_custom_call.1} parent=47 // pred_region
          %s1830 = ssub.s32 256, 256
          %1831 = vsyncadd %s1822, %s1830
          %s1832 = smul.addr %s24, 2
          %s1833 = smul.addr %s1832, 128
          %s1834 = scalar_lea.hbm %s7, %s1833
          %s1836 = sshll.u32 %s1825, 4
          %s1837 = int_to_ptr.vmem [resolvable:$true] %s1836
          %1839 = dma.vmem_to_hbm [thread:$0]  %s1837, 256, %s1834, %s1822
        $region72: #{tpu_custom_call.1} parent=47 // pred_fallthru
          _
      $region48: #{tpu_custom_call.1} parent=5 // pred_fallthru
        _
      %p1840 = scmp.le.s32.totalorder 2, %s19
      // Predicated region
      $region73: #{tpu_custom_call.1} parent=5 // pred_check
        %p1841 = pneg %p1840
      $region74: #{tpu_custom_call.1} parent=5 // pred_check_branch
        %1843 = sbr.rel (%p1841) target = $region76
      $region75: #{tpu_custom_call.1} parent=5 // pred_region
        %s1844 = ssub.s32 %s19, 2
        // Predicated region
        $region77: #{tpu_custom_call.1} parent=75 // pred_check
          %p1845 = pneg %p200
        $region78: #{tpu_custom_call.1} parent=75 // pred_check_branch
          %1847 = sbr.rel (%p1845) target = $region80
        $region79: #{tpu_custom_call.1} parent=75 // pred_region
          %s1848 = sand.u32 %s185, 1
          %s1849 = scalar_lea.sflag [#allocation4], %s1848
          %s1850 = sand.u32 %s185, 1
          %s1851 = smul.addr %s1850, 16
          %s1852 = scalar_lea.vmem [#allocation11], %s1851
          %1853 = dma.done %s1849, 256
        $region80: #{tpu_custom_call.1} parent=75 // pred_fallthru
          _
      $region76: #{tpu_custom_call.1} parent=5 // pred_fallthru
        _
    $region6: #{tpu_custom_call.1} parent=1 // loop_footer
      %s23 = sadd.s32 1, %s19
    $region7: #{tpu_custom_call.1} parent=1 // loop_footer_branch
      %18 = sbr.rel target = $region3
    $region8: #{tpu_custom_call.1} parent=1 // loop_exit
      _
    %1854 = vsyncpa [#allocation3], 1
    %s1855 = scalar_lea.sflag [#allocation3], 1
    %1856 = vsyncpa %s1855, 1
    %1857 = vsyncpa [#allocation6], 1
    %1858 = vsyncpa [#allocation9], 1
    %1859 = vsyncpa [#allocation4], 1
    %s1860 = scalar_lea.sflag [#allocation4], 1
    %1861 = vsyncpa %s1860, 1

</llo_original>
